<compile_context>
chip_gen: v5e
topology: v5e:2x2
jax: 0.10.0
libtpu: 0.0.40
codegen_flags: <defaults>
</compile_context>

<pallas_src>
import functools

import jax
import jax.numpy as jnp
from jax import lax
from jax.experimental import pallas as pl
from jax.experimental.pallas import tpu as pltpu

_LANE = 128                    # lane width: channel dims are padded to this
_MXU_DTYPE = jnp.bfloat16      # MXU operand dtype (f32 accumulation) on ALL
                               # generations -- the v5e MXU is bf16-native too.
_HAS_BUFFERED = hasattr(pl, "Buffered")


def _round_up(v, m):
    return (v + m - 1) // m * m


def _vmem_limit_bytes():
    """Generation-aware VMEM budget: ~3/4 of physical capacity (96 MiB on
    v5e/v6e, 48 MiB on v7x).  Conservative 48 MiB fallback if the hardware-info
    probe fails; this try only guards the probe, never kernel errors."""
    try:
        cap = int(pltpu.get_tpu_info().vmem_capacity_bytes)
    except Exception:
        cap = 64 * 1024 * 1024
    return (cap * 3) // 4


# ----------------------------- kernel helpers (traced inside the kernel) ----

def _shift_h(x, delta, stride):
    """y[o] = x[o*stride + delta] along H, zero-filled out of range.

    H is not a layout axis (lanes=C, sublanes=W): this is vreg-block selection
    plus a small zero block, no relayout and no full padded temporaries.
    """
    H = x.shape[0]
    if delta == 0:
        y = x
    elif delta > 0:
        pad = jnp.zeros((delta,) + x.shape[1:], x.dtype)
        y = jnp.concatenate([x[delta:], pad], axis=0)
    else:
        pad = jnp.zeros((-delta,) + x.shape[1:], x.dtype)
        y = jnp.concatenate([pad, x[:H + delta]], axis=0)
    return y[::stride] if stride > 1 else y


def _depthwise3x3(x, dw, dilation, stride, wm_neg, wm_pos):
    """Depthwise 3x3 conv, groups=C, padding=dilation.  x:(H,W,C) f32, dw:(3,3,C).

    W-axis work hoisted out of the tap loop: the three W-shifted, edge-masked
    variants of x are built once per stage (2 XLU rolls + 2 VPU mask muls,
    instead of 6 + 6); the 9 taps then only pay a cheap H shift.  For
    stride > 1, H is decimated per tap and W exactly once on the accumulator.
    """
    W = x.shape[1]
    x_w = (
        pltpu.roll(x, shift=dilation % W, axis=1) * wm_neg,     # taps at -dilation
        x,                                                      # taps at 0
        pltpu.roll(x, shift=(-dilation) % W, axis=1) * wm_pos,  # taps at +dilation
    )
    acc = None
    for kh in range(3):
        dh = (kh - 1) * dilation
        for kw in range(3):
            t = _shift_h(x_w[kw], dh, stride)
            term = t * dw[kh, kw, :]            # f32 accumulate
            acc = term if acc is None else acc + term
    if stride > 1:
        acc = acc[:, ::stride, :]               # single W (sublane) decimation
    return acc


def _pointwise(h, pw, bias):
    """1x1 conv on the MXU (bf16 operands, f32 accumulation) + bias add.
    The BN scale is pre-folded into the weight columns (wrapper prep), so no
    per-pixel VPU multiply happens here."""
    H, W, K = h.shape
    y = jnp.dot(h.reshape(H * W, K).astype(pw.dtype), pw,
                preferred_element_type=jnp.float32)
    return (y + bias).reshape(H, W, pw.shape[1])


# ----------------------------------- fused Pallas kernel (one batch / step) --

def _xception_kernel(x_ref,
                     dw1_ref, pw1_ref, bi1_ref,
                     dw2_ref, pw2_ref, bi2_ref,
                     dw3_ref, pw3_ref, bi3_ref,
                     out_ref, *, stride, dilation, has_skip, use_first_relu):
    H, W = x_ref.shape[1], x_ref.shape[2]
    x = x_ref[0]                                          # (H, W, Cin_p) f32

    # W-edge validity masks for the two shifted tap variants, generated
    # in-kernel from an iota (no extra HBM inputs / DMAs / BlockSpecs).
    col = lax.broadcasted_iota(jnp.int32, (H, W, 1), 1)
    wm_neg = jnp.where(col >= dilation, 1.0, 0.0).astype(x.dtype)
    wm_pos = jnp.where(col < W - dilation, 1.0, 0.0).astype(x.dtype)

    # Skip operand: only the (Ho, Wo, Cin_p) strided slice of x needs to stay
    # live across the three DSConv stages (sliced exactly once).
    if has_skip:
        xs = x[::stride, ::stride, :] if stride > 1 else x

    # ---- main branch: 3 x (ReLU -> depthwise 3x3 -> pointwise(+BN) on MXU) --
    h = jnp.maximum(x, 0.0) if use_first_relu else x
    h = _depthwise3x3(h, dw1_ref[...], dilation, 1, wm_neg, wm_pos)
    h = _pointwise(h, pw1_ref[...], bi1_ref[...])

    h = jnp.maximum(h, 0.0)
    h = _depthwise3x3(h, dw2_ref[...], dilation, 1, wm_neg, wm_pos)
    h = _pointwise(h, pw2_ref[...], bi2_ref[...])

    h = jnp.maximum(h, 0.0)
    h = _depthwise3x3(h, dw3_ref[...], dilation, stride, wm_neg, wm_pos)

    if has_skip:
        # Fused 3rd pointwise + skip 1x1 conv + both BN affines + residual add:
        #   [h3 | x_s] @ [[pw3*sc3], [skw*sksc]] + (bi3 + skbi)
        # One MXU matmul with K = Cmid_p + Cin_p (fills the 256-deep MXU on
        # v6e/v7x); no separate skip matmul, affine, or final elementwise add.
        h = jnp.concatenate([h.astype(_MXU_DTYPE), xs.astype(_MXU_DTYPE)],
                            axis=-1)
        y = _pointwise(h, pw3_ref[...], bi3_ref[...])
    else:
        y = _pointwise(h, pw3_ref[...], bi3_ref[...]) + x      # identity skip
    out_ref[0] = y.astype(out_ref.dtype)


# --------------------------------------------------------------- wrapper ----

def xception_block(x_nchw, params, *, stride=1, dilation=1, use_first_relu=True):
    N, Cin, H, W = x_nchw.shape
    Cout = params["pw3"].shape[1]
    assert 1 <= dilation < min(H, W), "roll-based tap shifts assume dilation < H, W"
    Ho = (H - 1) // stride + 1
    Wo = (W - 1) // stride + 1
    has_skip = (Cin != Cout) or (stride != 1)
    Cin_p = _round_up(Cin, _LANE)
    Cout_p = _round_up(Cout, _LANE)

    # NCHW -> NHWC, zero-pad channels to lane-dense multiples of 128 (dense
    # vregs, unmasked output stores).  Transpose and pad are adjacent ops that
    # XLA fuses into one copy.
    x = jnp.transpose(x_nchw, (0, 2, 3, 1))
    x = jnp.pad(x, ((0, 0), (0, 0), (0, 0), (0, Cin_p - Cin)))

    def pad_last(a, tgt):
        return jnp.pad(a.astype(jnp.float32),
                       [(0, 0)] * (a.ndim - 1) + [(0, tgt - a.shape[-1])])

    def pad_mat_bf16(a, rows, cols):
        a = jnp.pad(a.astype(jnp.float32),
                    ((0, rows - a.shape[0]), (0, cols - a.shape[1])))
        return a.astype(_MXU_DTYPE)          # zero rows / cols stay exactly zero

    # Per-stage params.  The folded BN scale (DSConv BN x block BN) rides along
    # in the MXU: pw_i <- pw_i * sc_i before the bf16 cast; only the bias add
    # remains in the kernel.
    cps = [Cin_p, Cout_p, Cout_p]
    prep = {}
    for i in (1, 2, 3):
        ci_p = cps[i - 1]
        prep[f"dw{i}"] = pad_last(params[f"dw{i}"], ci_p)
        pw_sc = params[f"pw{i}"].astype(jnp.float32) * params[f"sc{i}"].reshape(1, -1)
        prep[f"pw{i}"] = pad_mat_bf16(pw_sc, ci_p, Cout_p)
        prep[f"bi{i}"] = pad_last(params[f"bi{i}"].reshape(1, -1), Cout_p)

    if has_skip:
        # Fuse the skip 1x1 conv + BN into the third pointwise: stack its
        # scale-folded weight below pw3 and add its bias into bi3.
        skw_sc = params["skw"].astype(jnp.float32) * params["sksc"].reshape(1, -1)
        prep["pw3"] = jnp.concatenate(
            [prep["pw3"], pad_mat_bf16(skw_sc, Cin_p, Cout_p)], axis=0)
        prep["bi3"] = prep["bi3"] + pad_last(params["skbi"].reshape(1, -1), Cout_p)

    const_args = [prep["dw1"], prep["pw1"], prep["bi1"],
                  prep["dw2"], prep["pw2"], prep["bi2"],
                  prep["dw3"], prep["pw3"], prep["bi3"]]

    kernel = functools.partial(
        _xception_kernel, stride=stride, dilation=dilation,
        has_skip=has_skip, use_first_relu=use_first_relu)

    def build_in_specs(single_buffer):
        specs = [pl.BlockSpec((1, H, W, Cin_p), lambda n: (n, 0, 0, 0))]
        for a in const_args:
            idx = lambda n, _r=a.ndim: (0,) * _r
            if single_buffer and _HAS_BUFFERED:
                # Constant index map -> weight blocks need no double-buffering.
                specs.append(pl.BlockSpec(a.shape, idx,
                                          pipeline_mode=pl.Buffered(1)))
            else:
                specs.append(pl.BlockSpec(a.shape, idx))
        return specs

    def run(single_buffer):
        return pl.pallas_call(
            kernel,
            out_shape=jax.ShapeDtypeStruct((N, Ho, Wo, Cout_p), jnp.float32),
            grid_spec=pltpu.PrefetchScalarGridSpec(
                num_scalar_prefetch=0,
                grid=(N,),
                in_specs=build_in_specs(single_buffer),
                out_specs=pl.BlockSpec((1, Ho, Wo, Cout_p),
                                       lambda n: (n, 0, 0, 0)),
            ),
            compiler_params=pltpu.CompilerParams(
                dimension_semantics=("parallel",),
                vmem_limit_bytes=_vmem_limit_bytes()),
        )(x, *const_args)

    try:
        out = run(single_buffer=True)
    except (TypeError, NotImplementedError, ValueError, pltpu.LoweringException):
        # Narrow fallback only for builds where pipeline_mode / pl.Buffered(1)
        # is unsupported.  Any unrelated error of these types reproduces (and
        # re-raises) from the default double-buffered path below, so genuine
        # failures are never swallowed.
        out = run(single_buffer=False)

    out = out[..., :Cout]                           # drop padded output channels
    return jnp.transpose(out, (0, 3, 1, 2))         # NHWC -> NCHW


# ------------------------------------------------- deterministic parameters --

def init_params(key, in_ch, out_ch, eps=1e-5):
    keys = iter(jax.random.split(key, 64))

    def nrm(shape, scale=0.3):
        return (scale * jax.random.normal(next(keys), shape)).astype(jnp.float32)

    def bn_fold(co):
        gamma = 1.0 + 0.2 * jax.random.normal(next(keys), (co,))
        beta = 0.1 * jax.random.normal(next(keys), (co,))
        mean = 0.1 * jax.random.normal(next(keys), (co,))
        var = 0.5 + jax.random.uniform(next(keys), (co,))
        sc = gamma * lax.rsqrt(var + eps)
        bi = beta - mean * sc
        return sc.astype(jnp.float32), bi.astype(jnp.float32)

    def double_bn(co):
        # DSConv-internal BN followed immediately by the block-level BN,
        # folded into a single per-channel affine (eval mode).
        s1, b1 = bn_fold(co)
        s2, b2 = bn_fold(co)
        return (s1 * s2).reshape(1, co), (b1 * s2 + b2).reshape(1, co)

    params = {}
    for i, (ci, co) in enumerate([(in_ch, out_ch), (out_ch, out_ch),
                                  (out_ch, out_ch)], start=1):
        params[f"dw{i}"] = nrm((3, 3, ci))                 # depthwise taps per chan
        params[f"pw{i}"] = nrm((ci, co))                   # pointwise (Cin, Cout)
        params[f"sc{i}"], params[f"bi{i}"] = double_bn(co)
    params["skw"] = nrm((in_ch, out_ch))                   # skip 1x1 conv
    ss, sb = bn_fold(out_ch)
    params["sksc"] = ss.reshape(1, out_ch)
    params["skbi"] = sb.reshape(1, out_ch)
    return params


# --------------------------------------------------------- pure-JAX reference

def reference(x_nchw, params, stride, dilation):
    x = jnp.transpose(x_nchw, (0, 2, 3, 1)).astype(jnp.float32)
    dn = ("NHWC", "HWIO", "NHWC")
    prec = lax.Precision.HIGHEST

    def bn_affine(y, sc, bi):
        return y * sc.reshape(1, 1, 1, -1) + bi.reshape(1, 1, 1, -1)

    def dsconv(h, dw, pw, sc, bi, s):
        C = h.shape[-1]
        h = lax.conv_general_dilated(
            h, dw[:, :, None, :], (s, s), [(dilation, dilation)] * 2,
            rhs_dilation=(dilation, dilation), dimension_numbers=dn,
            feature_group_count=C, precision=prec)
        h = lax.conv_general_dilated(
            h, pw[None, None], (1, 1), "VALID", dimension_numbers=dn,
            precision=prec)
        return bn_affine(h, sc, bi)

    h = jax.nn.relu(x)
    h = dsconv(h, params["dw1"], params["pw1"], params["sc1"], params["bi1"], 1)
    h = jax.nn.relu(h)
    h = dsconv(h, params["dw2"], params["pw2"], params["sc2"], params["bi2"], 1)
    h = jax.nn.relu(h)
    h = dsconv(h, params["dw3"], params["pw3"], params["sc3"], params["bi3"], stride)

    has_skip = (x.shape[-1] != params["pw3"].shape[1]) or (stride != 1)
    if has_skip:
        s = lax.conv_general_dilated(
            x, params["skw"][None, None], (stride, stride), "VALID",
            dimension_numbers=dn, precision=prec)
        s = bn_affine(s, params["sksc"], params["skbi"])
    else:
        s = x
    return jnp.transpose(h + s, (0, 3, 1, 2))


# --------------------------------------------------------------------- main --

if __name__ == "__main__":
    key = jax.random.PRNGKey(0)
    kx, kp = jax.random.split(key)

    N, Cin, H, W = 2, 4, 16, 16
    Cout, stride, dilation = 8, 1, 1            # skip path is a 1x1 conv + BN

    x = jax.random.normal(kx, (N, Cin, H, W), dtype=jnp.float32)
    params = init_params(kp, Cin, Cout)

    out = xception_block(x, params, stride=stride, dilation=dilation)
    out = jax.block_until_ready(out)

    ref = reference(x, params, stride, dilation)
    assert out.shape == ref.shape, (out.shape, ref.shape)
    max_err = float(jnp.max(jnp.abs(out - ref)))
    # bf16 MXU operands (with BN scale folded into the weights) + f32 accumulate
    # -> slightly looser tolerance than pure f32.
    if not jnp.allclose(out, ref, atol=5e-2, rtol=5e-2):
        raise AssertionError(f"kernel/reference mismatch, max_err={max_err}")

    print("KERNEL_OK")
</pallas_src>

<mosaic_0001>
module attributes {stable_mosaic.version = 11 : i64} {
  func.func @_xception_kernel(%arg0: i32, %arg1: memref<1x16x16x128xf32, #tpu.memory_space<vmem>>, %arg2: memref<3x3x128xf32, #tpu.memory_space<vmem>>, %arg3: memref<128x128xbf16, #tpu.memory_space<vmem>>, %arg4: memref<1x128xf32, #tpu.memory_space<vmem>>, %arg5: memref<3x3x128xf32, #tpu.memory_space<vmem>>, %arg6: memref<128x128xbf16, #tpu.memory_space<vmem>>, %arg7: memref<1x128xf32, #tpu.memory_space<vmem>>, %arg8: memref<3x3x128xf32, #tpu.memory_space<vmem>>, %arg9: memref<256x128xbf16, #tpu.memory_space<vmem>>, %arg10: memref<1x128xf32, #tpu.memory_space<vmem>>, %arg11: memref<1x16x16x128xf32, #tpu.memory_space<vmem>>) attributes {dimension_semantics = [#tpu.dimension_semantics<parallel>], iteration_bounds = array<i64: 2>, scalar_prefetch = 0 : i64, scratch_operands = 0 : i64, tpu.core_type = #tpu.core_type<tc>, window_params = [{transform_indices = @transform_0, window_bounds = array<i64: 1, 16, 16, 128>}, {pipeline_mode = #tpu.pipeline_mode<synchronous>, transform_indices = @transform_1, window_bounds = array<i64: 3, 3, 128>}, {pipeline_mode = #tpu.pipeline_mode<synchronous>, transform_indices = @transform_2, window_bounds = array<i64: 128, 128>}, {pipeline_mode = #tpu.pipeline_mode<synchronous>, transform_indices = @transform_3, window_bounds = array<i64: 1, 128>}, {pipeline_mode = #tpu.pipeline_mode<synchronous>, transform_indices = @transform_4, window_bounds = array<i64: 3, 3, 128>}, {pipeline_mode = #tpu.pipeline_mode<synchronous>, transform_indices = @transform_5, window_bounds = array<i64: 128, 128>}, {pipeline_mode = #tpu.pipeline_mode<synchronous>, transform_indices = @transform_6, window_bounds = array<i64: 1, 128>}, {pipeline_mode = #tpu.pipeline_mode<synchronous>, transform_indices = @transform_7, window_bounds = array<i64: 3, 3, 128>}, {pipeline_mode = #tpu.pipeline_mode<synchronous>, transform_indices = @transform_8, window_bounds = array<i64: 256, 128>}, {pipeline_mode = #tpu.pipeline_mode<synchronous>, transform_indices = @transform_9, window_bounds = array<i64: 1, 128>}, {transform_indices = @transform_10, window_bounds = array<i64: 1, 16, 16, 128>}]} {
    %c0 = arith.constant 0 : index
    %c0_0 = arith.constant 0 : index
    %c0_1 = arith.constant 0 : index
    %c0_2 = arith.constant 0 : index
    %0 = vector.load %arg1[%c0, %c0_0, %c0_1, %c0_2] : memref<1x16x16x128xf32, #tpu.memory_space<vmem>>, vector<1x16x16x128xf32>
    %1 = vector.shape_cast %0 : vector<1x16x16x128xf32> to vector<16x16x128xf32>
    %2 = tpu.iota {dimensions = array<i32: 1>} : vector<16x16x1xi32>
    %c1_i32 = arith.constant 1 : i32
    %3 = vector.broadcast %c1_i32 : i32 to vector<16x16x1xi32>
    %4 = arith.cmpi sge, %2, %3 : vector<16x16x1xi32>
    %cst = arith.constant 1.000000e+00 : f32
    %cst_3 = arith.constant 0.000000e+00 : f32
    %5 = vector.broadcast %cst : f32 to vector<16x16x1xf32>
    %6 = vector.broadcast %cst_3 : f32 to vector<16x16x1xf32>
    %7 = arith.select %4, %5, %6 : vector<16x16x1xi1>, vector<16x16x1xf32>
    %c15_i32 = arith.constant 15 : i32
    %8 = vector.broadcast %c15_i32 : i32 to vector<16x16x1xi32>
    %9 = arith.cmpi slt, %2, %8 : vector<16x16x1xi32>
    %cst_4 = arith.constant 1.000000e+00 : f32
    %cst_5 = arith.constant 0.000000e+00 : f32
    %10 = vector.broadcast %cst_4 : f32 to vector<16x16x1xf32>
    %11 = vector.broadcast %cst_5 : f32 to vector<16x16x1xf32>
    %12 = arith.select %9, %10, %11 : vector<16x16x1xi1>, vector<16x16x1xf32>
    %cst_6 = arith.constant 0.000000e+00 : f32
    %13 = vector.broadcast %cst_6 : f32 to vector<16x16x128xf32>
    %14 = arith.maximumf %1, %13 : vector<16x16x128xf32>
    %c0_7 = arith.constant 0 : index
    %c0_8 = arith.constant 0 : index
    %c0_9 = arith.constant 0 : index
    %15 = vector.load %arg2[%c0_7, %c0_8, %c0_9] : memref<3x3x128xf32, #tpu.memory_space<vmem>>, vector<3x3x128xf32>
    %c1_i32_10 = arith.constant 1 : i32
    %16 = tpu.dynamic_rotate %14 by %c1_i32_10 dim 1 : vector<16x16x128xf32>, i32 -> vector<16x16x128xf32>
    %17 = vector.broadcast %7 : vector<16x16x1xf32> to vector<16x16x128xf32>
    %18 = arith.mulf %16, %17 : vector<16x16x128xf32>
    %c15_i32_11 = arith.constant 15 : i32
    %19 = tpu.dynamic_rotate %14 by %c15_i32_11 dim 1 : vector<16x16x128xf32>, i32 -> vector<16x16x128xf32>
    %20 = vector.broadcast %12 : vector<16x16x1xf32> to vector<16x16x128xf32>
    %21 = arith.mulf %19, %20 : vector<16x16x128xf32>
    %cst_12 = arith.constant 0.000000e+00 : f32
    %22 = vector.broadcast %cst_12 : f32 to vector<1x16x128xf32>
    %23 = vector.extract_strided_slice %18 {offsets = [0, 0, 0], sizes = [15, 16, 128], strides = [1, 1, 1]} : vector<16x16x128xf32> to vector<15x16x128xf32>
    %24 = tpu.concatenate %22, %23 in 0 : vector<1x16x128xf32>, vector<15x16x128xf32> -> vector<16x16x128xf32>
    %25 = vector.extract_strided_slice %15 {offsets = [0, 0, 0], sizes = [1, 1, 128], strides = [1, 1, 1]} : vector<3x3x128xf32> to vector<1x1x128xf32>
    %26 = vector.shape_cast %25 : vector<1x1x128xf32> to vector<128xf32>
    %27 = vector.shape_cast %26 : vector<128xf32> to vector<1x1x128xf32>
    %28 = vector.broadcast %27 : vector<1x1x128xf32> to vector<16x16x128xf32>
    %29 = arith.mulf %24, %28 : vector<16x16x128xf32>
    %cst_13 = arith.constant 0.000000e+00 : f32
    %30 = vector.broadcast %cst_13 : f32 to vector<1x16x128xf32>
    %31 = vector.extract_strided_slice %14 {offsets = [0, 0, 0], sizes = [15, 16, 128], strides = [1, 1, 1]} : vector<16x16x128xf32> to vector<15x16x128xf32>
    %32 = tpu.concatenate %30, %31 in 0 : vector<1x16x128xf32>, vector<15x16x128xf32> -> vector<16x16x128xf32>
    %33 = vector.extract_strided_slice %15 {offsets = [0, 1, 0], sizes = [1, 1, 128], strides = [1, 1, 1]} : vector<3x3x128xf32> to vector<1x1x128xf32>
    %34 = vector.shape_cast %33 : vector<1x1x128xf32> to vector<128xf32>
    %35 = vector.shape_cast %34 : vector<128xf32> to vector<1x1x128xf32>
    %36 = vector.broadcast %35 : vector<1x1x128xf32> to vector<16x16x128xf32>
    %37 = arith.mulf %32, %36 : vector<16x16x128xf32>
    %38 = arith.addf %29, %37 : vector<16x16x128xf32>
    %cst_14 = arith.constant 0.000000e+00 : f32
    %39 = vector.broadcast %cst_14 : f32 to vector<1x16x128xf32>
    %40 = vector.extract_strided_slice %21 {offsets = [0, 0, 0], sizes = [15, 16, 128], strides = [1, 1, 1]} : vector<16x16x128xf32> to vector<15x16x128xf32>
    %41 = tpu.concatenate %39, %40 in 0 : vector<1x16x128xf32>, vector<15x16x128xf32> -> vector<16x16x128xf32>
    %42 = vector.extract_strided_slice %15 {offsets = [0, 2, 0], sizes = [1, 1, 128], strides = [1, 1, 1]} : vector<3x3x128xf32> to vector<1x1x128xf32>
    %43 = vector.shape_cast %42 : vector<1x1x128xf32> to vector<128xf32>
    %44 = vector.shape_cast %43 : vector<128xf32> to vector<1x1x128xf32>
    %45 = vector.broadcast %44 : vector<1x1x128xf32> to vector<16x16x128xf32>
    %46 = arith.mulf %41, %45 : vector<16x16x128xf32>
    %47 = arith.addf %38, %46 : vector<16x16x128xf32>
    %48 = vector.extract_strided_slice %15 {offsets = [1, 0, 0], sizes = [1, 1, 128], strides = [1, 1, 1]} : vector<3x3x128xf32> to vector<1x1x128xf32>
    %49 = vector.shape_cast %48 : vector<1x1x128xf32> to vector<128xf32>
    %50 = vector.shape_cast %49 : vector<128xf32> to vector<1x1x128xf32>
    %51 = vector.broadcast %50 : vector<1x1x128xf32> to vector<16x16x128xf32>
    %52 = arith.mulf %18, %51 : vector<16x16x128xf32>
    %53 = arith.addf %47, %52 : vector<16x16x128xf32>
    %54 = vector.extract_strided_slice %15 {offsets = [1, 1, 0], sizes = [1, 1, 128], strides = [1, 1, 1]} : vector<3x3x128xf32> to vector<1x1x128xf32>
    %55 = vector.shape_cast %54 : vector<1x1x128xf32> to vector<128xf32>
    %56 = vector.shape_cast %55 : vector<128xf32> to vector<1x1x128xf32>
    %57 = vector.broadcast %56 : vector<1x1x128xf32> to vector<16x16x128xf32>
    %58 = arith.mulf %14, %57 : vector<16x16x128xf32>
    %59 = arith.addf %53, %58 : vector<16x16x128xf32>
    %60 = vector.extract_strided_slice %15 {offsets = [1, 2, 0], sizes = [1, 1, 128], strides = [1, 1, 1]} : vector<3x3x128xf32> to vector<1x1x128xf32>
    %61 = vector.shape_cast %60 : vector<1x1x128xf32> to vector<128xf32>
    %62 = vector.shape_cast %61 : vector<128xf32> to vector<1x1x128xf32>
    %63 = vector.broadcast %62 : vector<1x1x128xf32> to vector<16x16x128xf32>
    %64 = arith.mulf %21, %63 : vector<16x16x128xf32>
    %65 = arith.addf %59, %64 : vector<16x16x128xf32>
    %cst_15 = arith.constant 0.000000e+00 : f32
    %66 = vector.broadcast %cst_15 : f32 to vector<1x16x128xf32>
    %67 = vector.extract_strided_slice %18 {offsets = [1, 0, 0], sizes = [15, 16, 128], strides = [1, 1, 1]} : vector<16x16x128xf32> to vector<15x16x128xf32>
    %68 = tpu.concatenate %67, %66 in 0 : vector<15x16x128xf32>, vector<1x16x128xf32> -> vector<16x16x128xf32>
    %69 = vector.extract_strided_slice %15 {offsets = [2, 0, 0], sizes = [1, 1, 128], strides = [1, 1, 1]} : vector<3x3x128xf32> to vector<1x1x128xf32>
    %70 = vector.shape_cast %69 : vector<1x1x128xf32> to vector<128xf32>
    %71 = vector.shape_cast %70 : vector<128xf32> to vector<1x1x128xf32>
    %72 = vector.broadcast %71 : vector<1x1x128xf32> to vector<16x16x128xf32>
    %73 = arith.mulf %68, %72 : vector<16x16x128xf32>
    %74 = arith.addf %65, %73 : vector<16x16x128xf32>
    %cst_16 = arith.constant 0.000000e+00 : f32
    %75 = vector.broadcast %cst_16 : f32 to vector<1x16x128xf32>
    %76 = vector.extract_strided_slice %14 {offsets = [1, 0, 0], sizes = [15, 16, 128], strides = [1, 1, 1]} : vector<16x16x128xf32> to vector<15x16x128xf32>
    %77 = tpu.concatenate %76, %75 in 0 : vector<15x16x128xf32>, vector<1x16x128xf32> -> vector<16x16x128xf32>
    %78 = vector.extract_strided_slice %15 {offsets = [2, 1, 0], sizes = [1, 1, 128], strides = [1, 1, 1]} : vector<3x3x128xf32> to vector<1x1x128xf32>
    %79 = vector.shape_cast %78 : vector<1x1x128xf32> to vector<128xf32>
    %80 = vector.shape_cast %79 : vector<128xf32> to vector<1x1x128xf32>
    %81 = vector.broadcast %80 : vector<1x1x128xf32> to vector<16x16x128xf32>
    %82 = arith.mulf %77, %81 : vector<16x16x128xf32>
    %83 = arith.addf %74, %82 : vector<16x16x128xf32>
    %cst_17 = arith.constant 0.000000e+00 : f32
    %84 = vector.broadcast %cst_17 : f32 to vector<1x16x128xf32>
    %85 = vector.extract_strided_slice %21 {offsets = [1, 0, 0], sizes = [15, 16, 128], strides = [1, 1, 1]} : vector<16x16x128xf32> to vector<15x16x128xf32>
    %86 = tpu.concatenate %85, %84 in 0 : vector<15x16x128xf32>, vector<1x16x128xf32> -> vector<16x16x128xf32>
    %87 = vector.extract_strided_slice %15 {offsets = [2, 2, 0], sizes = [1, 1, 128], strides = [1, 1, 1]} : vector<3x3x128xf32> to vector<1x1x128xf32>
    %88 = vector.shape_cast %87 : vector<1x1x128xf32> to vector<128xf32>
    %89 = vector.shape_cast %88 : vector<128xf32> to vector<1x1x128xf32>
    %90 = vector.broadcast %89 : vector<1x1x128xf32> to vector<16x16x128xf32>
    %91 = arith.mulf %86, %90 : vector<16x16x128xf32>
    %92 = arith.addf %83, %91 : vector<16x16x128xf32>
    %c0_18 = arith.constant 0 : index
    %c0_19 = arith.constant 0 : index
    %93 = vector.load %arg3[%c0_18, %c0_19] : memref<128x128xbf16, #tpu.memory_space<vmem>>, vector<128x128xbf16>
    %c0_20 = arith.constant 0 : index
    %c0_21 = arith.constant 0 : index
    %94 = vector.load %arg4[%c0_20, %c0_21] : memref<1x128xf32, #tpu.memory_space<vmem>>, vector<1x128xf32>
    %95 = vector.shape_cast %92 : vector<16x16x128xf32> to vector<256x128xf32>
    %96 = arith.truncf %95 : vector<256x128xf32> to vector<256x128xbf16>
    %cst_22 = arith.constant dense<0.000000e+00> : vector<256x128xf32>
    %97 = tpu.matmul %96, %93, %cst_22 {dimension_numbers = #tpu.dot_dimension_numbers<[1], [0], [0], [1], [0, 0, 1, 1], [], []>} : vector<256x128xbf16>, vector<128x128xbf16>, vector<256x128xf32> -> vector<256x128xf32>
    %98 = vector.broadcast %94 : vector<1x128xf32> to vector<256x128xf32>
    %99 = arith.addf %97, %98 : vector<256x128xf32>
    %100 = vector.shape_cast %99 : vector<256x128xf32> to vector<16x16x128xf32>
    %cst_23 = arith.constant 0.000000e+00 : f32
    %101 = vector.broadcast %cst_23 : f32 to vector<16x16x128xf32>
    %102 = arith.maximumf %100, %101 : vector<16x16x128xf32>
    %c0_24 = arith.constant 0 : index
    %c0_25 = arith.constant 0 : index
    %c0_26 = arith.constant 0 : index
    %103 = vector.load %arg5[%c0_24, %c0_25, %c0_26] : memref<3x3x128xf32, #tpu.memory_space<vmem>>, vector<3x3x128xf32>
    %c1_i32_27 = arith.constant 1 : i32
    %104 = tpu.dynamic_rotate %102 by %c1_i32_27 dim 1 : vector<16x16x128xf32>, i32 -> vector<16x16x128xf32>
    %105 = vector.broadcast %7 : vector<16x16x1xf32> to vector<16x16x128xf32>
    %106 = arith.mulf %104, %105 : vector<16x16x128xf32>
    %c15_i32_28 = arith.constant 15 : i32
    %107 = tpu.dynamic_rotate %102 by %c15_i32_28 dim 1 : vector<16x16x128xf32>, i32 -> vector<16x16x128xf32>
    %108 = vector.broadcast %12 : vector<16x16x1xf32> to vector<16x16x128xf32>
    %109 = arith.mulf %107, %108 : vector<16x16x128xf32>
    %cst_29 = arith.constant 0.000000e+00 : f32
    %110 = vector.broadcast %cst_29 : f32 to vector<1x16x128xf32>
    %111 = vector.extract_strided_slice %106 {offsets = [0, 0, 0], sizes = [15, 16, 128], strides = [1, 1, 1]} : vector<16x16x128xf32> to vector<15x16x128xf32>
    %112 = tpu.concatenate %110, %111 in 0 : vector<1x16x128xf32>, vector<15x16x128xf32> -> vector<16x16x128xf32>
    %113 = vector.extract_strided_slice %103 {offsets = [0, 0, 0], sizes = [1, 1, 128], strides = [1, 1, 1]} : vector<3x3x128xf32> to vector<1x1x128xf32>
    %114 = vector.shape_cast %113 : vector<1x1x128xf32> to vector<128xf32>
    %115 = vector.shape_cast %114 : vector<128xf32> to vector<1x1x128xf32>
    %116 = vector.broadcast %115 : vector<1x1x128xf32> to vector<16x16x128xf32>
    %117 = arith.mulf %112, %116 : vector<16x16x128xf32>
    %cst_30 = arith.constant 0.000000e+00 : f32
    %118 = vector.broadcast %cst_30 : f32 to vector<1x16x128xf32>
    %119 = vector.extract_strided_slice %102 {offsets = [0, 0, 0], sizes = [15, 16, 128], strides = [1, 1, 1]} : vector<16x16x128xf32> to vector<15x16x128xf32>
    %120 = tpu.concatenate %118, %119 in 0 : vector<1x16x128xf32>, vector<15x16x128xf32> -> vector<16x16x128xf32>
    %121 = vector.extract_strided_slice %103 {offsets = [0, 1, 0], sizes = [1, 1, 128], strides = [1, 1, 1]} : vector<3x3x128xf32> to vector<1x1x128xf32>
    %122 = vector.shape_cast %121 : vector<1x1x128xf32> to vector<128xf32>
    %123 = vector.shape_cast %122 : vector<128xf32> to vector<1x1x128xf32>
    %124 = vector.broadcast %123 : vector<1x1x128xf32> to vector<16x16x128xf32>
    %125 = arith.mulf %120, %124 : vector<16x16x128xf32>
    %126 = arith.addf %117, %125 : vector<16x16x128xf32>
    %cst_31 = arith.constant 0.000000e+00 : f32
    %127 = vector.broadcast %cst_31 : f32 to vector<1x16x128xf32>
    %128 = vector.extract_strided_slice %109 {offsets = [0, 0, 0], sizes = [15, 16, 128], strides = [1, 1, 1]} : vector<16x16x128xf32> to vector<15x16x128xf32>
    %129 = tpu.concatenate %127, %128 in 0 : vector<1x16x128xf32>, vector<15x16x128xf32> -> vector<16x16x128xf32>
    %130 = vector.extract_strided_slice %103 {offsets = [0, 2, 0], sizes = [1, 1, 128], strides = [1, 1, 1]} : vector<3x3x128xf32> to vector<1x1x128xf32>
    %131 = vector.shape_cast %130 : vector<1x1x128xf32> to vector<128xf32>
    %132 = vector.shape_cast %131 : vector<128xf32> to vector<1x1x128xf32>
    %133 = vector.broadcast %132 : vector<1x1x128xf32> to vector<16x16x128xf32>
    %134 = arith.mulf %129, %133 : vector<16x16x128xf32>
    %135 = arith.addf %126, %134 : vector<16x16x128xf32>
    %136 = vector.extract_strided_slice %103 {offsets = [1, 0, 0], sizes = [1, 1, 128], strides = [1, 1, 1]} : vector<3x3x128xf32> to vector<1x1x128xf32>
    %137 = vector.shape_cast %136 : vector<1x1x128xf32> to vector<128xf32>
    %138 = vector.shape_cast %137 : vector<128xf32> to vector<1x1x128xf32>
    %139 = vector.broadcast %138 : vector<1x1x128xf32> to vector<16x16x128xf32>
    %140 = arith.mulf %106, %139 : vector<16x16x128xf32>
    %141 = arith.addf %135, %140 : vector<16x16x128xf32>
    %142 = vector.extract_strided_slice %103 {offsets = [1, 1, 0], sizes = [1, 1, 128], strides = [1, 1, 1]} : vector<3x3x128xf32> to vector<1x1x128xf32>
    %143 = vector.shape_cast %142 : vector<1x1x128xf32> to vector<128xf32>
    %144 = vector.shape_cast %143 : vector<128xf32> to vector<1x1x128xf32>
    %145 = vector.broadcast %144 : vector<1x1x128xf32> to vector<16x16x128xf32>
    %146 = arith.mulf %102, %145 : vector<16x16x128xf32>
    %147 = arith.addf %141, %146 : vector<16x16x128xf32>
    %148 = vector.extract_strided_slice %103 {offsets = [1, 2, 0], sizes = [1, 1, 128], strides = [1, 1, 1]} : vector<3x3x128xf32> to vector<1x1x128xf32>
    %149 = vector.shape_cast %148 : vector<1x1x128xf32> to vector<128xf32>
    %150 = vector.shape_cast %149 : vector<128xf32> to vector<1x1x128xf32>
    %151 = vector.broadcast %150 : vector<1x1x128xf32> to vector<16x16x128xf32>
    %152 = arith.mulf %109, %151 : vector<16x16x128xf32>
    %153 = arith.addf %147, %152 : vector<16x16x128xf32>
    %cst_32 = arith.constant 0.000000e+00 : f32
    %154 = vector.broadcast %cst_32 : f32 to vector<1x16x128xf32>
    %155 = vector.extract_strided_slice %106 {offsets = [1, 0, 0], sizes = [15, 16, 128], strides = [1, 1, 1]} : vector<16x16x128xf32> to vector<15x16x128xf32>
    %156 = tpu.concatenate %155, %154 in 0 : vector<15x16x128xf32>, vector<1x16x128xf32> -> vector<16x16x128xf32>
    %157 = vector.extract_strided_slice %103 {offsets = [2, 0, 0], sizes = [1, 1, 128], strides = [1, 1, 1]} : vector<3x3x128xf32> to vector<1x1x128xf32>
    %158 = vector.shape_cast %157 : vector<1x1x128xf32> to vector<128xf32>
    %159 = vector.shape_cast %158 : vector<128xf32> to vector<1x1x128xf32>
    %160 = vector.broadcast %159 : vector<1x1x128xf32> to vector<16x16x128xf32>
    %161 = arith.mulf %156, %160 : vector<16x16x128xf32>
    %162 = arith.addf %153, %161 : vector<16x16x128xf32>
    %cst_33 = arith.constant 0.000000e+00 : f32
    %163 = vector.broadcast %cst_33 : f32 to vector<1x16x128xf32>
    %164 = vector.extract_strided_slice %102 {offsets = [1, 0, 0], sizes = [15, 16, 128], strides = [1, 1, 1]} : vector<16x16x128xf32> to vector<15x16x128xf32>
    %165 = tpu.concatenate %164, %163 in 0 : vector<15x16x128xf32>, vector<1x16x128xf32> -> vector<16x16x128xf32>
    %166 = vector.extract_strided_slice %103 {offsets = [2, 1, 0], sizes = [1, 1, 128], strides = [1, 1, 1]} : vector<3x3x128xf32> to vector<1x1x128xf32>
    %167 = vector.shape_cast %166 : vector<1x1x128xf32> to vector<128xf32>
    %168 = vector.shape_cast %167 : vector<128xf32> to vector<1x1x128xf32>
    %169 = vector.broadcast %168 : vector<1x1x128xf32> to vector<16x16x128xf32>
    %170 = arith.mulf %165, %169 : vector<16x16x128xf32>
    %171 = arith.addf %162, %170 : vector<16x16x128xf32>
    %cst_34 = arith.constant 0.000000e+00 : f32
    %172 = vector.broadcast %cst_34 : f32 to vector<1x16x128xf32>
    %173 = vector.extract_strided_slice %109 {offsets = [1, 0, 0], sizes = [15, 16, 128], strides = [1, 1, 1]} : vector<16x16x128xf32> to vector<15x16x128xf32>
    %174 = tpu.concatenate %173, %172 in 0 : vector<15x16x128xf32>, vector<1x16x128xf32> -> vector<16x16x128xf32>
    %175 = vector.extract_strided_slice %103 {offsets = [2, 2, 0], sizes = [1, 1, 128], strides = [1, 1, 1]} : vector<3x3x128xf32> to vector<1x1x128xf32>
    %176 = vector.shape_cast %175 : vector<1x1x128xf32> to vector<128xf32>
    %177 = vector.shape_cast %176 : vector<128xf32> to vector<1x1x128xf32>
    %178 = vector.broadcast %177 : vector<1x1x128xf32> to vector<16x16x128xf32>
    %179 = arith.mulf %174, %178 : vector<16x16x128xf32>
    %180 = arith.addf %171, %179 : vector<16x16x128xf32>
    %c0_35 = arith.constant 0 : index
    %c0_36 = arith.constant 0 : index
    %181 = vector.load %arg6[%c0_35, %c0_36] : memref<128x128xbf16, #tpu.memory_space<vmem>>, vector<128x128xbf16>
    %c0_37 = arith.constant 0 : index
    %c0_38 = arith.constant 0 : index
    %182 = vector.load %arg7[%c0_37, %c0_38] : memref<1x128xf32, #tpu.memory_space<vmem>>, vector<1x128xf32>
    %183 = vector.shape_cast %180 : vector<16x16x128xf32> to vector<256x128xf32>
    %184 = arith.truncf %183 : vector<256x128xf32> to vector<256x128xbf16>
    %cst_39 = arith.constant dense<0.000000e+00> : vector<256x128xf32>
    %185 = tpu.matmul %184, %181, %cst_39 {dimension_numbers = #tpu.dot_dimension_numbers<[1], [0], [0], [1], [0, 0, 1, 1], [], []>} : vector<256x128xbf16>, vector<128x128xbf16>, vector<256x128xf32> -> vector<256x128xf32>
    %186 = vector.broadcast %182 : vector<1x128xf32> to vector<256x128xf32>
    %187 = arith.addf %185, %186 : vector<256x128xf32>
    %188 = vector.shape_cast %187 : vector<256x128xf32> to vector<16x16x128xf32>
    %cst_40 = arith.constant 0.000000e+00 : f32
    %189 = vector.broadcast %cst_40 : f32 to vector<16x16x128xf32>
    %190 = arith.maximumf %188, %189 : vector<16x16x128xf32>
    %c0_41 = arith.constant 0 : index
    %c0_42 = arith.constant 0 : index
    %c0_43 = arith.constant 0 : index
    %191 = vector.load %arg8[%c0_41, %c0_42, %c0_43] : memref<3x3x128xf32, #tpu.memory_space<vmem>>, vector<3x3x128xf32>
    %c1_i32_44 = arith.constant 1 : i32
    %192 = tpu.dynamic_rotate %190 by %c1_i32_44 dim 1 : vector<16x16x128xf32>, i32 -> vector<16x16x128xf32>
    %193 = vector.broadcast %7 : vector<16x16x1xf32> to vector<16x16x128xf32>
    %194 = arith.mulf %192, %193 : vector<16x16x128xf32>
    %c15_i32_45 = arith.constant 15 : i32
    %195 = tpu.dynamic_rotate %190 by %c15_i32_45 dim 1 : vector<16x16x128xf32>, i32 -> vector<16x16x128xf32>
    %196 = vector.broadcast %12 : vector<16x16x1xf32> to vector<16x16x128xf32>
    %197 = arith.mulf %195, %196 : vector<16x16x128xf32>
    %cst_46 = arith.constant 0.000000e+00 : f32
    %198 = vector.broadcast %cst_46 : f32 to vector<1x16x128xf32>
    %199 = vector.extract_strided_slice %194 {offsets = [0, 0, 0], sizes = [15, 16, 128], strides = [1, 1, 1]} : vector<16x16x128xf32> to vector<15x16x128xf32>
    %200 = tpu.concatenate %198, %199 in 0 : vector<1x16x128xf32>, vector<15x16x128xf32> -> vector<16x16x128xf32>
    %201 = vector.extract_strided_slice %191 {offsets = [0, 0, 0], sizes = [1, 1, 128], strides = [1, 1, 1]} : vector<3x3x128xf32> to vector<1x1x128xf32>
    %202 = vector.shape_cast %201 : vector<1x1x128xf32> to vector<128xf32>
    %203 = vector.shape_cast %202 : vector<128xf32> to vector<1x1x128xf32>
    %204 = vector.broadcast %203 : vector<1x1x128xf32> to vector<16x16x128xf32>
    %205 = arith.mulf %200, %204 : vector<16x16x128xf32>
    %cst_47 = arith.constant 0.000000e+00 : f32
    %206 = vector.broadcast %cst_47 : f32 to vector<1x16x128xf32>
    %207 = vector.extract_strided_slice %190 {offsets = [0, 0, 0], sizes = [15, 16, 128], strides = [1, 1, 1]} : vector<16x16x128xf32> to vector<15x16x128xf32>
    %208 = tpu.concatenate %206, %207 in 0 : vector<1x16x128xf32>, vector<15x16x128xf32> -> vector<16x16x128xf32>
    %209 = vector.extract_strided_slice %191 {offsets = [0, 1, 0], sizes = [1, 1, 128], strides = [1, 1, 1]} : vector<3x3x128xf32> to vector<1x1x128xf32>
    %210 = vector.shape_cast %209 : vector<1x1x128xf32> to vector<128xf32>
    %211 = vector.shape_cast %210 : vector<128xf32> to vector<1x1x128xf32>
    %212 = vector.broadcast %211 : vector<1x1x128xf32> to vector<16x16x128xf32>
    %213 = arith.mulf %208, %212 : vector<16x16x128xf32>
    %214 = arith.addf %205, %213 : vector<16x16x128xf32>
    %cst_48 = arith.constant 0.000000e+00 : f32
    %215 = vector.broadcast %cst_48 : f32 to vector<1x16x128xf32>
    %216 = vector.extract_strided_slice %197 {offsets = [0, 0, 0], sizes = [15, 16, 128], strides = [1, 1, 1]} : vector<16x16x128xf32> to vector<15x16x128xf32>
    %217 = tpu.concatenate %215, %216 in 0 : vector<1x16x128xf32>, vector<15x16x128xf32> -> vector<16x16x128xf32>
    %218 = vector.extract_strided_slice %191 {offsets = [0, 2, 0], sizes = [1, 1, 128], strides = [1, 1, 1]} : vector<3x3x128xf32> to vector<1x1x128xf32>
    %219 = vector.shape_cast %218 : vector<1x1x128xf32> to vector<128xf32>
    %220 = vector.shape_cast %219 : vector<128xf32> to vector<1x1x128xf32>
    %221 = vector.broadcast %220 : vector<1x1x128xf32> to vector<16x16x128xf32>
    %222 = arith.mulf %217, %221 : vector<16x16x128xf32>
    %223 = arith.addf %214, %222 : vector<16x16x128xf32>
    %224 = vector.extract_strided_slice %191 {offsets = [1, 0, 0], sizes = [1, 1, 128], strides = [1, 1, 1]} : vector<3x3x128xf32> to vector<1x1x128xf32>
    %225 = vector.shape_cast %224 : vector<1x1x128xf32> to vector<128xf32>
    %226 = vector.shape_cast %225 : vector<128xf32> to vector<1x1x128xf32>
    %227 = vector.broadcast %226 : vector<1x1x128xf32> to vector<16x16x128xf32>
    %228 = arith.mulf %194, %227 : vector<16x16x128xf32>
    %229 = arith.addf %223, %228 : vector<16x16x128xf32>
    %230 = vector.extract_strided_slice %191 {offsets = [1, 1, 0], sizes = [1, 1, 128], strides = [1, 1, 1]} : vector<3x3x128xf32> to vector<1x1x128xf32>
    %231 = vector.shape_cast %230 : vector<1x1x128xf32> to vector<128xf32>
    %232 = vector.shape_cast %231 : vector<128xf32> to vector<1x1x128xf32>
    %233 = vector.broadcast %232 : vector<1x1x128xf32> to vector<16x16x128xf32>
    %234 = arith.mulf %190, %233 : vector<16x16x128xf32>
    %235 = arith.addf %229, %234 : vector<16x16x128xf32>
    %236 = vector.extract_strided_slice %191 {offsets = [1, 2, 0], sizes = [1, 1, 128], strides = [1, 1, 1]} : vector<3x3x128xf32> to vector<1x1x128xf32>
    %237 = vector.shape_cast %236 : vector<1x1x128xf32> to vector<128xf32>
    %238 = vector.shape_cast %237 : vector<128xf32> to vector<1x1x128xf32>
    %239 = vector.broadcast %238 : vector<1x1x128xf32> to vector<16x16x128xf32>
    %240 = arith.mulf %197, %239 : vector<16x16x128xf32>
    %241 = arith.addf %235, %240 : vector<16x16x128xf32>
    %cst_49 = arith.constant 0.000000e+00 : f32
    %242 = vector.broadcast %cst_49 : f32 to vector<1x16x128xf32>
    %243 = vector.extract_strided_slice %194 {offsets = [1, 0, 0], sizes = [15, 16, 128], strides = [1, 1, 1]} : vector<16x16x128xf32> to vector<15x16x128xf32>
    %244 = tpu.concatenate %243, %242 in 0 : vector<15x16x128xf32>, vector<1x16x128xf32> -> vector<16x16x128xf32>
    %245 = vector.extract_strided_slice %191 {offsets = [2, 0, 0], sizes = [1, 1, 128], strides = [1, 1, 1]} : vector<3x3x128xf32> to vector<1x1x128xf32>
    %246 = vector.shape_cast %245 : vector<1x1x128xf32> to vector<128xf32>
    %247 = vector.shape_cast %246 : vector<128xf32> to vector<1x1x128xf32>
    %248 = vector.broadcast %247 : vector<1x1x128xf32> to vector<16x16x128xf32>
    %249 = arith.mulf %244, %248 : vector<16x16x128xf32>
    %250 = arith.addf %241, %249 : vector<16x16x128xf32>
    %cst_50 = arith.constant 0.000000e+00 : f32
    %251 = vector.broadcast %cst_50 : f32 to vector<1x16x128xf32>
    %252 = vector.extract_strided_slice %190 {offsets = [1, 0, 0], sizes = [15, 16, 128], strides = [1, 1, 1]} : vector<16x16x128xf32> to vector<15x16x128xf32>
    %253 = tpu.concatenate %252, %251 in 0 : vector<15x16x128xf32>, vector<1x16x128xf32> -> vector<16x16x128xf32>
    %254 = vector.extract_strided_slice %191 {offsets = [2, 1, 0], sizes = [1, 1, 128], strides = [1, 1, 1]} : vector<3x3x128xf32> to vector<1x1x128xf32>
    %255 = vector.shape_cast %254 : vector<1x1x128xf32> to vector<128xf32>
    %256 = vector.shape_cast %255 : vector<128xf32> to vector<1x1x128xf32>
    %257 = vector.broadcast %256 : vector<1x1x128xf32> to vector<16x16x128xf32>
    %258 = arith.mulf %253, %257 : vector<16x16x128xf32>
    %259 = arith.addf %250, %258 : vector<16x16x128xf32>
    %cst_51 = arith.constant 0.000000e+00 : f32
    %260 = vector.broadcast %cst_51 : f32 to vector<1x16x128xf32>
    %261 = vector.extract_strided_slice %197 {offsets = [1, 0, 0], sizes = [15, 16, 128], strides = [1, 1, 1]} : vector<16x16x128xf32> to vector<15x16x128xf32>
    %262 = tpu.concatenate %261, %260 in 0 : vector<15x16x128xf32>, vector<1x16x128xf32> -> vector<16x16x128xf32>
    %263 = vector.extract_strided_slice %191 {offsets = [2, 2, 0], sizes = [1, 1, 128], strides = [1, 1, 1]} : vector<3x3x128xf32> to vector<1x1x128xf32>
    %264 = vector.shape_cast %263 : vector<1x1x128xf32> to vector<128xf32>
    %265 = vector.shape_cast %264 : vector<128xf32> to vector<1x1x128xf32>
    %266 = vector.broadcast %265 : vector<1x1x128xf32> to vector<16x16x128xf32>
    %267 = arith.mulf %262, %266 : vector<16x16x128xf32>
    %268 = arith.addf %259, %267 : vector<16x16x128xf32>
    %269 = arith.truncf %268 : vector<16x16x128xf32> to vector<16x16x128xbf16>
    %270 = arith.truncf %1 : vector<16x16x128xf32> to vector<16x16x128xbf16>
    %271 = tpu.concatenate %269, %270 in 2 : vector<16x16x128xbf16>, vector<16x16x128xbf16> -> vector<16x16x256xbf16>
    %c0_52 = arith.constant 0 : index
    %c0_53 = arith.constant 0 : index
    %272 = vector.load %arg9[%c0_52, %c0_53] : memref<256x128xbf16, #tpu.memory_space<vmem>>, vector<256x128xbf16>
    %c0_54 = arith.constant 0 : index
    %c0_55 = arith.constant 0 : index
    %273 = vector.load %arg10[%c0_54, %c0_55] : memref<1x128xf32, #tpu.memory_space<vmem>>, vector<1x128xf32>
    %274 = vector.shape_cast %271 : vector<16x16x256xbf16> to vector<256x256xbf16>
    %cst_56 = arith.constant dense<0.000000e+00> : vector<256x128xf32>
    %275 = tpu.matmul %274, %272, %cst_56 {dimension_numbers = #tpu.dot_dimension_numbers<[1], [0], [0], [1], [0, 0, 1, 1], [], []>} : vector<256x256xbf16>, vector<256x128xbf16>, vector<256x128xf32> -> vector<256x128xf32>
    %276 = vector.broadcast %273 : vector<1x128xf32> to vector<256x128xf32>
    %277 = arith.addf %275, %276 : vector<256x128xf32>
    %278 = vector.shape_cast %277 : vector<256x128xf32> to vector<16x16x128xf32>
    %c0_57 = arith.constant 0 : index
    %c0_58 = arith.constant 0 : index
    %c0_59 = arith.constant 0 : index
    %c0_60 = arith.constant 0 : index
    %279 = vector.load %arg11[%c0_57, %c0_58, %c0_59, %c0_60] : memref<1x16x16x128xf32, #tpu.memory_space<vmem>>, vector<1x16x16x128xf32>
    %280 = vector.shape_cast %279 : vector<1x16x16x128xf32> to vector<16x16x128xf32>
    %281 = vector.shape_cast %278 : vector<16x16x128xf32> to vector<1x16x16x128xf32>
    tpu.vector_store %arg11[%c0_57, %c0_58, %c0_59, %c0_60], %281 {strides = array<i32>} : memref<1x16x16x128xf32, #tpu.memory_space<vmem>>, vector<1x16x16x128xf32>,
    return
  }
  func.func @transform_0(%arg0: i32) -> (i32, i32, i32, i32) {
    %c0_i32 = arith.constant 0 : i32
    %c0_i32_0 = arith.constant 0 : i32
    %c0_i32_1 = arith.constant 0 : i32
    %c0_i32_2 = arith.constant 0 : i32
    return %arg0, %c0_i32, %c0_i32_0, %c0_i32_1 : i32, i32, i32, i32
  }
  func.func @transform_1(%arg0: i32) -> (i32, i32, i32) {
    %c0_i32 = arith.constant 0 : i32
    %c0_i32_0 = arith.constant 0 : i32
    %c0_i32_1 = arith.constant 0 : i32
    %c0_i32_2 = arith.constant 0 : i32
    return %c0_i32, %c0_i32_0, %c0_i32_1 : i32, i32, i32
  }
  func.func @transform_2(%arg0: i32) -> (i32, i32) {
    %c0_i32 = arith.constant 0 : i32
    %c0_i32_0 = arith.constant 0 : i32
    %c0_i32_1 = arith.constant 0 : i32
    return %c0_i32, %c0_i32_0 : i32, i32
  }
  func.func @transform_3(%arg0: i32) -> (i32, i32) {
    %c0_i32 = arith.constant 0 : i32
    %c0_i32_0 = arith.constant 0 : i32
    %c0_i32_1 = arith.constant 0 : i32
    return %c0_i32, %c0_i32_0 : i32, i32
  }
  func.func @transform_4(%arg0: i32) -> (i32, i32, i32) {
    %c0_i32 = arith.constant 0 : i32
    %c0_i32_0 = arith.constant 0 : i32
    %c0_i32_1 = arith.constant 0 : i32
    %c0_i32_2 = arith.constant 0 : i32
    return %c0_i32, %c0_i32_0, %c0_i32_1 : i32, i32, i32
  }
  func.func @transform_5(%arg0: i32) -> (i32, i32) {
    %c0_i32 = arith.constant 0 : i32
    %c0_i32_0 = arith.constant 0 : i32
    %c0_i32_1 = arith.constant 0 : i32
    return %c0_i32, %c0_i32_0 : i32, i32
  }
  func.func @transform_6(%arg0: i32) -> (i32, i32) {
    %c0_i32 = arith.constant 0 : i32
    %c0_i32_0 = arith.constant 0 : i32
    %c0_i32_1 = arith.constant 0 : i32
    return %c0_i32, %c0_i32_0 : i32, i32
  }
  func.func @transform_7(%arg0: i32) -> (i32, i32, i32) {
    %c0_i32 = arith.constant 0 : i32
    %c0_i32_0 = arith.constant 0 : i32
    %c0_i32_1 = arith.constant 0 : i32
    %c0_i32_2 = arith.constant 0 : i32
    return %c0_i32, %c0_i32_0, %c0_i32_1 : i32, i32, i32
  }
  func.func @transform_8(%arg0: i32) -> (i32, i32) {
    %c0_i32 = arith.constant 0 : i32
    %c0_i32_0 = arith.constant 0 : i32
    %c0_i32_1 = arith.constant 0 : i32
    return %c0_i32, %c0_i32_0 : i32, i32
  }
  func.func @transform_9(%arg0: i32) -> (i32, i32) {
    %c0_i32 = arith.constant 0 : i32
    %c0_i32_0 = arith.constant 0 : i32
    %c0_i32_1 = arith.constant 0 : i32
    return %c0_i32, %c0_i32_0 : i32, i32
  }
  func.func @transform_10(%arg0: i32) -> (i32, i32, i32, i32) {
    %c0_i32 = arith.constant 0 : i32
    %c0_i32_0 = arith.constant 0 : i32
    %c0_i32_1 = arith.constant 0 : i32
    %c0_i32_2 = arith.constant 0 : i32
    return %arg0, %c0_i32, %c0_i32_0, %c0_i32_1 : i32, i32, i32, i32
  }
}

</mosaic_0001>

<llo_original>
// kernel: tpu_custom_call.1
$region0: #{tpu_custom_call.1}
  #allocation0 [shape = 'u32[]', space=smem, size = 0x4, offset = 0x4, fixed_abs, tag = 'smem constant byte address 0x4 - core index']
  #allocation1 [shape = 'u32[72,128]{1,0:T(1,128)}', space=vmem, size = 0x9000, scoped, tag = 'internal scratch']
  %s0 = inlined_call_operand.hbm [shape: f32[2,16,16,128], index: 0, kind: input, shape index: {}]
  %s1 = inlined_call_operand.hbm [shape: f32[3,3,128], index: 1, kind: input, shape index: {}]
  %s2 = inlined_call_operand.hbm [shape: bf16[128,128], index: 2, kind: input, shape index: {}]
  %s3 = inlined_call_operand.vmem [shape: f32[1,128], index: 3, kind: input, shape index: {}]
  %s4 = inlined_call_operand.hbm [shape: f32[3,3,128], index: 4, kind: input, shape index: {}]
  %s5 = inlined_call_operand.hbm [shape: bf16[128,128], index: 5, kind: input, shape index: {}]
  %s6 = inlined_call_operand.vmem [shape: f32[1,128], index: 6, kind: input, shape index: {}]
  %s7 = inlined_call_operand.hbm [shape: f32[3,3,128], index: 7, kind: input, shape index: {}]
  %s8 = inlined_call_operand.hbm [shape: bf16[256,128], index: 8, kind: input, shape index: {}]
  %s9 = inlined_call_operand.vmem [shape: f32[1,128], index: 9, kind: input, shape index: {}]
  %s10 = inlined_call_operand.hbm [shape: f32[2,16,16,128], index: 10, kind: output, shape index: {}]
  %s11 = sld [smem:[#allocation0]]
  $region101: #{tpu_custom_call.1} parent=0
    _
  %s13 = ssub.s32 1, %s11
  %s14 = scalar_select 0, %s13, %s11
  $region1: #{tpu_custom_call.1} parent=0
    #allocation2 [shape = 'u8[262144]{0}', space=vmem, size = 0x40000, scoped, tag = 'input window, operand 0']
    #allocation3 [shape = 's32[2]{0}', space=sflag, size = 0x8, scoped, tag = 'scoped memory for tpu_custom_call.1']
    #allocation4 [shape = 's32[2]{0}', space=sflag, size = 0x8, scoped, tag = 'scoped memory for tpu_custom_call.1']
    #allocation5 [shape = 'u8[6144]{0}', space=vmem, size = 0x1800, scoped, tag = 'input window, operand 1, single buffered']
    #allocation6 [shape = 's32[1]{0}', space=sflag, size = 0x4, scoped, tag = 'scoped memory for tpu_custom_call.1']
    #allocation7 [shape = 'u8[32768]{0}', space=vmem, size = 0x8000, scoped, tag = 'input window, operand 2, single buffered']
    #allocation8 [shape = 'u8[6144]{0}', space=vmem, size = 0x1800, scoped, tag = 'input window, operand 4, single buffered']
    #allocation9 [shape = 's32[1]{0}', space=sflag, size = 0x4, scoped, tag = 'scoped memory for tpu_custom_call.1']
    #allocation10 [shape = 'u8[32768]{0}', space=vmem, size = 0x8000, scoped, tag = 'input window, operand 5, single buffered']
    #allocation11 [shape = 'u8[6144]{0}', space=vmem, size = 0x1800, scoped, tag = 'input window, operand 7, single buffered']
    #allocation12 [shape = 's32[1]{0}', space=sflag, size = 0x4, scoped, tag = 'scoped memory for tpu_custom_call.1']
    #allocation13 [shape = 'u8[65536]{0}', space=vmem, size = 0x10000, scoped, tag = 'input window, operand 8, single buffered']
    #allocation14 [shape = 'u8[262144]{0}', space=vmem, size = 0x40000, scoped, tag = 'output window, operand 0']
    %15 = vsyncpa [#allocation3], 0
    %s16 = scalar_lea.sflag [#allocation3], 1
    %17 = vsyncpa %s16, 0
    %18 = vsyncpa [#allocation6], 0
    %19 = vsyncpa [#allocation9], 0
    %20 = vsyncpa [#allocation12], 0
    %21 = vsyncpa [#allocation4], 0
    %s22 = scalar_lea.sflag [#allocation4], 1
    %23 = vsyncpa %s22, 0
    loop: start=0, step=1, limit=4
    $region2: #{tpu_custom_call.1} parent=1 // loop_pre_header
      _
    $region3: #{tpu_custom_call.1} parent=1 // loop_header
      %s25 = sphi 0, %s29
      %p26 = scmp.ge.s32.totalorder %s25, 4
      %s35 = sphi 0, %s37
      %s38 = sphi 0, %s35
      %s39 = sphi 0, %s38
      %s55 = sphi 0, %s39
      %s59 = sphi 0, %s59
      %s61 = sphi 0, %s59
      %s62 = sphi 0, %s61
      %s76 = sphi 0, %s62
      %s80 = sphi 0, %s80
      %s82 = sphi 0, %s80
      %s83 = sphi 0, %s82
      %s97 = sphi 0, %s83
      %s101 = sphi 0, %s101
      %s103 = sphi 0, %s101
      %s104 = sphi 0, %s103
      %s118 = sphi 0, %s104
      %s122 = sphi 0, %s122
      %s124 = sphi 0, %s122
      %s125 = sphi 0, %s124
      %s139 = sphi 0, %s125
      %s143 = sphi 0, %s143
      %s145 = sphi 0, %s143
      %s146 = sphi 0, %s145
      %s160 = sphi 0, %s146
      %s164 = sphi 0, %s164
      %s166 = sphi 0, %s164
      %s167 = sphi 0, %s166
      %s181 = sphi 0, %s167
      %s185 = sphi 0, %s185
      %s187 = sphi 0, %s185
      %s188 = sphi 0, %s187
      %s202 = sphi 0, %s188
      %s206 = sphi 0, %s206
      %s208 = sphi 0, %s206
      %s209 = sphi 0, %s208
      %s223 = sphi 0, %s209
      %s227 = sphi 0, %s227
      %s229 = sphi 0, %s227
      %s230 = sphi 0, %s229
      %s244 = sphi 0, %s230
      %s250 = sphi 0, %s252
      %s253 = sphi 0, %s250
      %s254 = sphi 0, %s253
      %s270 = sphi 0, %s254
    $region4: #{tpu_custom_call.1} parent=1 // loop_header_branch
      %28 = sbr.rel (%p26) target = $region8
    $region5: #{tpu_custom_call.1} parent=1 // loop_body
      %s30 = ssub.s32 %s25, 1
      %s31 = ssub.s32 %s25, 2
      %s32 = sadd.s32 %s25, 1
      %s33 = ssub.s32 %s25, %s32
      %p34 = scmp.eq.s32.totalorder %s33, 0
      %s36 = sadd.s32 %s35, 1
      %s37 = scalar_select %p34, %s35, %s36
      %p40 = pneg %p34
      %p41 = scmp.eq.s32.totalorder %s25, 1
      %p42 = por %p40, %p41
      %p43 = scmp.ne.s32.totalorder %s35, %s38
      %p44 = scmp.eq.s32.totalorder %s25, 0
      %p45 = por %p43, %p44
      %p46 = scmp.ne.s32.totalorder %s35, %s38
      %p47 = scmp.eq.s32.totalorder %s30, 1
      %p48 = por %p46, %p47
      %p49 = scmp.ne.s32.totalorder %s38, %s39
      %p50 = scmp.eq.s32.totalorder %s30, 0
      %p51 = por %p49, %p50
      %p52 = scmp.ne.s32.totalorder %s38, %s39
      %p53 = scmp.eq.s32.totalorder %s31, 1
      %p54 = por %p52, %p53
      %p56 = scmp.ne.s32.totalorder %s39, %s55
      %p57 = scmp.eq.s32.totalorder %s31, 0
      %p58 = por %p56, %p57
      %s60 = sadd.s32 %s59, 1
      %p63 = scmp.eq.s32.totalorder %s25, 1
      %p64 = scmp.ne.s32.totalorder %s59, %s61
      %p65 = scmp.eq.s32.totalorder %s25, 0
      %p66 = por %p64, %p65
      %p67 = scmp.ne.s32.totalorder %s59, %s61
      %p68 = scmp.eq.s32.totalorder %s30, 1
      %p69 = por %p67, %p68
      %p70 = scmp.ne.s32.totalorder %s61, %s62
      %p71 = scmp.eq.s32.totalorder %s30, 0
      %p72 = por %p70, %p71
      %p73 = scmp.ne.s32.totalorder %s61, %s62
      %p74 = scmp.eq.s32.totalorder %s31, 1
      %p75 = por %p73, %p74
      %p77 = scmp.ne.s32.totalorder %s62, %s76
      %p78 = scmp.eq.s32.totalorder %s31, 0
      %p79 = por %p77, %p78
      %s81 = sadd.s32 %s80, 1
      %p84 = scmp.eq.s32.totalorder %s25, 1
      %p85 = scmp.ne.s32.totalorder %s80, %s82
      %p86 = scmp.eq.s32.totalorder %s25, 0
      %p87 = por %p85, %p86
      %p88 = scmp.ne.s32.totalorder %s80, %s82
      %p89 = scmp.eq.s32.totalorder %s30, 1
      %p90 = por %p88, %p89
      %p91 = scmp.ne.s32.totalorder %s82, %s83
      %p92 = scmp.eq.s32.totalorder %s30, 0
      %p93 = por %p91, %p92
      %p94 = scmp.ne.s32.totalorder %s82, %s83
      %p95 = scmp.eq.s32.totalorder %s31, 1
      %p96 = por %p94, %p95
      %p98 = scmp.ne.s32.totalorder %s83, %s97
      %p99 = scmp.eq.s32.totalorder %s31, 0
      %p100 = por %p98, %p99
      %s102 = sadd.s32 %s101, 1
      %p105 = scmp.eq.s32.totalorder %s25, 1
      %p106 = scmp.ne.s32.totalorder %s101, %s103
      %p107 = scmp.eq.s32.totalorder %s25, 0
      %p108 = por %p106, %p107
      %p109 = scmp.ne.s32.totalorder %s101, %s103
      %p110 = scmp.eq.s32.totalorder %s30, 1
      %p111 = por %p109, %p110
      %p112 = scmp.ne.s32.totalorder %s103, %s104
      %p113 = scmp.eq.s32.totalorder %s30, 0
      %p114 = por %p112, %p113
      %p115 = scmp.ne.s32.totalorder %s103, %s104
      %p116 = scmp.eq.s32.totalorder %s31, 1
      %p117 = por %p115, %p116
      %p119 = scmp.ne.s32.totalorder %s104, %s118
      %p120 = scmp.eq.s32.totalorder %s31, 0
      %p121 = por %p119, %p120
      %s123 = sadd.s32 %s122, 1
      %p126 = scmp.eq.s32.totalorder %s25, 1
      %p127 = scmp.ne.s32.totalorder %s122, %s124
      %p128 = scmp.eq.s32.totalorder %s25, 0
      %p129 = por %p127, %p128
      %p130 = scmp.ne.s32.totalorder %s122, %s124
      %p131 = scmp.eq.s32.totalorder %s30, 1
      %p132 = por %p130, %p131
      %p133 = scmp.ne.s32.totalorder %s124, %s125
      %p134 = scmp.eq.s32.totalorder %s30, 0
      %p135 = por %p133, %p134
      %p136 = scmp.ne.s32.totalorder %s124, %s125
      %p137 = scmp.eq.s32.totalorder %s31, 1
      %p138 = por %p136, %p137
      %p140 = scmp.ne.s32.totalorder %s125, %s139
      %p141 = scmp.eq.s32.totalorder %s31, 0
      %p142 = por %p140, %p141
      %s144 = sadd.s32 %s143, 1
      %p147 = scmp.eq.s32.totalorder %s25, 1
      %p148 = scmp.ne.s32.totalorder %s143, %s145
      %p149 = scmp.eq.s32.totalorder %s25, 0
      %p150 = por %p148, %p149
      %p151 = scmp.ne.s32.totalorder %s143, %s145
      %p152 = scmp.eq.s32.totalorder %s30, 1
      %p153 = por %p151, %p152
      %p154 = scmp.ne.s32.totalorder %s145, %s146
      %p155 = scmp.eq.s32.totalorder %s30, 0
      %p156 = por %p154, %p155
      %p157 = scmp.ne.s32.totalorder %s145, %s146
      %p158 = scmp.eq.s32.totalorder %s31, 1
      %p159 = por %p157, %p158
      %p161 = scmp.ne.s32.totalorder %s146, %s160
      %p162 = scmp.eq.s32.totalorder %s31, 0
      %p163 = por %p161, %p162
      %s165 = sadd.s32 %s164, 1
      %p168 = scmp.eq.s32.totalorder %s25, 1
      %p169 = scmp.ne.s32.totalorder %s164, %s166
      %p170 = scmp.eq.s32.totalorder %s25, 0
      %p171 = por %p169, %p170
      %p172 = scmp.ne.s32.totalorder %s164, %s166
      %p173 = scmp.eq.s32.totalorder %s30, 1
      %p174 = por %p172, %p173
      %p175 = scmp.ne.s32.totalorder %s166, %s167
      %p176 = scmp.eq.s32.totalorder %s30, 0
      %p177 = por %p175, %p176
      %p178 = scmp.ne.s32.totalorder %s166, %s167
      %p179 = scmp.eq.s32.totalorder %s31, 1
      %p180 = por %p178, %p179
      %p182 = scmp.ne.s32.totalorder %s167, %s181
      %p183 = scmp.eq.s32.totalorder %s31, 0
      %p184 = por %p182, %p183
      %s186 = sadd.s32 %s185, 1
      %p189 = scmp.eq.s32.totalorder %s25, 1
      %p190 = scmp.ne.s32.totalorder %s185, %s187
      %p191 = scmp.eq.s32.totalorder %s25, 0
      %p192 = por %p190, %p191
      %p193 = scmp.ne.s32.totalorder %s185, %s187
      %p194 = scmp.eq.s32.totalorder %s30, 1
      %p195 = por %p193, %p194
      %p196 = scmp.ne.s32.totalorder %s187, %s188
      %p197 = scmp.eq.s32.totalorder %s30, 0
      %p198 = por %p196, %p197
      %p199 = scmp.ne.s32.totalorder %s187, %s188
      %p200 = scmp.eq.s32.totalorder %s31, 1
      %p201 = por %p199, %p200
      %p203 = scmp.ne.s32.totalorder %s188, %s202
      %p204 = scmp.eq.s32.totalorder %s31, 0
      %p205 = por %p203, %p204
      %s207 = sadd.s32 %s206, 1
      %p210 = scmp.eq.s32.totalorder %s25, 1
      %p211 = scmp.ne.s32.totalorder %s206, %s208
      %p212 = scmp.eq.s32.totalorder %s25, 0
      %p213 = por %p211, %p212
      %p214 = scmp.ne.s32.totalorder %s206, %s208
      %p215 = scmp.eq.s32.totalorder %s30, 1
      %p216 = por %p214, %p215
      %p217 = scmp.ne.s32.totalorder %s208, %s209
      %p218 = scmp.eq.s32.totalorder %s30, 0
      %p219 = por %p217, %p218
      %p220 = scmp.ne.s32.totalorder %s208, %s209
      %p221 = scmp.eq.s32.totalorder %s31, 1
      %p222 = por %p220, %p221
      %p224 = scmp.ne.s32.totalorder %s209, %s223
      %p225 = scmp.eq.s32.totalorder %s31, 0
      %p226 = por %p224, %p225
      %s228 = sadd.s32 %s227, 1
      %p231 = scmp.eq.s32.totalorder %s25, 1
      %p232 = scmp.ne.s32.totalorder %s227, %s229
      %p233 = scmp.eq.s32.totalorder %s25, 0
      %p234 = por %p232, %p233
      %p235 = scmp.ne.s32.totalorder %s227, %s229
      %p236 = scmp.eq.s32.totalorder %s30, 1
      %p237 = por %p235, %p236
      %p238 = scmp.ne.s32.totalorder %s229, %s230
      %p239 = scmp.eq.s32.totalorder %s30, 0
      %p240 = por %p238, %p239
      %p241 = scmp.ne.s32.totalorder %s229, %s230
      %p242 = scmp.eq.s32.totalorder %s31, 1
      %p243 = por %p241, %p242
      %p245 = scmp.ne.s32.totalorder %s230, %s244
      %p246 = scmp.eq.s32.totalorder %s31, 0
      %p247 = por %p245, %p246
      %s248 = ssub.s32 %s25, %s32
      %p249 = scmp.eq.s32.totalorder %s248, 0
      %s251 = sadd.s32 %s250, 1
      %s252 = scalar_select %p249, %s250, %s251
      %p255 = pneg %p249
      %p256 = scmp.eq.s32.totalorder %s25, 1
      %p257 = por %p255, %p256
      %p258 = scmp.ne.s32.totalorder %s250, %s253
      %p259 = scmp.eq.s32.totalorder %s25, 0
      %p260 = por %p258, %p259
      %p261 = scmp.ne.s32.totalorder %s250, %s253
      %p262 = scmp.eq.s32.totalorder %s30, 1
      %p263 = por %p261, %p262
      %p264 = scmp.ne.s32.totalorder %s253, %s254
      %p265 = scmp.eq.s32.totalorder %s30, 0
      %p266 = por %p264, %p265
      %p267 = scmp.ne.s32.totalorder %s253, %s254
      %p268 = scmp.eq.s32.totalorder %s31, 1
      %p269 = por %p267, %p268
      %p271 = scmp.ne.s32.totalorder %s254, %s270
      %p272 = scmp.eq.s32.totalorder %s31, 0
      %p273 = por %p271, %p272
      %p274 = scmp.le.s32.totalorder 1, %s25
      %p275 = scmp.lt.s32.totalorder %s25, 3
      %p276 = pnand %p274, %p275
      %p277 = pneg %p276
      // Predicated region
      $region9: #{tpu_custom_call.1} parent=5 // pred_check
        _
      $region10: #{tpu_custom_call.1} parent=5 // pred_check_branch
        %279 = sbr.rel (%p276) target = $region12
      $region11: #{tpu_custom_call.1} parent=5 // pred_region
        %s280 = ssub.s32 %s25, 1
        // Predicated region
        $region13: #{tpu_custom_call.1} parent=11 // pred_check
          %p281 = pneg %p72
        $region14: #{tpu_custom_call.1} parent=11 // pred_check_branch
          %283 = sbr.rel (%p281) target = $region16
        $region15: #{tpu_custom_call.1} parent=11 // pred_region
          %285 = vsyncadd [#allocation6], 0
          %s286 = sshll.u32 %s1, 4
          %s287 = int_to_ptr.hbm [resolvable:$true] %s286
          %s288 = sshll.u32 [#allocation5], 4
          %s289 = int_to_ptr.vmem [resolvable:$true] %s288
          %294 = dma.hbm_to_vmem [thread:$0]  %s287, 192, %s289, [#allocation6], 64, 64, 4
        $region16: #{tpu_custom_call.1} parent=11 // pred_fallthru
          _
        // Predicated region
        $region17: #{tpu_custom_call.1} parent=11 // pred_check
          %p295 = pneg %p93
        $region18: #{tpu_custom_call.1} parent=11 // pred_check_branch
          %297 = sbr.rel (%p295) target = $region20
        $region19: #{tpu_custom_call.1} parent=11 // pred_region
          %299 = vsyncadd [#allocation6], 0
          %s300 = sshll.u32 %s2, 4
          %s301 = int_to_ptr.hbm [resolvable:$true] %s300
          %s302 = sshll.u32 [#allocation7], 4
          %s303 = int_to_ptr.vmem [resolvable:$true] %s302
          %308 = dma.hbm_to_vmem [thread:$0]  %s301, 1024, %s303, [#allocation6], 64, 64, 4
        $region20: #{tpu_custom_call.1} parent=11 // pred_fallthru
          _
        // Predicated region
        $region21: #{tpu_custom_call.1} parent=11 // pred_check
          %p309 = pneg %p114
        $region22: #{tpu_custom_call.1} parent=11 // pred_check_branch
          %311 = sbr.rel (%p309) target = $region24
        $region23: #{tpu_custom_call.1} parent=11 // pred_region
          _
        $region24: #{tpu_custom_call.1} parent=11 // pred_fallthru
          _
        // Predicated region
        $region25: #{tpu_custom_call.1} parent=11 // pred_check
          %p312 = pneg %p135
        $region26: #{tpu_custom_call.1} parent=11 // pred_check_branch
          %314 = sbr.rel (%p312) target = $region28
        $region27: #{tpu_custom_call.1} parent=11 // pred_region
          %316 = vsyncadd [#allocation9], 0
          %s317 = sshll.u32 %s4, 4
          %s318 = int_to_ptr.hbm [resolvable:$true] %s317
          %s319 = sshll.u32 [#allocation8], 4
          %s320 = int_to_ptr.vmem [resolvable:$true] %s319
          %325 = dma.hbm_to_vmem [thread:$0]  %s318, 192, %s320, [#allocation9], 64, 64, 4
        $region28: #{tpu_custom_call.1} parent=11 // pred_fallthru
          _
        // Predicated region
        $region29: #{tpu_custom_call.1} parent=11 // pred_check
          %p326 = pneg %p156
        $region30: #{tpu_custom_call.1} parent=11 // pred_check_branch
          %328 = sbr.rel (%p326) target = $region32
        $region31: #{tpu_custom_call.1} parent=11 // pred_region
          %330 = vsyncadd [#allocation9], 0
          %s331 = sshll.u32 %s5, 4
          %s332 = int_to_ptr.hbm [resolvable:$true] %s331
          %s333 = sshll.u32 [#allocation10], 4
          %s334 = int_to_ptr.vmem [resolvable:$true] %s333
          %339 = dma.hbm_to_vmem [thread:$0]  %s332, 1024, %s334, [#allocation9], 64, 64, 4
        $region32: #{tpu_custom_call.1} parent=11 // pred_fallthru
          _
        // Predicated region
        $region33: #{tpu_custom_call.1} parent=11 // pred_check
          %p340 = pneg %p177
        $region34: #{tpu_custom_call.1} parent=11 // pred_check_branch
          %342 = sbr.rel (%p340) target = $region36
        $region35: #{tpu_custom_call.1} parent=11 // pred_region
          _
        $region36: #{tpu_custom_call.1} parent=11 // pred_fallthru
          _
        // Predicated region
        $region37: #{tpu_custom_call.1} parent=11 // pred_check
          %p343 = pneg %p198
        $region38: #{tpu_custom_call.1} parent=11 // pred_check_branch
          %345 = sbr.rel (%p343) target = $region40
        $region39: #{tpu_custom_call.1} parent=11 // pred_region
          %347 = vsyncadd [#allocation12], 0
          %s348 = sshll.u32 %s7, 4
          %s349 = int_to_ptr.hbm [resolvable:$true] %s348
          %s350 = sshll.u32 [#allocation11], 4
          %s351 = int_to_ptr.vmem [resolvable:$true] %s350
          %356 = dma.hbm_to_vmem [thread:$0]  %s349, 192, %s351, [#allocation12], 64, 64, 4
        $region40: #{tpu_custom_call.1} parent=11 // pred_fallthru
          _
        // Predicated region
        $region41: #{tpu_custom_call.1} parent=11 // pred_check
          %p357 = pneg %p219
        $region42: #{tpu_custom_call.1} parent=11 // pred_check_branch
          %359 = sbr.rel (%p357) target = $region44
        $region43: #{tpu_custom_call.1} parent=11 // pred_region
          %361 = vsyncadd [#allocation12], 0
          %s362 = sshll.u32 %s8, 4
          %s363 = int_to_ptr.hbm [resolvable:$true] %s362
          %s364 = sshll.u32 [#allocation13], 4
          %s365 = int_to_ptr.vmem [resolvable:$true] %s364
          %370 = dma.hbm_to_vmem [thread:$0]  %s363, 2048, %s365, [#allocation12], 64, 64, 4
        $region44: #{tpu_custom_call.1} parent=11 // pred_fallthru
          _
        // Predicated region
        $region45: #{tpu_custom_call.1} parent=11 // pred_check
          %p371 = pneg %p240
        $region46: #{tpu_custom_call.1} parent=11 // pred_check_branch
          %373 = sbr.rel (%p371) target = $region48
        $region47: #{tpu_custom_call.1} parent=11 // pred_region
          _
        $region48: #{tpu_custom_call.1} parent=11 // pred_fallthru
          _
      $region12: #{tpu_custom_call.1} parent=5 // pred_fallthru
        _
      %p374 = scmp.lt.s32.totalorder %s25, 2
      // Predicated region
      $region49: #{tpu_custom_call.1} parent=5 // pred_check
        %p375 = pneg %p374
      $region50: #{tpu_custom_call.1} parent=5 // pred_check_branch
        %377 = sbr.rel (%p375) target = $region52
      $region51: #{tpu_custom_call.1} parent=5 // pred_region
        // Predicated region
        $region53: #{tpu_custom_call.1} parent=51 // pred_check
          %p378 = pneg %p45
        $region54: #{tpu_custom_call.1} parent=51 // pred_check_branch
          %380 = sbr.rel (%p378) target = $region56
        $region55: #{tpu_custom_call.1} parent=51 // pred_region
          %s381 = sand.u32 %s35, 1
          %s382 = scalar_lea.sflag [#allocation3], %s381
          %s383 = sand.u32 %s35, 1
          %s384 = smul.addr %s383, 256
          %s385 = scalar_lea.vmem [#allocation2], %s384
          %387 = vsyncadd %s382, 0
          %s388 = smul.addr %s25, 32
          %s389 = smul.addr %s388, 8
          %s390 = scalar_lea.hbm %s0, %s389
          %s391 = sshll.u32 %s390, 4
          %s392 = int_to_ptr.hbm [resolvable:$true] %s391
          %s393 = sshll.u32 %s385, 4
          %s394 = int_to_ptr.vmem [resolvable:$true] %s393
          %399 = dma.hbm_to_vmem [thread:$0]  %s392, 4096, %s394, %s382, 128, 128, 8
        $region56: #{tpu_custom_call.1} parent=51 // pred_fallthru
          _
      $region52: #{tpu_custom_call.1} parent=5 // pred_fallthru
        _
      %p400 = scmp.le.s32.totalorder 1, %s25
      %p401 = scmp.lt.s32.totalorder %s25, 3
      %p402 = pnand %p400, %p401
      %p403 = pneg %p402
      // Predicated region
      $region57: #{tpu_custom_call.1} parent=5 // pred_check
        _
      $region58: #{tpu_custom_call.1} parent=5 // pred_check_branch
        %405 = sbr.rel (%p402) target = $region60
      $region59: #{tpu_custom_call.1} parent=5 // pred_region
        %s406 = ssub.s32 %s25, 1
        %s407 = sand.u32 %s38, 1
        %s408 = scalar_lea.sflag [#allocation3], %s407
        %s409 = sand.u32 %s38, 1
        %s410 = smul.addr %s409, 256
        %s411 = scalar_lea.vmem [#allocation2], %s410
        // Predicated region
        $region61: #{tpu_custom_call.1} parent=59 // pred_check
          %p412 = pneg %p51
        $region62: #{tpu_custom_call.1} parent=59 // pred_check_branch
          %414 = sbr.rel (%p412) target = $region64
        $region63: #{tpu_custom_call.1} parent=59 // pred_region
          %416 = dma.done %s408, 4096
        $region64: #{tpu_custom_call.1} parent=59 // pred_fallthru
          _
        // Predicated region
        $region65: #{tpu_custom_call.1} parent=59 // pred_check
          %p417 = pneg %p72
        $region66: #{tpu_custom_call.1} parent=59 // pred_check_branch
          %419 = sbr.rel (%p417) target = $region68
        $region67: #{tpu_custom_call.1} parent=59 // pred_region
          %421 = dma.done [#allocation6], 192
        $region68: #{tpu_custom_call.1} parent=59 // pred_fallthru
          _
        // Predicated region
        $region69: #{tpu_custom_call.1} parent=59 // pred_check
          %p422 = pneg %p93
        $region70: #{tpu_custom_call.1} parent=59 // pred_check_branch
          %424 = sbr.rel (%p422) target = $region72
        $region71: #{tpu_custom_call.1} parent=59 // pred_region
          %426 = dma.done [#allocation6], 1024
        $region72: #{tpu_custom_call.1} parent=59 // pred_fallthru
          _
        // Predicated region
        $region73: #{tpu_custom_call.1} parent=59 // pred_check
          %p427 = pneg %p135
        $region74: #{tpu_custom_call.1} parent=59 // pred_check_branch
          %429 = sbr.rel (%p427) target = $region76
        $region75: #{tpu_custom_call.1} parent=59 // pred_region
          %431 = dma.done [#allocation9], 192
        $region76: #{tpu_custom_call.1} parent=59 // pred_fallthru
          _
        // Predicated region
        $region77: #{tpu_custom_call.1} parent=59 // pred_check
          %p432 = pneg %p156
        $region78: #{tpu_custom_call.1} parent=59 // pred_check_branch
          %434 = sbr.rel (%p432) target = $region80
        $region79: #{tpu_custom_call.1} parent=59 // pred_region
          %436 = dma.done [#allocation9], 1024
        $region80: #{tpu_custom_call.1} parent=59 // pred_fallthru
          _
        // Predicated region
        $region81: #{tpu_custom_call.1} parent=59 // pred_check
          %p437 = pneg %p198
        $region82: #{tpu_custom_call.1} parent=59 // pred_check_branch
          %439 = sbr.rel (%p437) target = $region84
        $region83: #{tpu_custom_call.1} parent=59 // pred_region
          %441 = dma.done [#allocation12], 192
        $region84: #{tpu_custom_call.1} parent=59 // pred_fallthru
          _
        // Predicated region
        $region85: #{tpu_custom_call.1} parent=59 // pred_check
          %p442 = pneg %p219
        $region86: #{tpu_custom_call.1} parent=59 // pred_check_branch
          %444 = sbr.rel (%p442) target = $region88
        $region87: #{tpu_custom_call.1} parent=59 // pred_region
          %446 = dma.done [#allocation12], 2048
        $region88: #{tpu_custom_call.1} parent=59 // pred_fallthru
          _
        %s447 = sand.u32 %s38, 1
        %s448 = scalar_lea.sflag [#allocation3], %s447
        %s449 = sand.u32 %s38, 1
        %s450 = smul.addr %s449, 256
        %s451 = scalar_lea.vmem [#allocation2], %s450
        %p452 = pneg %p51
        %p453 = pneg %p48
        %p454 = pneg %p72
        %p455 = pneg %p69
        %p456 = pneg %p93
        %p457 = pneg %p90
        %p458 = pneg %p114
        %p459 = pneg %p111
        %p460 = pneg %p135
        %p461 = pneg %p132
        %p462 = pneg %p156
        %p463 = pneg %p153
        %p464 = pneg %p177
        %p465 = pneg %p174
        %p466 = pneg %p198
        %p467 = pneg %p195
        %p468 = pneg %p219
        %p469 = pneg %p216
        %p470 = pneg %p240
        %p471 = pneg %p237
        %p472 = pneg %p266
        %p473 = pneg %p263
        %s474 = sand.u32 %s253, 1
        %s475 = scalar_lea.sflag [#allocation4], %s474
        %s476 = sand.u32 %s253, 1
        %s477 = smul.addr %s476, 256
        %s478 = scalar_lea.vmem [#allocation14], %s477
        %v479 = vld [vmem:[%s411] sm:$0xff]
        %v480 = vld [vmem:[%s411 + $0x8] sm:$0xff]
        %v481 = vld [vmem:[%s411 + $0x10] sm:$0xff]
        %v482 = vld [vmem:[%s411 + $0x18] sm:$0xff]
        %v483 = vld [vmem:[%s411 + $0x20] sm:$0xff]
        %v484 = vld [vmem:[%s411 + $0x28] sm:$0xff]
        %v485 = vld [vmem:[%s411 + $0x30] sm:$0xff]
        %v486 = vld [vmem:[%s411 + $0x38] sm:$0xff]
        %v487 = vld [vmem:[%s411 + $0x40] sm:$0xff]
        %v488 = vld [vmem:[%s411 + $0x48] sm:$0xff]
        %v489 = vld [vmem:[%s411 + $0x50] sm:$0xff]
        %v490 = vld [vmem:[%s411 + $0x58] sm:$0xff]
        %v491 = vld [vmem:[%s411 + $0x60] sm:$0xff]
        %v492 = vld [vmem:[%s411 + $0x68] sm:$0xff]
        %v493 = vld [vmem:[%s411 + $0x70] sm:$0xff]
        %v494 = vld [vmem:[%s411 + $0x78] sm:$0xff]
        %v495 = vld [vmem:[%s411 + $0x80] sm:$0xff]
        %v496 = vld [vmem:[%s411 + $0x88] sm:$0xff]
        %v497 = vld [vmem:[%s411 + $0x90] sm:$0xff]
        %v498 = vld [vmem:[%s411 + $0x98] sm:$0xff]
        %v499 = vld [vmem:[%s411 + $0xa0] sm:$0xff]
        %v500 = vld [vmem:[%s411 + $0xa8] sm:$0xff]
        %v501 = vld [vmem:[%s411 + $0xb0] sm:$0xff]
        %v502 = vld [vmem:[%s411 + $0xb8] sm:$0xff]
        %v503 = vld [vmem:[%s411 + $0xc0] sm:$0xff]
        %v504 = vld [vmem:[%s411 + $0xc8] sm:$0xff]
        %v505 = vld [vmem:[%s411 + $0xd0] sm:$0xff]
        %v506 = vld [vmem:[%s411 + $0xd8] sm:$0xff]
        %v507 = vld [vmem:[%s411 + $0xe0] sm:$0xff]
        %v508 = vld [vmem:[%s411 + $0xe8] sm:$0xff]
        %v509 = vld [vmem:[%s411 + $0xf0] sm:$0xff]
        %v510 = vld [vmem:[%s411 + $0xf8] sm:$0xff]
        %v511 = vlaneseq
        %v512 = vshrl.u32 %v511, 7
        %v513 = vadd.s32 %v512, 8
        %vm514 = vcmp.ge.s32.totalorder %v512, 1
        %vm515 = vcmp.ge.s32.totalorder %v513, 1
        %v516 = vsel %vm514, 1.0, 0.0
        %v517 = vsel %vm515, 1.0, 0.0
        %vm518 = vcmp.lt.s32.totalorder %v512, 15
        %vm519 = vcmp.lt.s32.totalorder %v513, 15
        %v520 = vsel %vm518, 1.0, 0.0
        %v521 = vsel %vm519, 1.0, 0.0
        %v522 = vmax.f32 %v479, 0.0
        %v523 = vmax.f32 %v480, 0.0
        %v524 = vmax.f32 %v481, 0.0
        %v525 = vmax.f32 %v482, 0.0
        %v526 = vmax.f32 %v483, 0.0
        %v527 = vmax.f32 %v484, 0.0
        %v528 = vmax.f32 %v485, 0.0
        %v529 = vmax.f32 %v486, 0.0
        %v530 = vmax.f32 %v487, 0.0
        %v531 = vmax.f32 %v488, 0.0
        %v532 = vmax.f32 %v489, 0.0
        %v533 = vmax.f32 %v490, 0.0
        %v534 = vmax.f32 %v491, 0.0
        %v535 = vmax.f32 %v492, 0.0
        %v536 = vmax.f32 %v493, 0.0
        %v537 = vmax.f32 %v494, 0.0
        %v538 = vmax.f32 %v495, 0.0
        %v539 = vmax.f32 %v496, 0.0
        %v540 = vmax.f32 %v497, 0.0
        %v541 = vmax.f32 %v498, 0.0
        %v542 = vmax.f32 %v499, 0.0
        %v543 = vmax.f32 %v500, 0.0
        %v544 = vmax.f32 %v501, 0.0
        %v545 = vmax.f32 %v502, 0.0
        %v546 = vmax.f32 %v503, 0.0
        %v547 = vmax.f32 %v504, 0.0
        %v548 = vmax.f32 %v505, 0.0
        %v549 = vmax.f32 %v506, 0.0
        %v550 = vmax.f32 %v507, 0.0
        %v551 = vmax.f32 %v508, 0.0
        %v552 = vmax.f32 %v509, 0.0
        %v553 = vmax.f32 %v510, 0.0
        %v554 = vld [vmem:[#allocation5] sm:$0x7]
        %v555 = vld [vmem:[#allocation5 + $0x4] sm:$0x7]
        %v556 = vld [vmem:[#allocation5 + $0x8] sm:$0x7]
        %v557 = vrot.slane %v522, 7
        %v558 = vrot.slane %v524, 7
        %v559 = vrot.slane %v526, 7
        %v560 = vrot.slane %v528, 7
        %v561 = vrot.slane %v530, 7
        %v562 = vrot.slane %v532, 7
        %v563 = vrot.slane %v534, 7
        %v564 = vrot.slane %v536, 7
        %v565 = vrot.slane %v538, 7
        %v566 = vrot.slane %v540, 7
        %v567 = vrot.slane %v542, 7
        %v568 = vrot.slane %v544, 7
        %v569 = vrot.slane %v546, 7
        %v570 = vrot.slane %v548, 7
        %v571 = vrot.slane %v550, 7
        %v572 = vrot.slane %v552, 7
        %v573 = vrot.slane %v523, 7
        %v574 = vrot.slane %v525, 7
        %v575 = vrot.slane %v527, 7
        %v576 = vrot.slane %v529, 7
        %v577 = vrot.slane %v531, 7
        %v578 = vrot.slane %v533, 7
        %v579 = vrot.slane %v535, 7
        %v580 = vrot.slane %v537, 7
        %v581 = vrot.slane %v539, 7
        %v582 = vrot.slane %v541, 7
        %v583 = vrot.slane %v543, 7
        %v584 = vrot.slane %v545, 7
        %v585 = vrot.slane %v547, 7
        %v586 = vrot.slane %v549, 7
        %v587 = vrot.slane %v551, 7
        %v588 = vrot.slane %v553, 7
        %vm589 = vcmp.lt.s32.totalorder %v512, 1
        %v590 = vsel %vm589, %v557, %v573
        %v591 = vsel %vm589, %v558, %v574
        %v592 = vsel %vm589, %v559, %v575
        %v593 = vsel %vm589, %v560, %v576
        %v594 = vsel %vm589, %v561, %v577
        %v595 = vsel %vm589, %v562, %v578
        %v596 = vsel %vm589, %v563, %v579
        %v597 = vsel %vm589, %v564, %v580
        %v598 = vsel %vm589, %v565, %v581
        %v599 = vsel %vm589, %v566, %v582
        %v600 = vsel %vm589, %v567, %v583
        %v601 = vsel %vm589, %v568, %v584
        %v602 = vsel %vm589, %v569, %v585
        %v603 = vsel %vm589, %v570, %v586
        %v604 = vsel %vm589, %v571, %v587
        %v605 = vsel %vm589, %v572, %v588
        %v606 = vsel %vm589, %v573, %v557
        %v607 = vsel %vm589, %v574, %v558
        %v608 = vsel %vm589, %v575, %v559
        %v609 = vsel %vm589, %v576, %v560
        %v610 = vsel %vm589, %v577, %v561
        %v611 = vsel %vm589, %v578, %v562
        %v612 = vsel %vm589, %v579, %v563
        %v613 = vsel %vm589, %v580, %v564
        %v614 = vsel %vm589, %v581, %v565
        %v615 = vsel %vm589, %v582, %v566
        %v616 = vsel %vm589, %v583, %v567
        %v617 = vsel %vm589, %v584, %v568
        %v618 = vsel %vm589, %v585, %v569
        %v619 = vsel %vm589, %v586, %v570
        %v620 = vsel %vm589, %v587, %v571
        %v621 = vsel %vm589, %v588, %v572
        %v622 = vmul.f32 %v606, %v516
        %v623 = vmul.f32 %v590, %v517
        %v624 = vmul.f32 %v607, %v516
        %v625 = vmul.f32 %v591, %v517
        %v626 = vmul.f32 %v608, %v516
        %v627 = vmul.f32 %v592, %v517
        %v628 = vmul.f32 %v609, %v516
        %v629 = vmul.f32 %v593, %v517
        %v630 = vmul.f32 %v610, %v516
        %v631 = vmul.f32 %v594, %v517
        %v632 = vmul.f32 %v611, %v516
        %v633 = vmul.f32 %v595, %v517
        %v634 = vmul.f32 %v612, %v516
        %v635 = vmul.f32 %v596, %v517
        %v636 = vmul.f32 %v613, %v516
        %v637 = vmul.f32 %v597, %v517
        %v638 = vmul.f32 %v614, %v516
        %v639 = vmul.f32 %v598, %v517
        %v640 = vmul.f32 %v615, %v516
        %v641 = vmul.f32 %v599, %v517
        %v642 = vmul.f32 %v616, %v516
        %v643 = vmul.f32 %v600, %v517
        %v644 = vmul.f32 %v617, %v516
        %v645 = vmul.f32 %v601, %v517
        %v646 = vmul.f32 %v618, %v516
        %v647 = vmul.f32 %v602, %v517
        %v648 = vmul.f32 %v619, %v516
        %v649 = vmul.f32 %v603, %v517
        %v650 = vmul.f32 %v620, %v516
        %v651 = vmul.f32 %v604, %v517
        %v652 = vmul.f32 %v621, %v516
        %v653 = vmul.f32 %v605, %v517
        %v654 = vrot.slane %v522, 1
        %v655 = vrot.slane %v524, 1
        %v656 = vrot.slane %v526, 1
        %v657 = vrot.slane %v528, 1
        %v658 = vrot.slane %v530, 1
        %v659 = vrot.slane %v532, 1
        %v660 = vrot.slane %v534, 1
        %v661 = vrot.slane %v536, 1
        %v662 = vrot.slane %v538, 1
        %v663 = vrot.slane %v540, 1
        %v664 = vrot.slane %v542, 1
        %v665 = vrot.slane %v544, 1
        %v666 = vrot.slane %v546, 1
        %v667 = vrot.slane %v548, 1
        %v668 = vrot.slane %v550, 1
        %v669 = vrot.slane %v552, 1
        %v670 = vrot.slane %v523, 1
        %v671 = vrot.slane %v525, 1
        %v672 = vrot.slane %v527, 1
        %v673 = vrot.slane %v529, 1
        %v674 = vrot.slane %v531, 1
        %v675 = vrot.slane %v533, 1
        %v676 = vrot.slane %v535, 1
        %v677 = vrot.slane %v537, 1
        %v678 = vrot.slane %v539, 1
        %v679 = vrot.slane %v541, 1
        %v680 = vrot.slane %v543, 1
        %v681 = vrot.slane %v545, 1
        %v682 = vrot.slane %v547, 1
        %v683 = vrot.slane %v549, 1
        %v684 = vrot.slane %v551, 1
        %v685 = vrot.slane %v553, 1
        %vm686 = vcmp.lt.s32.totalorder %v512, 7
        %v687 = vsel %vm686, %v654, %v670
        %v688 = vsel %vm686, %v655, %v671
        %v689 = vsel %vm686, %v656, %v672
        %v690 = vsel %vm686, %v657, %v673
        %v691 = vsel %vm686, %v658, %v674
        %v692 = vsel %vm686, %v659, %v675
        %v693 = vsel %vm686, %v660, %v676
        %v694 = vsel %vm686, %v661, %v677
        %v695 = vsel %vm686, %v662, %v678
        %v696 = vsel %vm686, %v663, %v679
        %v697 = vsel %vm686, %v664, %v680
        %v698 = vsel %vm686, %v665, %v681
        %v699 = vsel %vm686, %v666, %v682
        %v700 = vsel %vm686, %v667, %v683
        %v701 = vsel %vm686, %v668, %v684
        %v702 = vsel %vm686, %v669, %v685
        %v703 = vsel %vm686, %v670, %v654
        %v704 = vsel %vm686, %v671, %v655
        %v705 = vsel %vm686, %v672, %v656
        %v706 = vsel %vm686, %v673, %v657
        %v707 = vsel %vm686, %v674, %v658
        %v708 = vsel %vm686, %v675, %v659
        %v709 = vsel %vm686, %v676, %v660
        %v710 = vsel %vm686, %v677, %v661
        %v711 = vsel %vm686, %v678, %v662
        %v712 = vsel %vm686, %v679, %v663
        %v713 = vsel %vm686, %v680, %v664
        %v714 = vsel %vm686, %v681, %v665
        %v715 = vsel %vm686, %v682, %v666
        %v716 = vsel %vm686, %v683, %v667
        %v717 = vsel %vm686, %v684, %v668
        %v718 = vsel %vm686, %v685, %v669
        %v719 = vmul.f32 %v687, %v520
        %v720 = vmul.f32 %v703, %v521
        %v721 = vmul.f32 %v688, %v520
        %v722 = vmul.f32 %v704, %v521
        %v723 = vmul.f32 %v689, %v520
        %v724 = vmul.f32 %v705, %v521
        %v725 = vmul.f32 %v690, %v520
        %v726 = vmul.f32 %v706, %v521
        %v727 = vmul.f32 %v691, %v520
        %v728 = vmul.f32 %v707, %v521
        %v729 = vmul.f32 %v692, %v520
        %v730 = vmul.f32 %v708, %v521
        %v731 = vmul.f32 %v693, %v520
        %v732 = vmul.f32 %v709, %v521
        %v733 = vmul.f32 %v694, %v520
        %v734 = vmul.f32 %v710, %v521
        %v735 = vmul.f32 %v695, %v520
        %v736 = vmul.f32 %v711, %v521
        %v737 = vmul.f32 %v696, %v520
        %v738 = vmul.f32 %v712, %v521
        %v739 = vmul.f32 %v697, %v520
        %v740 = vmul.f32 %v713, %v521
        %v741 = vmul.f32 %v698, %v520
        %v742 = vmul.f32 %v714, %v521
        %v743 = vmul.f32 %v699, %v520
        %v744 = vmul.f32 %v715, %v521
        %v745 = vmul.f32 %v700, %v520
        %v746 = vmul.f32 %v716, %v521
        %v747 = vmul.f32 %v701, %v520
        %v748 = vmul.f32 %v717, %v521
        %v749 = vmul.f32 %v702, %v520
        %v750 = vmul.f32 %v718, %v521
        %v751 = vperm.slane %v554, 0
        %v752 = vmul.f32 %v751, 0.0
        %v753 = vmul.f32 %v622, %v751
        %v754 = vmul.f32 %v623, %v751
        %v755 = vmul.f32 %v624, %v751
        %v756 = vmul.f32 %v625, %v751
        %v757 = vmul.f32 %v626, %v751
        %v758 = vmul.f32 %v627, %v751
        %v759 = vmul.f32 %v628, %v751
        %v760 = vmul.f32 %v629, %v751
        %v761 = vmul.f32 %v630, %v751
        %v762 = vmul.f32 %v631, %v751
        %v763 = vmul.f32 %v632, %v751
        %v764 = vmul.f32 %v633, %v751
        %v765 = vmul.f32 %v634, %v751
        %v766 = vmul.f32 %v635, %v751
        %v767 = vmul.f32 %v636, %v751
        %v768 = vmul.f32 %v637, %v751
        %v769 = vmul.f32 %v638, %v751
        %v770 = vmul.f32 %v639, %v751
        %v771 = vmul.f32 %v640, %v751
        %v772 = vmul.f32 %v641, %v751
        %v773 = vmul.f32 %v642, %v751
        %v774 = vmul.f32 %v643, %v751
        %v775 = vmul.f32 %v644, %v751
        %v776 = vmul.f32 %v645, %v751
        %v777 = vmul.f32 %v646, %v751
        %v778 = vmul.f32 %v647, %v751
        %v779 = vmul.f32 %v648, %v751
        %v780 = vmul.f32 %v649, %v751
        %v781 = vmul.f32 %v650, %v751
        %v782 = vmul.f32 %v651, %v751
        %v783 = vperm.slane %v554, 1
        %v784 = vmul.f32 %v783, 0.0
        %v785 = vmul.f32 %v522, %v783
        %v786 = vmul.f32 %v523, %v783
        %v787 = vmul.f32 %v524, %v783
        %v788 = vmul.f32 %v525, %v783
        %v789 = vmul.f32 %v526, %v783
        %v790 = vmul.f32 %v527, %v783
        %v791 = vmul.f32 %v528, %v783
        %v792 = vmul.f32 %v529, %v783
        %v793 = vmul.f32 %v530, %v783
        %v794 = vmul.f32 %v531, %v783
        %v795 = vmul.f32 %v532, %v783
        %v796 = vmul.f32 %v533, %v783
        %v797 = vmul.f32 %v534, %v783
        %v798 = vmul.f32 %v535, %v783
        %v799 = vmul.f32 %v536, %v783
        %v800 = vmul.f32 %v537, %v783
        %v801 = vmul.f32 %v538, %v783
        %v802 = vmul.f32 %v539, %v783
        %v803 = vmul.f32 %v540, %v783
        %v804 = vmul.f32 %v541, %v783
        %v805 = vmul.f32 %v542, %v783
        %v806 = vmul.f32 %v543, %v783
        %v807 = vmul.f32 %v544, %v783
        %v808 = vmul.f32 %v545, %v783
        %v809 = vmul.f32 %v546, %v783
        %v810 = vmul.f32 %v547, %v783
        %v811 = vmul.f32 %v548, %v783
        %v812 = vmul.f32 %v549, %v783
        %v813 = vmul.f32 %v550, %v783
        %v814 = vmul.f32 %v551, %v783
        %v815 = vadd.f32 %v752, %v784
        %v816 = vadd.f32 %v753, %v785
        %v817 = vadd.f32 %v754, %v786
        %v818 = vadd.f32 %v755, %v787
        %v819 = vadd.f32 %v756, %v788
        %v820 = vadd.f32 %v757, %v789
        %v821 = vadd.f32 %v758, %v790
        %v822 = vadd.f32 %v759, %v791
        %v823 = vadd.f32 %v760, %v792
        %v824 = vadd.f32 %v761, %v793
        %v825 = vadd.f32 %v762, %v794
        %v826 = vadd.f32 %v763, %v795
        %v827 = vadd.f32 %v764, %v796
        %v828 = vadd.f32 %v765, %v797
        %v829 = vadd.f32 %v766, %v798
        %v830 = vadd.f32 %v767, %v799
        %v831 = vadd.f32 %v768, %v800
        %v832 = vadd.f32 %v769, %v801
        %v833 = vadd.f32 %v770, %v802
        %v834 = vadd.f32 %v771, %v803
        %v835 = vadd.f32 %v772, %v804
        %v836 = vadd.f32 %v773, %v805
        %v837 = vadd.f32 %v774, %v806
        %v838 = vadd.f32 %v775, %v807
        %v839 = vadd.f32 %v776, %v808
        %v840 = vadd.f32 %v777, %v809
        %v841 = vadd.f32 %v778, %v810
        %v842 = vadd.f32 %v779, %v811
        %v843 = vadd.f32 %v780, %v812
        %v844 = vadd.f32 %v781, %v813
        %v845 = vadd.f32 %v782, %v814
        %v846 = vperm.slane %v554, 2
        %v847 = vmul.f32 %v846, 0.0
        %v848 = vmul.f32 %v719, %v846
        %v849 = vmul.f32 %v720, %v846
        %v850 = vmul.f32 %v721, %v846
        %v851 = vmul.f32 %v722, %v846
        %v852 = vmul.f32 %v723, %v846
        %v853 = vmul.f32 %v724, %v846
        %v854 = vmul.f32 %v725, %v846
        %v855 = vmul.f32 %v726, %v846
        %v856 = vmul.f32 %v727, %v846
        %v857 = vmul.f32 %v728, %v846
        %v858 = vmul.f32 %v729, %v846
        %v859 = vmul.f32 %v730, %v846
        %v860 = vmul.f32 %v731, %v846
        %v861 = vmul.f32 %v732, %v846
        %v862 = vmul.f32 %v733, %v846
        %v863 = vmul.f32 %v734, %v846
        %v864 = vmul.f32 %v735, %v846
        %v865 = vmul.f32 %v736, %v846
        %v866 = vmul.f32 %v737, %v846
        %v867 = vmul.f32 %v738, %v846
        %v868 = vmul.f32 %v739, %v846
        %v869 = vmul.f32 %v740, %v846
        %v870 = vmul.f32 %v741, %v846
        %v871 = vmul.f32 %v742, %v846
        %v872 = vmul.f32 %v743, %v846
        %v873 = vmul.f32 %v744, %v846
        %v874 = vmul.f32 %v745, %v846
        %v875 = vmul.f32 %v746, %v846
        %v876 = vmul.f32 %v747, %v846
        %v877 = vmul.f32 %v748, %v846
        %v878 = vadd.f32 %v815, %v847
        %v879 = vadd.f32 %v816, %v848
        %v880 = vadd.f32 %v817, %v849
        %v881 = vadd.f32 %v818, %v850
        %v882 = vadd.f32 %v819, %v851
        %v883 = vadd.f32 %v820, %v852
        %v884 = vadd.f32 %v821, %v853
        %v885 = vadd.f32 %v822, %v854
        %v886 = vadd.f32 %v823, %v855
        %v887 = vadd.f32 %v824, %v856
        %v888 = vadd.f32 %v825, %v857
        %v889 = vadd.f32 %v826, %v858
        %v890 = vadd.f32 %v827, %v859
        %v891 = vadd.f32 %v828, %v860
        %v892 = vadd.f32 %v829, %v861
        %v893 = vadd.f32 %v830, %v862
        %v894 = vadd.f32 %v831, %v863
        %v895 = vadd.f32 %v832, %v864
        %v896 = vadd.f32 %v833, %v865
        %v897 = vadd.f32 %v834, %v866
        %v898 = vadd.f32 %v835, %v867
        %v899 = vadd.f32 %v836, %v868
        %v900 = vadd.f32 %v837, %v869
        %v901 = vadd.f32 %v838, %v870
        %v902 = vadd.f32 %v839, %v871
        %v903 = vadd.f32 %v840, %v872
        %v904 = vadd.f32 %v841, %v873
        %v905 = vadd.f32 %v842, %v874
        %v906 = vadd.f32 %v843, %v875
        %v907 = vadd.f32 %v844, %v876
        %v908 = vadd.f32 %v845, %v877
        %v909 = vperm.slane %v555, 0
        %v910 = vmul.f32 %v622, %v909
        %v911 = vmul.f32 %v623, %v909
        %v912 = vmul.f32 %v624, %v909
        %v913 = vmul.f32 %v625, %v909
        %v914 = vmul.f32 %v626, %v909
        %v915 = vmul.f32 %v627, %v909
        %v916 = vmul.f32 %v628, %v909
        %v917 = vmul.f32 %v629, %v909
        %v918 = vmul.f32 %v630, %v909
        %v919 = vmul.f32 %v631, %v909
        %v920 = vmul.f32 %v632, %v909
        %v921 = vmul.f32 %v633, %v909
        %v922 = vmul.f32 %v634, %v909
        %v923 = vmul.f32 %v635, %v909
        %v924 = vmul.f32 %v636, %v909
        %v925 = vmul.f32 %v637, %v909
        %v926 = vmul.f32 %v638, %v909
        %v927 = vmul.f32 %v639, %v909
        %v928 = vmul.f32 %v640, %v909
        %v929 = vmul.f32 %v641, %v909
        %v930 = vmul.f32 %v642, %v909
        %v931 = vmul.f32 %v643, %v909
        %v932 = vmul.f32 %v644, %v909
        %v933 = vmul.f32 %v645, %v909
        %v934 = vmul.f32 %v646, %v909
        %v935 = vmul.f32 %v647, %v909
        %v936 = vmul.f32 %v648, %v909
        %v937 = vmul.f32 %v649, %v909
        %v938 = vmul.f32 %v650, %v909
        %v939 = vmul.f32 %v651, %v909
        %v940 = vmul.f32 %v652, %v909
        %v941 = vmul.f32 %v653, %v909
        %v942 = vadd.f32 %v878, %v910
        %v943 = vadd.f32 %v878, %v911
        %v944 = vadd.f32 %v879, %v912
        %v945 = vadd.f32 %v880, %v913
        %v946 = vadd.f32 %v881, %v914
        %v947 = vadd.f32 %v882, %v915
        %v948 = vadd.f32 %v883, %v916
        %v949 = vadd.f32 %v884, %v917
        %v950 = vadd.f32 %v885, %v918
        %v951 = vadd.f32 %v886, %v919
        %v952 = vadd.f32 %v887, %v920
        %v953 = vadd.f32 %v888, %v921
        %v954 = vadd.f32 %v889, %v922
        %v955 = vadd.f32 %v890, %v923
        %v956 = vadd.f32 %v891, %v924
        %v957 = vadd.f32 %v892, %v925
        %v958 = vadd.f32 %v893, %v926
        %v959 = vadd.f32 %v894, %v927
        %v960 = vadd.f32 %v895, %v928
        %v961 = vadd.f32 %v896, %v929
        %v962 = vadd.f32 %v897, %v930
        %v963 = vadd.f32 %v898, %v931
        %v964 = vadd.f32 %v899, %v932
        %v965 = vadd.f32 %v900, %v933
        %v966 = vadd.f32 %v901, %v934
        %v967 = vadd.f32 %v902, %v935
        %v968 = vadd.f32 %v903, %v936
        %v969 = vadd.f32 %v904, %v937
        %v970 = vadd.f32 %v905, %v938
        %v971 = vadd.f32 %v906, %v939
        %v972 = vadd.f32 %v907, %v940
        %v973 = vadd.f32 %v908, %v941
        %v974 = vperm.slane %v555, 1
        %v975 = vmul.f32 %v522, %v974
        %v976 = vmul.f32 %v523, %v974
        %v977 = vmul.f32 %v524, %v974
        %v978 = vmul.f32 %v525, %v974
        %v979 = vmul.f32 %v526, %v974
        %v980 = vmul.f32 %v527, %v974
        %v981 = vmul.f32 %v528, %v974
        %v982 = vmul.f32 %v529, %v974
        %v983 = vmul.f32 %v530, %v974
        %v984 = vmul.f32 %v531, %v974
        %v985 = vmul.f32 %v532, %v974
        %v986 = vmul.f32 %v533, %v974
        %v987 = vmul.f32 %v534, %v974
        %v988 = vmul.f32 %v535, %v974
        %v989 = vmul.f32 %v536, %v974
        %v990 = vmul.f32 %v537, %v974
        %v991 = vmul.f32 %v538, %v974
        %v992 = vmul.f32 %v539, %v974
        %v993 = vmul.f32 %v540, %v974
        %v994 = vmul.f32 %v541, %v974
        %v995 = vmul.f32 %v542, %v974
        %v996 = vmul.f32 %v543, %v974
        %v997 = vmul.f32 %v544, %v974
        %v998 = vmul.f32 %v545, %v974
        %v999 = vmul.f32 %v546, %v974
        %v1000 = vmul.f32 %v547, %v974
        %v1001 = vmul.f32 %v548, %v974
        %v1002 = vmul.f32 %v549, %v974
        %v1003 = vmul.f32 %v550, %v974
        %v1004 = vmul.f32 %v551, %v974
        %v1005 = vmul.f32 %v552, %v974
        %v1006 = vmul.f32 %v553, %v974
        %v1007 = vadd.f32 %v942, %v975
        %v1008 = vadd.f32 %v943, %v976
        %v1009 = vadd.f32 %v944, %v977
        %v1010 = vadd.f32 %v945, %v978
        %v1011 = vadd.f32 %v946, %v979
        %v1012 = vadd.f32 %v947, %v980
        %v1013 = vadd.f32 %v948, %v981
        %v1014 = vadd.f32 %v949, %v982
        %v1015 = vadd.f32 %v950, %v983
        %v1016 = vadd.f32 %v951, %v984
        %v1017 = vadd.f32 %v952, %v985
        %v1018 = vadd.f32 %v953, %v986
        %v1019 = vadd.f32 %v954, %v987
        %v1020 = vadd.f32 %v955, %v988
        %v1021 = vadd.f32 %v956, %v989
        %v1022 = vadd.f32 %v957, %v990
        %v1023 = vadd.f32 %v958, %v991
        %v1024 = vadd.f32 %v959, %v992
        %v1025 = vadd.f32 %v960, %v993
        %v1026 = vadd.f32 %v961, %v994
        %v1027 = vadd.f32 %v962, %v995
        %v1028 = vadd.f32 %v963, %v996
        %v1029 = vadd.f32 %v964, %v997
        %v1030 = vadd.f32 %v965, %v998
        %v1031 = vadd.f32 %v966, %v999
        %v1032 = vadd.f32 %v967, %v1000
        %v1033 = vadd.f32 %v968, %v1001
        %v1034 = vadd.f32 %v969, %v1002
        %v1035 = vadd.f32 %v970, %v1003
        %v1036 = vadd.f32 %v971, %v1004
        %v1037 = vadd.f32 %v972, %v1005
        %v1038 = vadd.f32 %v973, %v1006
        %v1039 = vperm.slane %v555, 2
        %v1040 = vmul.f32 %v719, %v1039
        %v1041 = vmul.f32 %v720, %v1039
        %v1042 = vmul.f32 %v721, %v1039
        %v1043 = vmul.f32 %v722, %v1039
        %v1044 = vmul.f32 %v723, %v1039
        %v1045 = vmul.f32 %v724, %v1039
        %v1046 = vmul.f32 %v725, %v1039
        %v1047 = vmul.f32 %v726, %v1039
        %v1048 = vmul.f32 %v727, %v1039
        %v1049 = vmul.f32 %v728, %v1039
        %v1050 = vmul.f32 %v729, %v1039
        %v1051 = vmul.f32 %v730, %v1039
        %v1052 = vmul.f32 %v731, %v1039
        %v1053 = vmul.f32 %v732, %v1039
        %v1054 = vmul.f32 %v733, %v1039
        %v1055 = vmul.f32 %v734, %v1039
        %v1056 = vmul.f32 %v735, %v1039
        %v1057 = vmul.f32 %v736, %v1039
        %v1058 = vmul.f32 %v737, %v1039
        %v1059 = vmul.f32 %v738, %v1039
        %v1060 = vmul.f32 %v739, %v1039
        %v1061 = vmul.f32 %v740, %v1039
        %v1062 = vmul.f32 %v741, %v1039
        %v1063 = vmul.f32 %v742, %v1039
        %v1064 = vmul.f32 %v743, %v1039
        %v1065 = vmul.f32 %v744, %v1039
        %v1066 = vmul.f32 %v745, %v1039
        %v1067 = vmul.f32 %v746, %v1039
        %v1068 = vmul.f32 %v747, %v1039
        %v1069 = vmul.f32 %v748, %v1039
        %v1070 = vmul.f32 %v749, %v1039
        %v1071 = vmul.f32 %v750, %v1039
        %v1072 = vadd.f32 %v1007, %v1040
        %v1073 = vadd.f32 %v1008, %v1041
        %v1074 = vadd.f32 %v1009, %v1042
        %v1075 = vadd.f32 %v1010, %v1043
        %v1076 = vadd.f32 %v1011, %v1044
        %v1077 = vadd.f32 %v1012, %v1045
        %v1078 = vadd.f32 %v1013, %v1046
        %v1079 = vadd.f32 %v1014, %v1047
        %v1080 = vadd.f32 %v1015, %v1048
        %v1081 = vadd.f32 %v1016, %v1049
        %v1082 = vadd.f32 %v1017, %v1050
        %v1083 = vadd.f32 %v1018, %v1051
        %v1084 = vadd.f32 %v1019, %v1052
        %v1085 = vadd.f32 %v1020, %v1053
        %v1086 = vadd.f32 %v1021, %v1054
        %v1087 = vadd.f32 %v1022, %v1055
        %v1088 = vadd.f32 %v1023, %v1056
        %v1089 = vadd.f32 %v1024, %v1057
        %v1090 = vadd.f32 %v1025, %v1058
        %v1091 = vadd.f32 %v1026, %v1059
        %v1092 = vadd.f32 %v1027, %v1060
        %v1093 = vadd.f32 %v1028, %v1061
        %v1094 = vadd.f32 %v1029, %v1062
        %v1095 = vadd.f32 %v1030, %v1063
        %v1096 = vadd.f32 %v1031, %v1064
        %v1097 = vadd.f32 %v1032, %v1065
        %v1098 = vadd.f32 %v1033, %v1066
        %v1099 = vadd.f32 %v1034, %v1067
        %v1100 = vadd.f32 %v1035, %v1068
        %v1101 = vadd.f32 %v1036, %v1069
        %v1102 = vadd.f32 %v1037, %v1070
        %v1103 = vadd.f32 %v1038, %v1071
        %v1104 = vperm.slane %v556, 0
        %v1105 = vmul.f32 %v624, %v1104
        %v1106 = vmul.f32 %v625, %v1104
        %v1107 = vmul.f32 %v626, %v1104
        %v1108 = vmul.f32 %v627, %v1104
        %v1109 = vmul.f32 %v628, %v1104
        %v1110 = vmul.f32 %v629, %v1104
        %v1111 = vmul.f32 %v630, %v1104
        %v1112 = vmul.f32 %v631, %v1104
        %v1113 = vmul.f32 %v632, %v1104
        %v1114 = vmul.f32 %v633, %v1104
        %v1115 = vmul.f32 %v634, %v1104
        %v1116 = vmul.f32 %v635, %v1104
        %v1117 = vmul.f32 %v636, %v1104
        %v1118 = vmul.f32 %v637, %v1104
        %v1119 = vmul.f32 %v638, %v1104
        %v1120 = vmul.f32 %v639, %v1104
        %v1121 = vmul.f32 %v640, %v1104
        %v1122 = vmul.f32 %v641, %v1104
        %v1123 = vmul.f32 %v642, %v1104
        %v1124 = vmul.f32 %v643, %v1104
        %v1125 = vmul.f32 %v644, %v1104
        %v1126 = vmul.f32 %v645, %v1104
        %v1127 = vmul.f32 %v646, %v1104
        %v1128 = vmul.f32 %v647, %v1104
        %v1129 = vmul.f32 %v648, %v1104
        %v1130 = vmul.f32 %v649, %v1104
        %v1131 = vmul.f32 %v650, %v1104
        %v1132 = vmul.f32 %v651, %v1104
        %v1133 = vmul.f32 %v652, %v1104
        %v1134 = vmul.f32 %v653, %v1104
        %v1135 = vmul.f32 %v1104, 0.0
        %v1136 = vadd.f32 %v1072, %v1105
        %v1137 = vadd.f32 %v1073, %v1106
        %v1138 = vadd.f32 %v1074, %v1107
        %v1139 = vadd.f32 %v1075, %v1108
        %v1140 = vadd.f32 %v1076, %v1109
        %v1141 = vadd.f32 %v1077, %v1110
        %v1142 = vadd.f32 %v1078, %v1111
        %v1143 = vadd.f32 %v1079, %v1112
        %v1144 = vadd.f32 %v1080, %v1113
        %v1145 = vadd.f32 %v1081, %v1114
        %v1146 = vadd.f32 %v1082, %v1115
        %v1147 = vadd.f32 %v1083, %v1116
        %v1148 = vadd.f32 %v1084, %v1117
        %v1149 = vadd.f32 %v1085, %v1118
        %v1150 = vadd.f32 %v1086, %v1119
        %v1151 = vadd.f32 %v1087, %v1120
        %v1152 = vadd.f32 %v1088, %v1121
        %v1153 = vadd.f32 %v1089, %v1122
        %v1154 = vadd.f32 %v1090, %v1123
        %v1155 = vadd.f32 %v1091, %v1124
        %v1156 = vadd.f32 %v1092, %v1125
        %v1157 = vadd.f32 %v1093, %v1126
        %v1158 = vadd.f32 %v1094, %v1127
        %v1159 = vadd.f32 %v1095, %v1128
        %v1160 = vadd.f32 %v1096, %v1129
        %v1161 = vadd.f32 %v1097, %v1130
        %v1162 = vadd.f32 %v1098, %v1131
        %v1163 = vadd.f32 %v1099, %v1132
        %v1164 = vadd.f32 %v1100, %v1133
        %v1165 = vadd.f32 %v1101, %v1134
        %v1166 = vadd.f32 %v1102, %v1135
        %v1167 = vadd.f32 %v1103, %v1135
        %v1168 = vperm.slane %v556, 1
        %v1169 = vmul.f32 %v524, %v1168
        %v1170 = vmul.f32 %v525, %v1168
        %v1171 = vmul.f32 %v526, %v1168
        %v1172 = vmul.f32 %v527, %v1168
        %v1173 = vmul.f32 %v528, %v1168
        %v1174 = vmul.f32 %v529, %v1168
        %v1175 = vmul.f32 %v530, %v1168
        %v1176 = vmul.f32 %v531, %v1168
        %v1177 = vmul.f32 %v532, %v1168
        %v1178 = vmul.f32 %v533, %v1168
        %v1179 = vmul.f32 %v534, %v1168
        %v1180 = vmul.f32 %v535, %v1168
        %v1181 = vmul.f32 %v536, %v1168
        %v1182 = vmul.f32 %v537, %v1168
        %v1183 = vmul.f32 %v538, %v1168
        %v1184 = vmul.f32 %v539, %v1168
        %v1185 = vmul.f32 %v540, %v1168
        %v1186 = vmul.f32 %v541, %v1168
        %v1187 = vmul.f32 %v542, %v1168
        %v1188 = vmul.f32 %v543, %v1168
        %v1189 = vmul.f32 %v544, %v1168
        %v1190 = vmul.f32 %v545, %v1168
        %v1191 = vmul.f32 %v546, %v1168
        %v1192 = vmul.f32 %v547, %v1168
        %v1193 = vmul.f32 %v548, %v1168
        %v1194 = vmul.f32 %v549, %v1168
        %v1195 = vmul.f32 %v550, %v1168
        %v1196 = vmul.f32 %v551, %v1168
        %v1197 = vmul.f32 %v552, %v1168
        %v1198 = vmul.f32 %v553, %v1168
        %v1199 = vmul.f32 %v1168, 0.0
        %v1200 = vadd.f32 %v1136, %v1169
        %v1201 = vadd.f32 %v1137, %v1170
        %v1202 = vadd.f32 %v1138, %v1171
        %v1203 = vadd.f32 %v1139, %v1172
        %v1204 = vadd.f32 %v1140, %v1173
        %v1205 = vadd.f32 %v1141, %v1174
        %v1206 = vadd.f32 %v1142, %v1175
        %v1207 = vadd.f32 %v1143, %v1176
        %v1208 = vadd.f32 %v1144, %v1177
        %v1209 = vadd.f32 %v1145, %v1178
        %v1210 = vadd.f32 %v1146, %v1179
        %v1211 = vadd.f32 %v1147, %v1180
        %v1212 = vadd.f32 %v1148, %v1181
        %v1213 = vadd.f32 %v1149, %v1182
        %v1214 = vadd.f32 %v1150, %v1183
        %v1215 = vadd.f32 %v1151, %v1184
        %v1216 = vadd.f32 %v1152, %v1185
        %v1217 = vadd.f32 %v1153, %v1186
        %v1218 = vadd.f32 %v1154, %v1187
        %v1219 = vadd.f32 %v1155, %v1188
        %v1220 = vadd.f32 %v1156, %v1189
        %v1221 = vadd.f32 %v1157, %v1190
        %v1222 = vadd.f32 %v1158, %v1191
        %v1223 = vadd.f32 %v1159, %v1192
        %v1224 = vadd.f32 %v1160, %v1193
        %v1225 = vadd.f32 %v1161, %v1194
        %v1226 = vadd.f32 %v1162, %v1195
        %v1227 = vadd.f32 %v1163, %v1196
        %v1228 = vadd.f32 %v1164, %v1197
        %v1229 = vadd.f32 %v1165, %v1198
        %v1230 = vadd.f32 %v1166, %v1199
        %v1231 = vadd.f32 %v1167, %v1199
        %v1232 = vperm.slane %v556, 2
        %v1233 = vmul.f32 %v721, %v1232
        %v1234 = vmul.f32 %v722, %v1232
        %v1235 = vmul.f32 %v723, %v1232
        %v1236 = vmul.f32 %v724, %v1232
        %v1237 = vmul.f32 %v725, %v1232
        %v1238 = vmul.f32 %v726, %v1232
        %v1239 = vmul.f32 %v727, %v1232
        %v1240 = vmul.f32 %v728, %v1232
        %v1241 = vmul.f32 %v729, %v1232
        %v1242 = vmul.f32 %v730, %v1232
        %v1243 = vmul.f32 %v731, %v1232
        %v1244 = vmul.f32 %v732, %v1232
        %v1245 = vmul.f32 %v733, %v1232
        %v1246 = vmul.f32 %v734, %v1232
        %v1247 = vmul.f32 %v735, %v1232
        %v1248 = vmul.f32 %v736, %v1232
        %v1249 = vmul.f32 %v737, %v1232
        %v1250 = vmul.f32 %v738, %v1232
        %v1251 = vmul.f32 %v739, %v1232
        %v1252 = vmul.f32 %v740, %v1232
        %v1253 = vmul.f32 %v741, %v1232
        %v1254 = vmul.f32 %v742, %v1232
        %v1255 = vmul.f32 %v743, %v1232
        %v1256 = vmul.f32 %v744, %v1232
        %v1257 = vmul.f32 %v745, %v1232
        %v1258 = vmul.f32 %v746, %v1232
        %v1259 = vmul.f32 %v747, %v1232
        %v1260 = vmul.f32 %v748, %v1232
        %v1261 = vmul.f32 %v749, %v1232
        %v1262 = vmul.f32 %v750, %v1232
        %v1263 = vmul.f32 %v1232, 0.0
        %v1264 = vadd.f32 %v1200, %v1233
        %v1265 = vadd.f32 %v1201, %v1234
        %v1266 = vadd.f32 %v1202, %v1235
        %v1267 = vadd.f32 %v1203, %v1236
        %v1268 = vadd.f32 %v1204, %v1237
        %v1269 = vadd.f32 %v1205, %v1238
        %v1270 = vadd.f32 %v1206, %v1239
        %v1271 = vadd.f32 %v1207, %v1240
        %v1272 = vadd.f32 %v1208, %v1241
        %v1273 = vadd.f32 %v1209, %v1242
        %v1274 = vadd.f32 %v1210, %v1243
        %v1275 = vadd.f32 %v1211, %v1244
        %v1276 = vadd.f32 %v1212, %v1245
        %v1277 = vadd.f32 %v1213, %v1246
        %v1278 = vadd.f32 %v1214, %v1247
        %v1279 = vadd.f32 %v1215, %v1248
        %v1280 = vadd.f32 %v1216, %v1249
        %v1281 = vadd.f32 %v1217, %v1250
        %v1282 = vadd.f32 %v1218, %v1251
        %v1283 = vadd.f32 %v1219, %v1252
        %v1284 = vadd.f32 %v1220, %v1253
        %v1285 = vadd.f32 %v1221, %v1254
        %v1286 = vadd.f32 %v1222, %v1255
        %v1287 = vadd.f32 %v1223, %v1256
        %v1288 = vadd.f32 %v1224, %v1257
        %v1289 = vadd.f32 %v1225, %v1258
        %v1290 = vadd.f32 %v1226, %v1259
        %v1291 = vadd.f32 %v1227, %v1260
        %v1292 = vadd.f32 %v1228, %v1261
        %v1293 = vadd.f32 %v1229, %v1262
        %v1294 = vadd.f32 %v1230, %v1263
        %v1295 = vadd.f32 %v1231, %v1263
        %v1296 = vld [vmem:[#allocation7] sm:$0xf]
        %v1297 = vld [vmem:[#allocation7 + $0x4] sm:$0xf]
        %v1298 = vld [vmem:[#allocation7 + $0x8] sm:$0xf]
        %v1299 = vld [vmem:[#allocation7 + $0xc] sm:$0xf]
        %v1300 = vld [vmem:[#allocation7 + $0x10] sm:$0xf]
        %v1301 = vld [vmem:[#allocation7 + $0x14] sm:$0xf]
        %v1302 = vld [vmem:[#allocation7 + $0x18] sm:$0xf]
        %v1303 = vld [vmem:[#allocation7 + $0x1c] sm:$0xf]
        %v1304 = vld [vmem:[#allocation7 + $0x20] sm:$0xf]
        %v1305 = vld [vmem:[#allocation7 + $0x24] sm:$0xf]
        %v1306 = vld [vmem:[#allocation7 + $0x28] sm:$0xf]
        %v1307 = vld [vmem:[#allocation7 + $0x2c] sm:$0xf]
        %v1308 = vld [vmem:[#allocation7 + $0x30] sm:$0xf]
        %v1309 = vld [vmem:[#allocation7 + $0x34] sm:$0xf]
        %v1310 = vld [vmem:[#allocation7 + $0x38] sm:$0xf]
        %v1311 = vld [vmem:[#allocation7 + $0x3c] sm:$0xf]
        %v1312 = vld [vmem:[%s3] sm:$0x1]
        %v1313 = vpack.c.bf16 %v1265, %v1264
        %v1314 = vpack.c.bf16 %v1267, %v1266
        %v1315 = vpack.c.bf16 %v1269, %v1268
        %v1316 = vpack.c.bf16 %v1271, %v1270
        %v1317 = vpack.c.bf16 %v1273, %v1272
        %v1318 = vpack.c.bf16 %v1275, %v1274
        %v1319 = vpack.c.bf16 %v1277, %v1276
        %v1320 = vpack.c.bf16 %v1279, %v1278
        %v1321 = vpack.c.bf16 %v1281, %v1280
        %v1322 = vpack.c.bf16 %v1283, %v1282
        %v1323 = vpack.c.bf16 %v1285, %v1284
        %v1324 = vpack.c.bf16 %v1287, %v1286
        %v1325 = vpack.c.bf16 %v1289, %v1288
        %v1326 = vpack.c.bf16 %v1291, %v1290
        %v1327 = vpack.c.bf16 %v1293, %v1292
        %v1328 = vpack.c.bf16 %v1295, %v1294
        %v1330 = vperm.slane %v1312, 0
        %v1348 = vunpack.c.l.b16 %v1296
        %v1349 = vunpack.c.l.b16 %v1297
        %v1350 = vunpack.c.l.b16 %v1298
        %v1351 = vunpack.c.l.b16 %v1299
        %v1352 = vunpack.c.l.b16 %v1300
        %v1353 = vunpack.c.l.b16 %v1301
        %v1354 = vunpack.c.l.b16 %v1302
        %v1355 = vunpack.c.l.b16 %v1303
        %v1356 = vunpack.c.l.b16 %v1304
        %v1357 = vunpack.c.l.b16 %v1305
        %v1358 = vunpack.c.l.b16 %v1306
        %v1359 = vunpack.c.l.b16 %v1307
        %v1360 = vunpack.c.l.b16 %v1308
        %v1361 = vunpack.c.l.b16 %v1309
        %v1362 = vunpack.c.l.b16 %v1310
        %v1363 = vunpack.c.l.b16 %v1311
        %v1364 = vpack.c.b16 %v1349, %v1348
        %v1365 = vpack.c.b16 %v1351, %v1350
        %v1366 = vpack.c.b16 %v1353, %v1352
        %v1367 = vpack.c.b16 %v1355, %v1354
        %v1368 = vpack.c.b16 %v1357, %v1356
        %v1369 = vpack.c.b16 %v1359, %v1358
        %v1370 = vpack.c.b16 %v1361, %v1360
        %v1371 = vpack.c.b16 %v1363, %v1362
        %1380 = vmatpush.bf16.msra.mxu0 %v1371
        %1381 = vmatpush.bf16.msra.mxu0 %v1370
        %1382 = vmatpush.bf16.msra.mxu0 %v1369
        %1383 = vmatpush.bf16.msra.mxu0 %v1368
        %1384 = vmatpush.bf16.msra.mxu0 %v1367
        %1385 = vmatpush.bf16.msra.mxu0 %v1366
        %1386 = vmatpush.bf16.msra.mxu0 %v1365
        %1387 = vmatpush.bf16.msra.mxu0 %v1364
        %1388 = vmatmul.bf16.gmra.mxu0 %v1313
        %v1389 = vpop.f32.mrf.mxu0
        %v1390 = vadd.f32 %v1330, %v1389
        %v1391 = vpop.f32.mrf.mxu0
        %v1392 = vadd.f32 %v1330, %v1391
        %1393 = vmatmul.bf16.gmra.mxu0 %v1314
        %v1394 = vpop.f32.mrf.mxu0
        %v1395 = vadd.f32 %v1330, %v1394
        %v1396 = vpop.f32.mrf.mxu0
        %v1397 = vadd.f32 %v1330, %v1396
        %1398 = vmatmul.bf16.gmra.mxu0 %v1315
        %v1399 = vpop.f32.mrf.mxu0
        %v1400 = vadd.f32 %v1330, %v1399
        %v1401 = vpop.f32.mrf.mxu0
        %v1402 = vadd.f32 %v1330, %v1401
        %1403 = vmatmul.bf16.gmra.mxu0 %v1316
        %v1404 = vpop.f32.mrf.mxu0
        %v1405 = vadd.f32 %v1330, %v1404
        %v1406 = vpop.f32.mrf.mxu0
        %v1407 = vadd.f32 %v1330, %v1406
        %1408 = vmatmul.bf16.gmra.mxu0 %v1317
        %v1409 = vpop.f32.mrf.mxu0
        %v1410 = vadd.f32 %v1330, %v1409
        %v1411 = vpop.f32.mrf.mxu0
        %v1412 = vadd.f32 %v1330, %v1411
        %1413 = vmatmul.bf16.gmra.mxu0 %v1318
        %v1414 = vpop.f32.mrf.mxu0
        %v1415 = vadd.f32 %v1330, %v1414
        %v1416 = vpop.f32.mrf.mxu0
        %v1417 = vadd.f32 %v1330, %v1416
        %1418 = vmatmul.bf16.gmra.mxu0 %v1319
        %v1419 = vpop.f32.mrf.mxu0
        %v1420 = vadd.f32 %v1330, %v1419
        %v1421 = vpop.f32.mrf.mxu0
        %v1422 = vadd.f32 %v1330, %v1421
        %1423 = vmatmul.bf16.gmra.mxu0 %v1320
        %v1424 = vpop.f32.mrf.mxu0
        %v1425 = vadd.f32 %v1330, %v1424
        %v1426 = vpop.f32.mrf.mxu0
        %v1427 = vadd.f32 %v1330, %v1426
        %1428 = vmatmul.bf16.gmra.mxu0 %v1321
        %v1429 = vpop.f32.mrf.mxu0
        %v1430 = vadd.f32 %v1330, %v1429
        %v1431 = vpop.f32.mrf.mxu0
        %v1432 = vadd.f32 %v1330, %v1431
        %1433 = vmatmul.bf16.gmra.mxu0 %v1322
        %v1434 = vpop.f32.mrf.mxu0
        %v1435 = vadd.f32 %v1330, %v1434
        %v1436 = vpop.f32.mrf.mxu0
        %v1437 = vadd.f32 %v1330, %v1436
        %1438 = vmatmul.bf16.gmra.mxu0 %v1323
        %v1439 = vpop.f32.mrf.mxu0
        %v1440 = vadd.f32 %v1330, %v1439
        %v1441 = vpop.f32.mrf.mxu0
        %v1442 = vadd.f32 %v1330, %v1441
        %1443 = vmatmul.bf16.gmra.mxu0 %v1324
        %v1444 = vpop.f32.mrf.mxu0
        %v1445 = vadd.f32 %v1330, %v1444
        %v1446 = vpop.f32.mrf.mxu0
        %v1447 = vadd.f32 %v1330, %v1446
        %1448 = vmatmul.bf16.gmra.mxu0 %v1325
        %v1449 = vpop.f32.mrf.mxu0
        %v1450 = vadd.f32 %v1330, %v1449
        %v1451 = vpop.f32.mrf.mxu0
        %v1452 = vadd.f32 %v1330, %v1451
        %1453 = vmatmul.bf16.gmra.mxu0 %v1326
        %v1454 = vpop.f32.mrf.mxu0
        %v1455 = vadd.f32 %v1330, %v1454
        %v1456 = vpop.f32.mrf.mxu0
        %v1457 = vadd.f32 %v1330, %v1456
        %1458 = vmatmul.bf16.gmra.mxu0 %v1327
        %v1459 = vpop.f32.mrf.mxu0
        %v1460 = vadd.f32 %v1330, %v1459
        %v1461 = vpop.f32.mrf.mxu0
        %v1462 = vadd.f32 %v1330, %v1461
        %1463 = vmatmul.bf16.gmra.mxu0 %v1328
        %v1464 = vpop.f32.mrf.mxu0
        %v1465 = vadd.f32 %v1330, %v1464
        %v1466 = vpop.f32.mrf.mxu0
        %v1467 = vadd.f32 %v1330, %v1466
        %1468 = vdwg.mxu0
        %v1469 = vmax.f32 %v1390, 0.0
        %v1470 = vmax.f32 %v1392, 0.0
        %v1471 = vmax.f32 %v1395, 0.0
        %v1472 = vmax.f32 %v1397, 0.0
        %v1473 = vmax.f32 %v1400, 0.0
        %v1474 = vmax.f32 %v1402, 0.0
        %v1475 = vmax.f32 %v1405, 0.0
        %v1476 = vmax.f32 %v1407, 0.0
        %v1477 = vmax.f32 %v1410, 0.0
        %v1478 = vmax.f32 %v1412, 0.0
        %v1479 = vmax.f32 %v1415, 0.0
        %v1480 = vmax.f32 %v1417, 0.0
        %v1481 = vmax.f32 %v1420, 0.0
        %v1482 = vmax.f32 %v1422, 0.0
        %v1483 = vmax.f32 %v1425, 0.0
        %v1484 = vmax.f32 %v1427, 0.0
        %v1485 = vmax.f32 %v1430, 0.0
        %v1486 = vmax.f32 %v1432, 0.0
        %v1487 = vmax.f32 %v1435, 0.0
        %v1488 = vmax.f32 %v1437, 0.0
        %v1489 = vmax.f32 %v1440, 0.0
        %v1490 = vmax.f32 %v1442, 0.0
        %v1491 = vmax.f32 %v1445, 0.0
        %v1492 = vmax.f32 %v1447, 0.0
        %v1493 = vmax.f32 %v1450, 0.0
        %v1494 = vmax.f32 %v1452, 0.0
        %v1495 = vmax.f32 %v1455, 0.0
        %v1496 = vmax.f32 %v1457, 0.0
        %v1497 = vmax.f32 %v1460, 0.0
        %v1498 = vmax.f32 %v1462, 0.0
        %v1499 = vmax.f32 %v1465, 0.0
        %v1500 = vmax.f32 %v1467, 0.0
        %v1501 = vld [vmem:[#allocation8] sm:$0x7]
        %v1502 = vld [vmem:[#allocation8 + $0x4] sm:$0x7]
        %v1503 = vld [vmem:[#allocation8 + $0x8] sm:$0x7]
        %v1504 = vrot.slane %v1469, 7
        %v1505 = vrot.slane %v1471, 7
        %v1506 = vrot.slane %v1473, 7
        %v1507 = vrot.slane %v1475, 7
        %v1508 = vrot.slane %v1477, 7
        %v1509 = vrot.slane %v1479, 7
        %v1510 = vrot.slane %v1481, 7
        %v1511 = vrot.slane %v1483, 7
        %v1512 = vrot.slane %v1485, 7
        %v1513 = vrot.slane %v1487, 7
        %v1514 = vrot.slane %v1489, 7
        %v1515 = vrot.slane %v1491, 7
        %v1516 = vrot.slane %v1493, 7
        %v1517 = vrot.slane %v1495, 7
        %v1518 = vrot.slane %v1497, 7
        %v1519 = vrot.slane %v1499, 7
        %v1520 = vrot.slane %v1470, 7
        %v1521 = vrot.slane %v1472, 7
        %v1522 = vrot.slane %v1474, 7
        %v1523 = vrot.slane %v1476, 7
        %v1524 = vrot.slane %v1478, 7
        %v1525 = vrot.slane %v1480, 7
        %v1526 = vrot.slane %v1482, 7
        %v1527 = vrot.slane %v1484, 7
        %v1528 = vrot.slane %v1486, 7
        %v1529 = vrot.slane %v1488, 7
        %v1530 = vrot.slane %v1490, 7
        %v1531 = vrot.slane %v1492, 7
        %v1532 = vrot.slane %v1494, 7
        %v1533 = vrot.slane %v1496, 7
        %v1534 = vrot.slane %v1498, 7
        %v1535 = vrot.slane %v1500, 7
        %v1536 = vsel %vm589, %v1504, %v1520
        %v1537 = vsel %vm589, %v1505, %v1521
        %v1538 = vsel %vm589, %v1506, %v1522
        %v1539 = vsel %vm589, %v1507, %v1523
        %v1540 = vsel %vm589, %v1508, %v1524
        %v1541 = vsel %vm589, %v1509, %v1525
        %v1542 = vsel %vm589, %v1510, %v1526
        %v1543 = vsel %vm589, %v1511, %v1527
        %v1544 = vsel %vm589, %v1512, %v1528
        %v1545 = vsel %vm589, %v1513, %v1529
        %v1546 = vsel %vm589, %v1514, %v1530
        %v1547 = vsel %vm589, %v1515, %v1531
        %v1548 = vsel %vm589, %v1516, %v1532
        %v1549 = vsel %vm589, %v1517, %v1533
        %v1550 = vsel %vm589, %v1518, %v1534
        %v1551 = vsel %vm589, %v1519, %v1535
        %v1552 = vsel %vm589, %v1520, %v1504
        %v1553 = vsel %vm589, %v1521, %v1505
        %v1554 = vsel %vm589, %v1522, %v1506
        %v1555 = vsel %vm589, %v1523, %v1507
        %v1556 = vsel %vm589, %v1524, %v1508
        %v1557 = vsel %vm589, %v1525, %v1509
        %v1558 = vsel %vm589, %v1526, %v1510
        %v1559 = vsel %vm589, %v1527, %v1511
        %v1560 = vsel %vm589, %v1528, %v1512
        %v1561 = vsel %vm589, %v1529, %v1513
        %v1562 = vsel %vm589, %v1530, %v1514
        %v1563 = vsel %vm589, %v1531, %v1515
        %v1564 = vsel %vm589, %v1532, %v1516
        %v1565 = vsel %vm589, %v1533, %v1517
        %v1566 = vsel %vm589, %v1534, %v1518
        %v1567 = vsel %vm589, %v1535, %v1519
        %v1568 = vmul.f32 %v1552, %v516
        %v1569 = vmul.f32 %v1536, %v517
        %v1570 = vmul.f32 %v1553, %v516
        %v1571 = vmul.f32 %v1537, %v517
        %v1572 = vmul.f32 %v1554, %v516
        %v1573 = vmul.f32 %v1538, %v517
        %v1574 = vmul.f32 %v1555, %v516
        %v1575 = vmul.f32 %v1539, %v517
        %v1576 = vmul.f32 %v1556, %v516
        %v1577 = vmul.f32 %v1540, %v517
        %v1578 = vmul.f32 %v1557, %v516
        %v1579 = vmul.f32 %v1541, %v517
        %v1580 = vmul.f32 %v1558, %v516
        %v1581 = vmul.f32 %v1542, %v517
        %v1582 = vmul.f32 %v1559, %v516
        %v1583 = vmul.f32 %v1543, %v517
        %v1584 = vmul.f32 %v1560, %v516
        %v1585 = vmul.f32 %v1544, %v517
        %v1586 = vmul.f32 %v1561, %v516
        %v1587 = vmul.f32 %v1545, %v517
        %v1588 = vmul.f32 %v1562, %v516
        %v1589 = vmul.f32 %v1546, %v517
        %v1590 = vmul.f32 %v1563, %v516
        %v1591 = vmul.f32 %v1547, %v517
        %v1592 = vmul.f32 %v1564, %v516
        %v1593 = vmul.f32 %v1548, %v517
        %v1594 = vmul.f32 %v1565, %v516
        %v1595 = vmul.f32 %v1549, %v517
        %v1596 = vmul.f32 %v1566, %v516
        %v1597 = vmul.f32 %v1550, %v517
        %v1598 = vmul.f32 %v1567, %v516
        %v1599 = vmul.f32 %v1551, %v517
        %v1600 = vrot.slane %v1469, 1
        %v1601 = vrot.slane %v1471, 1
        %v1602 = vrot.slane %v1473, 1
        %v1603 = vrot.slane %v1475, 1
        %v1604 = vrot.slane %v1477, 1
        %v1605 = vrot.slane %v1479, 1
        %v1606 = vrot.slane %v1481, 1
        %v1607 = vrot.slane %v1483, 1
        %v1608 = vrot.slane %v1485, 1
        %v1609 = vrot.slane %v1487, 1
        %v1610 = vrot.slane %v1489, 1
        %v1611 = vrot.slane %v1491, 1
        %v1612 = vrot.slane %v1493, 1
        %v1613 = vrot.slane %v1495, 1
        %v1614 = vrot.slane %v1497, 1
        %v1615 = vrot.slane %v1499, 1
        %v1616 = vrot.slane %v1470, 1
        %v1617 = vrot.slane %v1472, 1
        %v1618 = vrot.slane %v1474, 1
        %v1619 = vrot.slane %v1476, 1
        %v1620 = vrot.slane %v1478, 1
        %v1621 = vrot.slane %v1480, 1
        %v1622 = vrot.slane %v1482, 1
        %v1623 = vrot.slane %v1484, 1
        %v1624 = vrot.slane %v1486, 1
        %v1625 = vrot.slane %v1488, 1
        %v1626 = vrot.slane %v1490, 1
        %v1627 = vrot.slane %v1492, 1
        %v1628 = vrot.slane %v1494, 1
        %v1629 = vrot.slane %v1496, 1
        %v1630 = vrot.slane %v1498, 1
        %v1631 = vrot.slane %v1500, 1
        %v1632 = vsel %vm686, %v1600, %v1616
        %v1633 = vsel %vm686, %v1601, %v1617
        %v1634 = vsel %vm686, %v1602, %v1618
        %v1635 = vsel %vm686, %v1603, %v1619
        %v1636 = vsel %vm686, %v1604, %v1620
        %v1637 = vsel %vm686, %v1605, %v1621
        %v1638 = vsel %vm686, %v1606, %v1622
        %v1639 = vsel %vm686, %v1607, %v1623
        %v1640 = vsel %vm686, %v1608, %v1624
        %v1641 = vsel %vm686, %v1609, %v1625
        %v1642 = vsel %vm686, %v1610, %v1626
        %v1643 = vsel %vm686, %v1611, %v1627
        %v1644 = vsel %vm686, %v1612, %v1628
        %v1645 = vsel %vm686, %v1613, %v1629
        %v1646 = vsel %vm686, %v1614, %v1630
        %v1647 = vsel %vm686, %v1615, %v1631
        %v1648 = vsel %vm686, %v1616, %v1600
        %v1649 = vsel %vm686, %v1617, %v1601
        %v1650 = vsel %vm686, %v1618, %v1602
        %v1651 = vsel %vm686, %v1619, %v1603
        %v1652 = vsel %vm686, %v1620, %v1604
        %v1653 = vsel %vm686, %v1621, %v1605
        %v1654 = vsel %vm686, %v1622, %v1606
        %v1655 = vsel %vm686, %v1623, %v1607
        %v1656 = vsel %vm686, %v1624, %v1608
        %v1657 = vsel %vm686, %v1625, %v1609
        %v1658 = vsel %vm686, %v1626, %v1610
        %v1659 = vsel %vm686, %v1627, %v1611
        %v1660 = vsel %vm686, %v1628, %v1612
        %v1661 = vsel %vm686, %v1629, %v1613
        %v1662 = vsel %vm686, %v1630, %v1614
        %v1663 = vsel %vm686, %v1631, %v1615
        %v1664 = vmul.f32 %v1632, %v520
        %v1665 = vmul.f32 %v1648, %v521
        %v1666 = vmul.f32 %v1633, %v520
        %v1667 = vmul.f32 %v1649, %v521
        %v1668 = vmul.f32 %v1634, %v520
        %v1669 = vmul.f32 %v1650, %v521
        %v1670 = vmul.f32 %v1635, %v520
        %v1671 = vmul.f32 %v1651, %v521
        %v1672 = vmul.f32 %v1636, %v520
        %v1673 = vmul.f32 %v1652, %v521
        %v1674 = vmul.f32 %v1637, %v520
        %v1675 = vmul.f32 %v1653, %v521
        %v1676 = vmul.f32 %v1638, %v520
        %v1677 = vmul.f32 %v1654, %v521
        %v1678 = vmul.f32 %v1639, %v520
        %v1679 = vmul.f32 %v1655, %v521
        %v1680 = vmul.f32 %v1640, %v520
        %v1681 = vmul.f32 %v1656, %v521
        %v1682 = vmul.f32 %v1641, %v520
        %v1683 = vmul.f32 %v1657, %v521
        %v1684 = vmul.f32 %v1642, %v520
        %v1685 = vmul.f32 %v1658, %v521
        %v1686 = vmul.f32 %v1643, %v520
        %v1687 = vmul.f32 %v1659, %v521
        %v1688 = vmul.f32 %v1644, %v520
        %v1689 = vmul.f32 %v1660, %v521
        %v1690 = vmul.f32 %v1645, %v520
        %v1691 = vmul.f32 %v1661, %v521
        %v1692 = vmul.f32 %v1646, %v520
        %v1693 = vmul.f32 %v1662, %v521
        %v1694 = vmul.f32 %v1647, %v520
        %v1695 = vmul.f32 %v1663, %v521
        %v1696 = vperm.slane %v1501, 0
        %v1697 = vmul.f32 %v1696, 0.0
        %v1698 = vmul.f32 %v1568, %v1696
        %v1699 = vmul.f32 %v1569, %v1696
        %v1700 = vmul.f32 %v1570, %v1696
        %v1701 = vmul.f32 %v1571, %v1696
        %v1702 = vmul.f32 %v1572, %v1696
        %v1703 = vmul.f32 %v1573, %v1696
        %v1704 = vmul.f32 %v1574, %v1696
        %v1705 = vmul.f32 %v1575, %v1696
        %v1706 = vmul.f32 %v1576, %v1696
        %v1707 = vmul.f32 %v1577, %v1696
        %v1708 = vmul.f32 %v1578, %v1696
        %v1709 = vmul.f32 %v1579, %v1696
        %v1710 = vmul.f32 %v1580, %v1696
        %v1711 = vmul.f32 %v1581, %v1696
        %v1712 = vmul.f32 %v1582, %v1696
        %v1713 = vmul.f32 %v1583, %v1696
        %v1714 = vmul.f32 %v1584, %v1696
        %v1715 = vmul.f32 %v1585, %v1696
        %v1716 = vmul.f32 %v1586, %v1696
        %v1717 = vmul.f32 %v1587, %v1696
        %v1718 = vmul.f32 %v1588, %v1696
        %v1719 = vmul.f32 %v1589, %v1696
        %v1720 = vmul.f32 %v1590, %v1696
        %v1721 = vmul.f32 %v1591, %v1696
        %v1722 = vmul.f32 %v1592, %v1696
        %v1723 = vmul.f32 %v1593, %v1696
        %v1724 = vmul.f32 %v1594, %v1696
        %v1725 = vmul.f32 %v1595, %v1696
        %v1726 = vmul.f32 %v1596, %v1696
        %v1727 = vmul.f32 %v1597, %v1696
        %v1728 = vperm.slane %v1501, 1
        %v1729 = vmul.f32 %v1728, 0.0
        %v1730 = vmul.f32 %v1469, %v1728
        %v1731 = vmul.f32 %v1470, %v1728
        %v1732 = vmul.f32 %v1471, %v1728
        %v1733 = vmul.f32 %v1472, %v1728
        %v1734 = vmul.f32 %v1473, %v1728
        %v1735 = vmul.f32 %v1474, %v1728
        %v1736 = vmul.f32 %v1475, %v1728
        %v1737 = vmul.f32 %v1476, %v1728
        %v1738 = vmul.f32 %v1477, %v1728
        %v1739 = vmul.f32 %v1478, %v1728
        %v1740 = vmul.f32 %v1479, %v1728
        %v1741 = vmul.f32 %v1480, %v1728
        %v1742 = vmul.f32 %v1481, %v1728
        %v1743 = vmul.f32 %v1482, %v1728
        %v1744 = vmul.f32 %v1483, %v1728
        %v1745 = vmul.f32 %v1484, %v1728
        %v1746 = vmul.f32 %v1485, %v1728
        %v1747 = vmul.f32 %v1486, %v1728
        %v1748 = vmul.f32 %v1487, %v1728
        %v1749 = vmul.f32 %v1488, %v1728
        %v1750 = vmul.f32 %v1489, %v1728
        %v1751 = vmul.f32 %v1490, %v1728
        %v1752 = vmul.f32 %v1491, %v1728
        %v1753 = vmul.f32 %v1492, %v1728
        %v1754 = vmul.f32 %v1493, %v1728
        %v1755 = vmul.f32 %v1494, %v1728
        %v1756 = vmul.f32 %v1495, %v1728
        %v1757 = vmul.f32 %v1496, %v1728
        %v1758 = vmul.f32 %v1497, %v1728
        %v1759 = vmul.f32 %v1498, %v1728
        %v1760 = vadd.f32 %v1697, %v1729
        %v1761 = vadd.f32 %v1698, %v1730
        %v1762 = vadd.f32 %v1699, %v1731
        %v1763 = vadd.f32 %v1700, %v1732
        %v1764 = vadd.f32 %v1701, %v1733
        %v1765 = vadd.f32 %v1702, %v1734
        %v1766 = vadd.f32 %v1703, %v1735
        %v1767 = vadd.f32 %v1704, %v1736
        %v1768 = vadd.f32 %v1705, %v1737
        %v1769 = vadd.f32 %v1706, %v1738
        %v1770 = vadd.f32 %v1707, %v1739
        %v1771 = vadd.f32 %v1708, %v1740
        %v1772 = vadd.f32 %v1709, %v1741
        %v1773 = vadd.f32 %v1710, %v1742
        %v1774 = vadd.f32 %v1711, %v1743
        %v1775 = vadd.f32 %v1712, %v1744
        %v1776 = vadd.f32 %v1713, %v1745
        %v1777 = vadd.f32 %v1714, %v1746
        %v1778 = vadd.f32 %v1715, %v1747
        %v1779 = vadd.f32 %v1716, %v1748
        %v1780 = vadd.f32 %v1717, %v1749
        %v1781 = vadd.f32 %v1718, %v1750
        %v1782 = vadd.f32 %v1719, %v1751
        %v1783 = vadd.f32 %v1720, %v1752
        %v1784 = vadd.f32 %v1721, %v1753
        %v1785 = vadd.f32 %v1722, %v1754
        %v1786 = vadd.f32 %v1723, %v1755
        %v1787 = vadd.f32 %v1724, %v1756
        %v1788 = vadd.f32 %v1725, %v1757
        %v1789 = vadd.f32 %v1726, %v1758
        %v1790 = vadd.f32 %v1727, %v1759
        %v1791 = vperm.slane %v1501, 2
        %v1792 = vmul.f32 %v1791, 0.0
        %v1793 = vmul.f32 %v1664, %v1791
        %v1794 = vmul.f32 %v1665, %v1791
        %v1795 = vmul.f32 %v1666, %v1791
        %v1796 = vmul.f32 %v1667, %v1791
        %v1797 = vmul.f32 %v1668, %v1791
        %v1798 = vmul.f32 %v1669, %v1791
        %v1799 = vmul.f32 %v1670, %v1791
        %v1800 = vmul.f32 %v1671, %v1791
        %v1801 = vmul.f32 %v1672, %v1791
        %v1802 = vmul.f32 %v1673, %v1791
        %v1803 = vmul.f32 %v1674, %v1791
        %v1804 = vmul.f32 %v1675, %v1791
        %v1805 = vmul.f32 %v1676, %v1791
        %v1806 = vmul.f32 %v1677, %v1791
        %v1807 = vmul.f32 %v1678, %v1791
        %v1808 = vmul.f32 %v1679, %v1791
        %v1809 = vmul.f32 %v1680, %v1791
        %v1810 = vmul.f32 %v1681, %v1791
        %v1811 = vmul.f32 %v1682, %v1791
        %v1812 = vmul.f32 %v1683, %v1791
        %v1813 = vmul.f32 %v1684, %v1791
        %v1814 = vmul.f32 %v1685, %v1791
        %v1815 = vmul.f32 %v1686, %v1791
        %v1816 = vmul.f32 %v1687, %v1791
        %v1817 = vmul.f32 %v1688, %v1791
        %v1818 = vmul.f32 %v1689, %v1791
        %v1819 = vmul.f32 %v1690, %v1791
        %v1820 = vmul.f32 %v1691, %v1791
        %v1821 = vmul.f32 %v1692, %v1791
        %v1822 = vmul.f32 %v1693, %v1791
        %v1823 = vadd.f32 %v1760, %v1792
        %v1824 = vadd.f32 %v1761, %v1793
        %v1825 = vadd.f32 %v1762, %v1794
        %v1826 = vadd.f32 %v1763, %v1795
        %v1827 = vadd.f32 %v1764, %v1796
        %v1828 = vadd.f32 %v1765, %v1797
        %v1829 = vadd.f32 %v1766, %v1798
        %v1830 = vadd.f32 %v1767, %v1799
        %v1831 = vadd.f32 %v1768, %v1800
        %v1832 = vadd.f32 %v1769, %v1801
        %v1833 = vadd.f32 %v1770, %v1802
        %v1834 = vadd.f32 %v1771, %v1803
        %v1835 = vadd.f32 %v1772, %v1804
        %v1836 = vadd.f32 %v1773, %v1805
        %v1837 = vadd.f32 %v1774, %v1806
        %v1838 = vadd.f32 %v1775, %v1807
        %v1839 = vadd.f32 %v1776, %v1808
        %v1840 = vadd.f32 %v1777, %v1809
        %v1841 = vadd.f32 %v1778, %v1810
        %v1842 = vadd.f32 %v1779, %v1811
        %v1843 = vadd.f32 %v1780, %v1812
        %v1844 = vadd.f32 %v1781, %v1813
        %v1845 = vadd.f32 %v1782, %v1814
        %v1846 = vadd.f32 %v1783, %v1815
        %v1847 = vadd.f32 %v1784, %v1816
        %v1848 = vadd.f32 %v1785, %v1817
        %v1849 = vadd.f32 %v1786, %v1818
        %v1850 = vadd.f32 %v1787, %v1819
        %v1851 = vadd.f32 %v1788, %v1820
        %v1852 = vadd.f32 %v1789, %v1821
        %v1853 = vadd.f32 %v1790, %v1822
        %v1854 = vperm.slane %v1502, 0
        %v1855 = vmul.f32 %v1568, %v1854
        %v1856 = vmul.f32 %v1569, %v1854
        %v1857 = vmul.f32 %v1570, %v1854
        %v1858 = vmul.f32 %v1571, %v1854
        %v1859 = vmul.f32 %v1572, %v1854
        %v1860 = vmul.f32 %v1573, %v1854
        %v1861 = vmul.f32 %v1574, %v1854
        %v1862 = vmul.f32 %v1575, %v1854
        %v1863 = vmul.f32 %v1576, %v1854
        %v1864 = vmul.f32 %v1577, %v1854
        %v1865 = vmul.f32 %v1578, %v1854
        %v1866 = vmul.f32 %v1579, %v1854
        %v1867 = vmul.f32 %v1580, %v1854
        %v1868 = vmul.f32 %v1581, %v1854
        %v1869 = vmul.f32 %v1582, %v1854
        %v1870 = vmul.f32 %v1583, %v1854
        %v1871 = vmul.f32 %v1584, %v1854
        %v1872 = vmul.f32 %v1585, %v1854
        %v1873 = vmul.f32 %v1586, %v1854
        %v1874 = vmul.f32 %v1587, %v1854
        %v1875 = vmul.f32 %v1588, %v1854
        %v1876 = vmul.f32 %v1589, %v1854
        %v1877 = vmul.f32 %v1590, %v1854
        %v1878 = vmul.f32 %v1591, %v1854
        %v1879 = vmul.f32 %v1592, %v1854
        %v1880 = vmul.f32 %v1593, %v1854
        %v1881 = vmul.f32 %v1594, %v1854
        %v1882 = vmul.f32 %v1595, %v1854
        %v1883 = vmul.f32 %v1596, %v1854
        %v1884 = vmul.f32 %v1597, %v1854
        %v1885 = vmul.f32 %v1598, %v1854
        %v1886 = vmul.f32 %v1599, %v1854
        %v1887 = vadd.f32 %v1823, %v1855
        %v1888 = vadd.f32 %v1823, %v1856
        %v1889 = vadd.f32 %v1824, %v1857
        %v1890 = vadd.f32 %v1825, %v1858
        %v1891 = vadd.f32 %v1826, %v1859
        %v1892 = vadd.f32 %v1827, %v1860
        %v1893 = vadd.f32 %v1828, %v1861
        %v1894 = vadd.f32 %v1829, %v1862
        %v1895 = vadd.f32 %v1830, %v1863
        %v1896 = vadd.f32 %v1831, %v1864
        %v1897 = vadd.f32 %v1832, %v1865
        %v1898 = vadd.f32 %v1833, %v1866
        %v1899 = vadd.f32 %v1834, %v1867
        %v1900 = vadd.f32 %v1835, %v1868
        %v1901 = vadd.f32 %v1836, %v1869
        %v1902 = vadd.f32 %v1837, %v1870
        %v1903 = vadd.f32 %v1838, %v1871
        %v1904 = vadd.f32 %v1839, %v1872
        %v1905 = vadd.f32 %v1840, %v1873
        %v1906 = vadd.f32 %v1841, %v1874
        %v1907 = vadd.f32 %v1842, %v1875
        %v1908 = vadd.f32 %v1843, %v1876
        %v1909 = vadd.f32 %v1844, %v1877
        %v1910 = vadd.f32 %v1845, %v1878
        %v1911 = vadd.f32 %v1846, %v1879
        %v1912 = vadd.f32 %v1847, %v1880
        %v1913 = vadd.f32 %v1848, %v1881
        %v1914 = vadd.f32 %v1849, %v1882
        %v1915 = vadd.f32 %v1850, %v1883
        %v1916 = vadd.f32 %v1851, %v1884
        %v1917 = vadd.f32 %v1852, %v1885
        %v1918 = vadd.f32 %v1853, %v1886
        %v1919 = vperm.slane %v1502, 1
        %v1920 = vmul.f32 %v1469, %v1919
        %v1921 = vmul.f32 %v1470, %v1919
        %v1922 = vmul.f32 %v1471, %v1919
        %v1923 = vmul.f32 %v1472, %v1919
        %v1924 = vmul.f32 %v1473, %v1919
        %v1925 = vmul.f32 %v1474, %v1919
        %v1926 = vmul.f32 %v1475, %v1919
        %v1927 = vmul.f32 %v1476, %v1919
        %v1928 = vmul.f32 %v1477, %v1919
        %v1929 = vmul.f32 %v1478, %v1919
        %v1930 = vmul.f32 %v1479, %v1919
        %v1931 = vmul.f32 %v1480, %v1919
        %v1932 = vmul.f32 %v1481, %v1919
        %v1933 = vmul.f32 %v1482, %v1919
        %v1934 = vmul.f32 %v1483, %v1919
        %v1935 = vmul.f32 %v1484, %v1919
        %v1936 = vmul.f32 %v1485, %v1919
        %v1937 = vmul.f32 %v1486, %v1919
        %v1938 = vmul.f32 %v1487, %v1919
        %v1939 = vmul.f32 %v1488, %v1919
        %v1940 = vmul.f32 %v1489, %v1919
        %v1941 = vmul.f32 %v1490, %v1919
        %v1942 = vmul.f32 %v1491, %v1919
        %v1943 = vmul.f32 %v1492, %v1919
        %v1944 = vmul.f32 %v1493, %v1919
        %v1945 = vmul.f32 %v1494, %v1919
        %v1946 = vmul.f32 %v1495, %v1919
        %v1947 = vmul.f32 %v1496, %v1919
        %v1948 = vmul.f32 %v1497, %v1919
        %v1949 = vmul.f32 %v1498, %v1919
        %v1950 = vmul.f32 %v1499, %v1919
        %v1951 = vmul.f32 %v1500, %v1919
        %v1952 = vadd.f32 %v1887, %v1920
        %v1953 = vadd.f32 %v1888, %v1921
        %v1954 = vadd.f32 %v1889, %v1922
        %v1955 = vadd.f32 %v1890, %v1923
        %v1956 = vadd.f32 %v1891, %v1924
        %v1957 = vadd.f32 %v1892, %v1925
        %v1958 = vadd.f32 %v1893, %v1926
        %v1959 = vadd.f32 %v1894, %v1927
        %v1960 = vadd.f32 %v1895, %v1928
        %v1961 = vadd.f32 %v1896, %v1929
        %v1962 = vadd.f32 %v1897, %v1930
        %v1963 = vadd.f32 %v1898, %v1931
        %v1964 = vadd.f32 %v1899, %v1932
        %v1965 = vadd.f32 %v1900, %v1933
        %v1966 = vadd.f32 %v1901, %v1934
        %v1967 = vadd.f32 %v1902, %v1935
        %v1968 = vadd.f32 %v1903, %v1936
        %v1969 = vadd.f32 %v1904, %v1937
        %v1970 = vadd.f32 %v1905, %v1938
        %v1971 = vadd.f32 %v1906, %v1939
        %v1972 = vadd.f32 %v1907, %v1940
        %v1973 = vadd.f32 %v1908, %v1941
        %v1974 = vadd.f32 %v1909, %v1942
        %v1975 = vadd.f32 %v1910, %v1943
        %v1976 = vadd.f32 %v1911, %v1944
        %v1977 = vadd.f32 %v1912, %v1945
        %v1978 = vadd.f32 %v1913, %v1946
        %v1979 = vadd.f32 %v1914, %v1947
        %v1980 = vadd.f32 %v1915, %v1948
        %v1981 = vadd.f32 %v1916, %v1949
        %v1982 = vadd.f32 %v1917, %v1950
        %v1983 = vadd.f32 %v1918, %v1951
        %v1984 = vperm.slane %v1502, 2
        %v1985 = vmul.f32 %v1664, %v1984
        %v1986 = vmul.f32 %v1665, %v1984
        %v1987 = vmul.f32 %v1666, %v1984
        %v1988 = vmul.f32 %v1667, %v1984
        %v1989 = vmul.f32 %v1668, %v1984
        %v1990 = vmul.f32 %v1669, %v1984
        %v1991 = vmul.f32 %v1670, %v1984
        %v1992 = vmul.f32 %v1671, %v1984
        %v1993 = vmul.f32 %v1672, %v1984
        %v1994 = vmul.f32 %v1673, %v1984
        %v1995 = vmul.f32 %v1674, %v1984
        %v1996 = vmul.f32 %v1675, %v1984
        %v1997 = vmul.f32 %v1676, %v1984
        %v1998 = vmul.f32 %v1677, %v1984
        %v1999 = vmul.f32 %v1678, %v1984
        %v2000 = vmul.f32 %v1679, %v1984
        %v2001 = vmul.f32 %v1680, %v1984
        %v2002 = vmul.f32 %v1681, %v1984
        %v2003 = vmul.f32 %v1682, %v1984
        %v2004 = vmul.f32 %v1683, %v1984
        %v2005 = vmul.f32 %v1684, %v1984
        %v2006 = vmul.f32 %v1685, %v1984
        %v2007 = vmul.f32 %v1686, %v1984
        %v2008 = vmul.f32 %v1687, %v1984
        %v2009 = vmul.f32 %v1688, %v1984
        %v2010 = vmul.f32 %v1689, %v1984
        %v2011 = vmul.f32 %v1690, %v1984
        %v2012 = vmul.f32 %v1691, %v1984
        %v2013 = vmul.f32 %v1692, %v1984
        %v2014 = vmul.f32 %v1693, %v1984
        %v2015 = vmul.f32 %v1694, %v1984
        %v2016 = vmul.f32 %v1695, %v1984
        %v2017 = vadd.f32 %v1952, %v1985
        %v2018 = vadd.f32 %v1953, %v1986
        %v2019 = vadd.f32 %v1954, %v1987
        %v2020 = vadd.f32 %v1955, %v1988
        %v2021 = vadd.f32 %v1956, %v1989
        %v2022 = vadd.f32 %v1957, %v1990
        %v2023 = vadd.f32 %v1958, %v1991
        %v2024 = vadd.f32 %v1959, %v1992
        %v2025 = vadd.f32 %v1960, %v1993
        %v2026 = vadd.f32 %v1961, %v1994
        %v2027 = vadd.f32 %v1962, %v1995
        %v2028 = vadd.f32 %v1963, %v1996
        %v2029 = vadd.f32 %v1964, %v1997
        %v2030 = vadd.f32 %v1965, %v1998
        %v2031 = vadd.f32 %v1966, %v1999
        %v2032 = vadd.f32 %v1967, %v2000
        %v2033 = vadd.f32 %v1968, %v2001
        %v2034 = vadd.f32 %v1969, %v2002
        %v2035 = vadd.f32 %v1970, %v2003
        %v2036 = vadd.f32 %v1971, %v2004
        %v2037 = vadd.f32 %v1972, %v2005
        %v2038 = vadd.f32 %v1973, %v2006
        %v2039 = vadd.f32 %v1974, %v2007
        %v2040 = vadd.f32 %v1975, %v2008
        %v2041 = vadd.f32 %v1976, %v2009
        %v2042 = vadd.f32 %v1977, %v2010
        %v2043 = vadd.f32 %v1978, %v2011
        %v2044 = vadd.f32 %v1979, %v2012
        %v2045 = vadd.f32 %v1980, %v2013
        %v2046 = vadd.f32 %v1981, %v2014
        %v2047 = vadd.f32 %v1982, %v2015
        %v2048 = vadd.f32 %v1983, %v2016
        %v2049 = vperm.slane %v1503, 0
        %v2050 = vmul.f32 %v1570, %v2049
        %v2051 = vmul.f32 %v1571, %v2049
        %v2052 = vmul.f32 %v1572, %v2049
        %v2053 = vmul.f32 %v1573, %v2049
        %v2054 = vmul.f32 %v1574, %v2049
        %v2055 = vmul.f32 %v1575, %v2049
        %v2056 = vmul.f32 %v1576, %v2049
        %v2057 = vmul.f32 %v1577, %v2049
        %v2058 = vmul.f32 %v1578, %v2049
        %v2059 = vmul.f32 %v1579, %v2049
        %v2060 = vmul.f32 %v1580, %v2049
        %v2061 = vmul.f32 %v1581, %v2049
        %v2062 = vmul.f32 %v1582, %v2049
        %v2063 = vmul.f32 %v1583, %v2049
        %v2064 = vmul.f32 %v1584, %v2049
        %v2065 = vmul.f32 %v1585, %v2049
        %v2066 = vmul.f32 %v1586, %v2049
        %v2067 = vmul.f32 %v1587, %v2049
        %v2068 = vmul.f32 %v1588, %v2049
        %v2069 = vmul.f32 %v1589, %v2049
        %v2070 = vmul.f32 %v1590, %v2049
        %v2071 = vmul.f32 %v1591, %v2049
        %v2072 = vmul.f32 %v1592, %v2049
        %v2073 = vmul.f32 %v1593, %v2049
        %v2074 = vmul.f32 %v1594, %v2049
        %v2075 = vmul.f32 %v1595, %v2049
        %v2076 = vmul.f32 %v1596, %v2049
        %v2077 = vmul.f32 %v1597, %v2049
        %v2078 = vmul.f32 %v1598, %v2049
        %v2079 = vmul.f32 %v1599, %v2049
        %v2080 = vmul.f32 %v2049, 0.0
        %v2081 = vadd.f32 %v2017, %v2050
        %v2082 = vadd.f32 %v2018, %v2051
        %v2083 = vadd.f32 %v2019, %v2052
        %v2084 = vadd.f32 %v2020, %v2053
        %v2085 = vadd.f32 %v2021, %v2054
        %v2086 = vadd.f32 %v2022, %v2055
        %v2087 = vadd.f32 %v2023, %v2056
        %v2088 = vadd.f32 %v2024, %v2057
        %v2089 = vadd.f32 %v2025, %v2058
        %v2090 = vadd.f32 %v2026, %v2059
        %v2091 = vadd.f32 %v2027, %v2060
        %v2092 = vadd.f32 %v2028, %v2061
        %v2093 = vadd.f32 %v2029, %v2062
        %v2094 = vadd.f32 %v2030, %v2063
        %v2095 = vadd.f32 %v2031, %v2064
        %v2096 = vadd.f32 %v2032, %v2065
        %v2097 = vadd.f32 %v2033, %v2066
        %v2098 = vadd.f32 %v2034, %v2067
        %v2099 = vadd.f32 %v2035, %v2068
        %v2100 = vadd.f32 %v2036, %v2069
        %v2101 = vadd.f32 %v2037, %v2070
        %v2102 = vadd.f32 %v2038, %v2071
        %v2103 = vadd.f32 %v2039, %v2072
        %v2104 = vadd.f32 %v2040, %v2073
        %v2105 = vadd.f32 %v2041, %v2074
        %v2106 = vadd.f32 %v2042, %v2075
        %v2107 = vadd.f32 %v2043, %v2076
        %v2108 = vadd.f32 %v2044, %v2077
        %v2109 = vadd.f32 %v2045, %v2078
        %v2110 = vadd.f32 %v2046, %v2079
        %v2111 = vadd.f32 %v2047, %v2080
        %v2112 = vadd.f32 %v2048, %v2080
        %v2113 = vperm.slane %v1503, 1
        %v2114 = vmul.f32 %v1471, %v2113
        %v2115 = vmul.f32 %v1472, %v2113
        %v2116 = vmul.f32 %v1473, %v2113
        %v2117 = vmul.f32 %v1474, %v2113
        %v2118 = vmul.f32 %v1475, %v2113
        %v2119 = vmul.f32 %v1476, %v2113
        %v2120 = vmul.f32 %v1477, %v2113
        %v2121 = vmul.f32 %v1478, %v2113
        %v2122 = vmul.f32 %v1479, %v2113
        %v2123 = vmul.f32 %v1480, %v2113
        %v2124 = vmul.f32 %v1481, %v2113
        %v2125 = vmul.f32 %v1482, %v2113
        %v2126 = vmul.f32 %v1483, %v2113
        %v2127 = vmul.f32 %v1484, %v2113
        %v2128 = vmul.f32 %v1485, %v2113
        %v2129 = vmul.f32 %v1486, %v2113
        %v2130 = vmul.f32 %v1487, %v2113
        %v2131 = vmul.f32 %v1488, %v2113
        %v2132 = vmul.f32 %v1489, %v2113
        %v2133 = vmul.f32 %v1490, %v2113
        %v2134 = vmul.f32 %v1491, %v2113
        %v2135 = vmul.f32 %v1492, %v2113
        %v2136 = vmul.f32 %v1493, %v2113
        %v2137 = vmul.f32 %v1494, %v2113
        %v2138 = vmul.f32 %v1495, %v2113
        %v2139 = vmul.f32 %v1496, %v2113
        %v2140 = vmul.f32 %v1497, %v2113
        %v2141 = vmul.f32 %v1498, %v2113
        %v2142 = vmul.f32 %v1499, %v2113
        %v2143 = vmul.f32 %v1500, %v2113
        %v2144 = vmul.f32 %v2113, 0.0
        %v2145 = vadd.f32 %v2081, %v2114
        %v2146 = vadd.f32 %v2082, %v2115
        %v2147 = vadd.f32 %v2083, %v2116
        %v2148 = vadd.f32 %v2084, %v2117
        %v2149 = vadd.f32 %v2085, %v2118
        %v2150 = vadd.f32 %v2086, %v2119
        %v2151 = vadd.f32 %v2087, %v2120
        %v2152 = vadd.f32 %v2088, %v2121
        %v2153 = vadd.f32 %v2089, %v2122
        %v2154 = vadd.f32 %v2090, %v2123
        %v2155 = vadd.f32 %v2091, %v2124
        %v2156 = vadd.f32 %v2092, %v2125
        %v2157 = vadd.f32 %v2093, %v2126
        %v2158 = vadd.f32 %v2094, %v2127
        %v2159 = vadd.f32 %v2095, %v2128
        %v2160 = vadd.f32 %v2096, %v2129
        %v2161 = vadd.f32 %v2097, %v2130
        %v2162 = vadd.f32 %v2098, %v2131
        %v2163 = vadd.f32 %v2099, %v2132
        %v2164 = vadd.f32 %v2100, %v2133
        %v2165 = vadd.f32 %v2101, %v2134
        %v2166 = vadd.f32 %v2102, %v2135
        %v2167 = vadd.f32 %v2103, %v2136
        %v2168 = vadd.f32 %v2104, %v2137
        %v2169 = vadd.f32 %v2105, %v2138
        %v2170 = vadd.f32 %v2106, %v2139
        %v2171 = vadd.f32 %v2107, %v2140
        %v2172 = vadd.f32 %v2108, %v2141
        %v2173 = vadd.f32 %v2109, %v2142
        %v2174 = vadd.f32 %v2110, %v2143
        %v2175 = vadd.f32 %v2111, %v2144
        %v2176 = vadd.f32 %v2112, %v2144
        %v2177 = vperm.slane %v1503, 2
        %v2178 = vmul.f32 %v1666, %v2177
        %v2179 = vmul.f32 %v1667, %v2177
        %v2180 = vmul.f32 %v1668, %v2177
        %v2181 = vmul.f32 %v1669, %v2177
        %v2182 = vmul.f32 %v1670, %v2177
        %v2183 = vmul.f32 %v1671, %v2177
        %v2184 = vmul.f32 %v1672, %v2177
        %v2185 = vmul.f32 %v1673, %v2177
        %v2186 = vmul.f32 %v1674, %v2177
        %v2187 = vmul.f32 %v1675, %v2177
        %v2188 = vmul.f32 %v1676, %v2177
        %v2189 = vmul.f32 %v1677, %v2177
        %v2190 = vmul.f32 %v1678, %v2177
        %v2191 = vmul.f32 %v1679, %v2177
        %v2192 = vmul.f32 %v1680, %v2177
        %v2193 = vmul.f32 %v1681, %v2177
        %v2194 = vmul.f32 %v1682, %v2177
        %v2195 = vmul.f32 %v1683, %v2177
        %v2196 = vmul.f32 %v1684, %v2177
        %v2197 = vmul.f32 %v1685, %v2177
        %v2198 = vmul.f32 %v1686, %v2177
        %v2199 = vmul.f32 %v1687, %v2177
        %v2200 = vmul.f32 %v1688, %v2177
        %v2201 = vmul.f32 %v1689, %v2177
        %v2202 = vmul.f32 %v1690, %v2177
        %v2203 = vmul.f32 %v1691, %v2177
        %v2204 = vmul.f32 %v1692, %v2177
        %v2205 = vmul.f32 %v1693, %v2177
        %v2206 = vmul.f32 %v1694, %v2177
        %v2207 = vmul.f32 %v1695, %v2177
        %v2208 = vmul.f32 %v2177, 0.0
        %v2209 = vadd.f32 %v2145, %v2178
        %v2210 = vadd.f32 %v2146, %v2179
        %v2211 = vadd.f32 %v2147, %v2180
        %v2212 = vadd.f32 %v2148, %v2181
        %v2213 = vadd.f32 %v2149, %v2182
        %v2214 = vadd.f32 %v2150, %v2183
        %v2215 = vadd.f32 %v2151, %v2184
        %v2216 = vadd.f32 %v2152, %v2185
        %v2217 = vadd.f32 %v2153, %v2186
        %v2218 = vadd.f32 %v2154, %v2187
        %v2219 = vadd.f32 %v2155, %v2188
        %v2220 = vadd.f32 %v2156, %v2189
        %v2221 = vadd.f32 %v2157, %v2190
        %v2222 = vadd.f32 %v2158, %v2191
        %v2223 = vadd.f32 %v2159, %v2192
        %v2224 = vadd.f32 %v2160, %v2193
        %v2225 = vadd.f32 %v2161, %v2194
        %v2226 = vadd.f32 %v2162, %v2195
        %v2227 = vadd.f32 %v2163, %v2196
        %v2228 = vadd.f32 %v2164, %v2197
        %v2229 = vadd.f32 %v2165, %v2198
        %v2230 = vadd.f32 %v2166, %v2199
        %v2231 = vadd.f32 %v2167, %v2200
        %v2232 = vadd.f32 %v2168, %v2201
        %v2233 = vadd.f32 %v2169, %v2202
        %v2234 = vadd.f32 %v2170, %v2203
        %v2235 = vadd.f32 %v2171, %v2204
        %v2236 = vadd.f32 %v2172, %v2205
        %v2237 = vadd.f32 %v2173, %v2206
        %v2238 = vadd.f32 %v2174, %v2207
        %v2239 = vadd.f32 %v2175, %v2208
        %v2240 = vadd.f32 %v2176, %v2208
        %v2241 = vld [vmem:[#allocation10] sm:$0xf]
        %v2242 = vld [vmem:[#allocation10 + $0x4] sm:$0xf]
        %v2243 = vld [vmem:[#allocation10 + $0x8] sm:$0xf]
        %v2244 = vld [vmem:[#allocation10 + $0xc] sm:$0xf]
        %v2245 = vld [vmem:[#allocation10 + $0x10] sm:$0xf]
        %v2246 = vld [vmem:[#allocation10 + $0x14] sm:$0xf]
        %v2247 = vld [vmem:[#allocation10 + $0x18] sm:$0xf]
        %v2248 = vld [vmem:[#allocation10 + $0x1c] sm:$0xf]
        %v2249 = vld [vmem:[#allocation10 + $0x20] sm:$0xf]
        %v2250 = vld [vmem:[#allocation10 + $0x24] sm:$0xf]
        %v2251 = vld [vmem:[#allocation10 + $0x28] sm:$0xf]
        %v2252 = vld [vmem:[#allocation10 + $0x2c] sm:$0xf]
        %v2253 = vld [vmem:[#allocation10 + $0x30] sm:$0xf]
        %v2254 = vld [vmem:[#allocation10 + $0x34] sm:$0xf]
        %v2255 = vld [vmem:[#allocation10 + $0x38] sm:$0xf]
        %v2256 = vld [vmem:[#allocation10 + $0x3c] sm:$0xf]
        %v2257 = vld [vmem:[%s6] sm:$0x1]
        %v2258 = vpack.c.bf16 %v2210, %v2209
        %v2259 = vpack.c.bf16 %v2212, %v2211
        %v2260 = vpack.c.bf16 %v2214, %v2213
        %v2261 = vpack.c.bf16 %v2216, %v2215
        %v2262 = vpack.c.bf16 %v2218, %v2217
        %v2263 = vpack.c.bf16 %v2220, %v2219
        %v2264 = vpack.c.bf16 %v2222, %v2221
        %v2265 = vpack.c.bf16 %v2224, %v2223
        %v2266 = vpack.c.bf16 %v2226, %v2225
        %v2267 = vpack.c.bf16 %v2228, %v2227
        %v2268 = vpack.c.bf16 %v2230, %v2229
        %v2269 = vpack.c.bf16 %v2232, %v2231
        %v2270 = vpack.c.bf16 %v2234, %v2233
        %v2271 = vpack.c.bf16 %v2236, %v2235
        %v2272 = vpack.c.bf16 %v2238, %v2237
        %v2273 = vpack.c.bf16 %v2240, %v2239
        %v2275 = vperm.slane %v2257, 0
        %v2293 = vunpack.c.l.b16 %v2241
        %v2294 = vunpack.c.l.b16 %v2242
        %v2295 = vunpack.c.l.b16 %v2243
        %v2296 = vunpack.c.l.b16 %v2244
        %v2297 = vunpack.c.l.b16 %v2245
        %v2298 = vunpack.c.l.b16 %v2246
        %v2299 = vunpack.c.l.b16 %v2247
        %v2300 = vunpack.c.l.b16 %v2248
        %v2301 = vunpack.c.l.b16 %v2249
        %v2302 = vunpack.c.l.b16 %v2250
        %v2303 = vunpack.c.l.b16 %v2251
        %v2304 = vunpack.c.l.b16 %v2252
        %v2305 = vunpack.c.l.b16 %v2253
        %v2306 = vunpack.c.l.b16 %v2254
        %v2307 = vunpack.c.l.b16 %v2255
        %v2308 = vunpack.c.l.b16 %v2256
        %v2309 = vpack.c.b16 %v2294, %v2293
        %v2310 = vpack.c.b16 %v2296, %v2295
        %v2311 = vpack.c.b16 %v2298, %v2297
        %v2312 = vpack.c.b16 %v2300, %v2299
        %v2313 = vpack.c.b16 %v2302, %v2301
        %v2314 = vpack.c.b16 %v2304, %v2303
        %v2315 = vpack.c.b16 %v2306, %v2305
        %v2316 = vpack.c.b16 %v2308, %v2307
        %2325 = vmatpush.bf16.msra.mxu0 %v2316
        %2326 = vmatpush.bf16.msra.mxu0 %v2315
        %2327 = vmatpush.bf16.msra.mxu0 %v2314
        %2328 = vmatpush.bf16.msra.mxu0 %v2313
        %2329 = vmatpush.bf16.msra.mxu0 %v2312
        %2330 = vmatpush.bf16.msra.mxu0 %v2311
        %2331 = vmatpush.bf16.msra.mxu0 %v2310
        %2332 = vmatpush.bf16.msra.mxu0 %v2309
        %2333 = vmatmul.bf16.gmra.mxu0 %v2258
        %v2334 = vpop.f32.mrf.mxu0
        %v2335 = vadd.f32 %v2275, %v2334
        %v2336 = vpop.f32.mrf.mxu0
        %v2337 = vadd.f32 %v2275, %v2336
        %2338 = vmatmul.bf16.gmra.mxu0 %v2259
        %v2339 = vpop.f32.mrf.mxu0
        %v2340 = vadd.f32 %v2275, %v2339
        %v2341 = vpop.f32.mrf.mxu0
        %v2342 = vadd.f32 %v2275, %v2341
        %2343 = vmatmul.bf16.gmra.mxu0 %v2260
        %v2344 = vpop.f32.mrf.mxu0
        %v2345 = vadd.f32 %v2275, %v2344
        %v2346 = vpop.f32.mrf.mxu0
        %v2347 = vadd.f32 %v2275, %v2346
        %2348 = vmatmul.bf16.gmra.mxu0 %v2261
        %v2349 = vpop.f32.mrf.mxu0
        %v2350 = vadd.f32 %v2275, %v2349
        %v2351 = vpop.f32.mrf.mxu0
        %v2352 = vadd.f32 %v2275, %v2351
        %2353 = vmatmul.bf16.gmra.mxu0 %v2262
        %v2354 = vpop.f32.mrf.mxu0
        %v2355 = vadd.f32 %v2275, %v2354
        %v2356 = vpop.f32.mrf.mxu0
        %v2357 = vadd.f32 %v2275, %v2356
        %2358 = vmatmul.bf16.gmra.mxu0 %v2263
        %v2359 = vpop.f32.mrf.mxu0
        %v2360 = vadd.f32 %v2275, %v2359
        %v2361 = vpop.f32.mrf.mxu0
        %v2362 = vadd.f32 %v2275, %v2361
        %2363 = vmatmul.bf16.gmra.mxu0 %v2264
        %v2364 = vpop.f32.mrf.mxu0
        %v2365 = vadd.f32 %v2275, %v2364
        %v2366 = vpop.f32.mrf.mxu0
        %v2367 = vadd.f32 %v2275, %v2366
        %2368 = vmatmul.bf16.gmra.mxu0 %v2265
        %v2369 = vpop.f32.mrf.mxu0
        %v2370 = vadd.f32 %v2275, %v2369
        %v2371 = vpop.f32.mrf.mxu0
        %v2372 = vadd.f32 %v2275, %v2371
        %2373 = vmatmul.bf16.gmra.mxu0 %v2266
        %v2374 = vpop.f32.mrf.mxu0
        %v2375 = vadd.f32 %v2275, %v2374
        %v2376 = vpop.f32.mrf.mxu0
        %v2377 = vadd.f32 %v2275, %v2376
        %2378 = vmatmul.bf16.gmra.mxu0 %v2267
        %v2379 = vpop.f32.mrf.mxu0
        %v2380 = vadd.f32 %v2275, %v2379
        %v2381 = vpop.f32.mrf.mxu0
        %v2382 = vadd.f32 %v2275, %v2381
        %2383 = vmatmul.bf16.gmra.mxu0 %v2268
        %v2384 = vpop.f32.mrf.mxu0
        %v2385 = vadd.f32 %v2275, %v2384
        %v2386 = vpop.f32.mrf.mxu0
        %v2387 = vadd.f32 %v2275, %v2386
        %2388 = vmatmul.bf16.gmra.mxu0 %v2269
        %v2389 = vpop.f32.mrf.mxu0
        %v2390 = vadd.f32 %v2275, %v2389
        %v2391 = vpop.f32.mrf.mxu0
        %v2392 = vadd.f32 %v2275, %v2391
        %2393 = vmatmul.bf16.gmra.mxu0 %v2270
        %v2394 = vpop.f32.mrf.mxu0
        %v2395 = vadd.f32 %v2275, %v2394
        %v2396 = vpop.f32.mrf.mxu0
        %v2397 = vadd.f32 %v2275, %v2396
        %2398 = vmatmul.bf16.gmra.mxu0 %v2271
        %v2399 = vpop.f32.mrf.mxu0
        %v2400 = vadd.f32 %v2275, %v2399
        %v2401 = vpop.f32.mrf.mxu0
        %v2402 = vadd.f32 %v2275, %v2401
        %2403 = vmatmul.bf16.gmra.mxu0 %v2272
        %v2404 = vpop.f32.mrf.mxu0
        %v2405 = vadd.f32 %v2275, %v2404
        %v2406 = vpop.f32.mrf.mxu0
        %v2407 = vadd.f32 %v2275, %v2406
        %2408 = vmatmul.bf16.gmra.mxu0 %v2273
        %v2409 = vpop.f32.mrf.mxu0
        %v2410 = vadd.f32 %v2275, %v2409
        %v2411 = vpop.f32.mrf.mxu0
        %v2412 = vadd.f32 %v2275, %v2411
        %2413 = vdwg.mxu0
        %v2414 = vmax.f32 %v2335, 0.0
        %v2415 = vmax.f32 %v2337, 0.0
        %v2416 = vmax.f32 %v2340, 0.0
        %v2417 = vmax.f32 %v2342, 0.0
        %v2418 = vmax.f32 %v2345, 0.0
        %v2419 = vmax.f32 %v2347, 0.0
        %v2420 = vmax.f32 %v2350, 0.0
        %v2421 = vmax.f32 %v2352, 0.0
        %v2422 = vmax.f32 %v2355, 0.0
        %v2423 = vmax.f32 %v2357, 0.0
        %v2424 = vmax.f32 %v2360, 0.0
        %v2425 = vmax.f32 %v2362, 0.0
        %v2426 = vmax.f32 %v2365, 0.0
        %v2427 = vmax.f32 %v2367, 0.0
        %v2428 = vmax.f32 %v2370, 0.0
        %v2429 = vmax.f32 %v2372, 0.0
        %v2430 = vmax.f32 %v2375, 0.0
        %v2431 = vmax.f32 %v2377, 0.0
        %v2432 = vmax.f32 %v2380, 0.0
        %v2433 = vmax.f32 %v2382, 0.0
        %v2434 = vmax.f32 %v2385, 0.0
        %v2435 = vmax.f32 %v2387, 0.0
        %v2436 = vmax.f32 %v2390, 0.0
        %v2437 = vmax.f32 %v2392, 0.0
        %v2438 = vmax.f32 %v2395, 0.0
        %v2439 = vmax.f32 %v2397, 0.0
        %v2440 = vmax.f32 %v2400, 0.0
        %v2441 = vmax.f32 %v2402, 0.0
        %v2442 = vmax.f32 %v2405, 0.0
        %v2443 = vmax.f32 %v2407, 0.0
        %v2444 = vmax.f32 %v2410, 0.0
        %v2445 = vmax.f32 %v2412, 0.0
        %v2446 = vld [vmem:[#allocation11] sm:$0x7]
        %v2447 = vld [vmem:[#allocation11 + $0x4] sm:$0x7]
        %v2448 = vld [vmem:[#allocation11 + $0x8] sm:$0x7]
        %v2449 = vrot.slane %v2414, 7
        %v2450 = vrot.slane %v2416, 7
        %v2451 = vrot.slane %v2418, 7
        %v2452 = vrot.slane %v2420, 7
        %v2453 = vrot.slane %v2422, 7
        %v2454 = vrot.slane %v2424, 7
        %v2455 = vrot.slane %v2426, 7
        %v2456 = vrot.slane %v2428, 7
        %v2457 = vrot.slane %v2430, 7
        %v2458 = vrot.slane %v2432, 7
        %v2459 = vrot.slane %v2434, 7
        %v2460 = vrot.slane %v2436, 7
        %v2461 = vrot.slane %v2438, 7
        %v2462 = vrot.slane %v2440, 7
        %v2463 = vrot.slane %v2442, 7
        %v2464 = vrot.slane %v2444, 7
        %v2465 = vrot.slane %v2415, 7
        %v2466 = vrot.slane %v2417, 7
        %v2467 = vrot.slane %v2419, 7
        %v2468 = vrot.slane %v2421, 7
        %v2469 = vrot.slane %v2423, 7
        %v2470 = vrot.slane %v2425, 7
        %v2471 = vrot.slane %v2427, 7
        %v2472 = vrot.slane %v2429, 7
        %v2473 = vrot.slane %v2431, 7
        %v2474 = vrot.slane %v2433, 7
        %v2475 = vrot.slane %v2435, 7
        %v2476 = vrot.slane %v2437, 7
        %v2477 = vrot.slane %v2439, 7
        %v2478 = vrot.slane %v2441, 7
        %v2479 = vrot.slane %v2443, 7
        %v2480 = vrot.slane %v2445, 7
        %v2481 = vsel %vm589, %v2449, %v2465
        %v2482 = vsel %vm589, %v2450, %v2466
        %v2483 = vsel %vm589, %v2451, %v2467
        %v2484 = vsel %vm589, %v2452, %v2468
        %v2485 = vsel %vm589, %v2453, %v2469
        %v2486 = vsel %vm589, %v2454, %v2470
        %v2487 = vsel %vm589, %v2455, %v2471
        %v2488 = vsel %vm589, %v2456, %v2472
        %v2489 = vsel %vm589, %v2457, %v2473
        %v2490 = vsel %vm589, %v2458, %v2474
        %v2491 = vsel %vm589, %v2459, %v2475
        %v2492 = vsel %vm589, %v2460, %v2476
        %v2493 = vsel %vm589, %v2461, %v2477
        %v2494 = vsel %vm589, %v2462, %v2478
        %v2495 = vsel %vm589, %v2463, %v2479
        %v2496 = vsel %vm589, %v2464, %v2480
        %v2497 = vsel %vm589, %v2465, %v2449
        %v2498 = vsel %vm589, %v2466, %v2450
        %v2499 = vsel %vm589, %v2467, %v2451
        %v2500 = vsel %vm589, %v2468, %v2452
        %v2501 = vsel %vm589, %v2469, %v2453
        %v2502 = vsel %vm589, %v2470, %v2454
        %v2503 = vsel %vm589, %v2471, %v2455
        %v2504 = vsel %vm589, %v2472, %v2456
        %v2505 = vsel %vm589, %v2473, %v2457
        %v2506 = vsel %vm589, %v2474, %v2458
        %v2507 = vsel %vm589, %v2475, %v2459
        %v2508 = vsel %vm589, %v2476, %v2460
        %v2509 = vsel %vm589, %v2477, %v2461
        %v2510 = vsel %vm589, %v2478, %v2462
        %v2511 = vsel %vm589, %v2479, %v2463
        %v2512 = vsel %vm589, %v2480, %v2464
        %v2513 = vmul.f32 %v2497, %v516
        %v2514 = vmul.f32 %v2481, %v517
        %v2515 = vmul.f32 %v2498, %v516
        %v2516 = vmul.f32 %v2482, %v517
        %v2517 = vmul.f32 %v2499, %v516
        %v2518 = vmul.f32 %v2483, %v517
        %v2519 = vmul.f32 %v2500, %v516
        %v2520 = vmul.f32 %v2484, %v517
        %v2521 = vmul.f32 %v2501, %v516
        %v2522 = vmul.f32 %v2485, %v517
        %v2523 = vmul.f32 %v2502, %v516
        %v2524 = vmul.f32 %v2486, %v517
        %v2525 = vmul.f32 %v2503, %v516
        %v2526 = vmul.f32 %v2487, %v517
        %v2527 = vmul.f32 %v2504, %v516
        %v2528 = vmul.f32 %v2488, %v517
        %v2529 = vmul.f32 %v2505, %v516
        %v2530 = vmul.f32 %v2489, %v517
        %v2531 = vmul.f32 %v2506, %v516
        %v2532 = vmul.f32 %v2490, %v517
        %v2533 = vmul.f32 %v2507, %v516
        %v2534 = vmul.f32 %v2491, %v517
        %v2535 = vmul.f32 %v2508, %v516
        %v2536 = vmul.f32 %v2492, %v517
        %v2537 = vmul.f32 %v2509, %v516
        %v2538 = vmul.f32 %v2493, %v517
        %v2539 = vmul.f32 %v2510, %v516
        %v2540 = vmul.f32 %v2494, %v517
        %v2541 = vmul.f32 %v2511, %v516
        %v2542 = vmul.f32 %v2495, %v517
        %v2543 = vmul.f32 %v2512, %v516
        %v2544 = vmul.f32 %v2496, %v517
        %v2545 = vrot.slane %v2414, 1
        %v2546 = vrot.slane %v2416, 1
        %v2547 = vrot.slane %v2418, 1
        %v2548 = vrot.slane %v2420, 1
        %v2549 = vrot.slane %v2422, 1
        %v2550 = vrot.slane %v2424, 1
        %v2551 = vrot.slane %v2426, 1
        %v2552 = vrot.slane %v2428, 1
        %v2553 = vrot.slane %v2430, 1
        %v2554 = vrot.slane %v2432, 1
        %v2555 = vrot.slane %v2434, 1
        %v2556 = vrot.slane %v2436, 1
        %v2557 = vrot.slane %v2438, 1
        %v2558 = vrot.slane %v2440, 1
        %v2559 = vrot.slane %v2442, 1
        %v2560 = vrot.slane %v2444, 1
        %v2561 = vrot.slane %v2415, 1
        %v2562 = vrot.slane %v2417, 1
        %v2563 = vrot.slane %v2419, 1
        %v2564 = vrot.slane %v2421, 1
        %v2565 = vrot.slane %v2423, 1
        %v2566 = vrot.slane %v2425, 1
        %v2567 = vrot.slane %v2427, 1
        %v2568 = vrot.slane %v2429, 1
        %v2569 = vrot.slane %v2431, 1
        %v2570 = vrot.slane %v2433, 1
        %v2571 = vrot.slane %v2435, 1
        %v2572 = vrot.slane %v2437, 1
        %v2573 = vrot.slane %v2439, 1
        %v2574 = vrot.slane %v2441, 1
        %v2575 = vrot.slane %v2443, 1
        %v2576 = vrot.slane %v2445, 1
        %v2577 = vsel %vm686, %v2545, %v2561
        %v2578 = vsel %vm686, %v2546, %v2562
        %v2579 = vsel %vm686, %v2547, %v2563
        %v2580 = vsel %vm686, %v2548, %v2564
        %v2581 = vsel %vm686, %v2549, %v2565
        %v2582 = vsel %vm686, %v2550, %v2566
        %v2583 = vsel %vm686, %v2551, %v2567
        %v2584 = vsel %vm686, %v2552, %v2568
        %v2585 = vsel %vm686, %v2553, %v2569
        %v2586 = vsel %vm686, %v2554, %v2570
        %v2587 = vsel %vm686, %v2555, %v2571
        %v2588 = vsel %vm686, %v2556, %v2572
        %v2589 = vsel %vm686, %v2557, %v2573
        %v2590 = vsel %vm686, %v2558, %v2574
        %v2591 = vsel %vm686, %v2559, %v2575
        %v2592 = vsel %vm686, %v2560, %v2576
        %v2593 = vsel %vm686, %v2561, %v2545
        %v2594 = vsel %vm686, %v2562, %v2546
        %v2595 = vsel %vm686, %v2563, %v2547
        %v2596 = vsel %vm686, %v2564, %v2548
        %v2597 = vsel %vm686, %v2565, %v2549
        %v2598 = vsel %vm686, %v2566, %v2550
        %v2599 = vsel %vm686, %v2567, %v2551
        %v2600 = vsel %vm686, %v2568, %v2552
        %v2601 = vsel %vm686, %v2569, %v2553
        %v2602 = vsel %vm686, %v2570, %v2554
        %v2603 = vsel %vm686, %v2571, %v2555
        %v2604 = vsel %vm686, %v2572, %v2556
        %v2605 = vsel %vm686, %v2573, %v2557
        %v2606 = vsel %vm686, %v2574, %v2558
        %v2607 = vsel %vm686, %v2575, %v2559
        %v2608 = vsel %vm686, %v2576, %v2560
        %v2609 = vmul.f32 %v2577, %v520
        %v2610 = vmul.f32 %v2593, %v521
        %v2611 = vmul.f32 %v2578, %v520
        %v2612 = vmul.f32 %v2594, %v521
        %v2613 = vmul.f32 %v2579, %v520
        %v2614 = vmul.f32 %v2595, %v521
        %v2615 = vmul.f32 %v2580, %v520
        %v2616 = vmul.f32 %v2596, %v521
        %v2617 = vmul.f32 %v2581, %v520
        %v2618 = vmul.f32 %v2597, %v521
        %v2619 = vmul.f32 %v2582, %v520
        %v2620 = vmul.f32 %v2598, %v521
        %v2621 = vmul.f32 %v2583, %v520
        %v2622 = vmul.f32 %v2599, %v521
        %v2623 = vmul.f32 %v2584, %v520
        %v2624 = vmul.f32 %v2600, %v521
        %v2625 = vmul.f32 %v2585, %v520
        %v2626 = vmul.f32 %v2601, %v521
        %v2627 = vmul.f32 %v2586, %v520
        %v2628 = vmul.f32 %v2602, %v521
        %v2629 = vmul.f32 %v2587, %v520
        %v2630 = vmul.f32 %v2603, %v521
        %v2631 = vmul.f32 %v2588, %v520
        %v2632 = vmul.f32 %v2604, %v521
        %v2633 = vmul.f32 %v2589, %v520
        %v2634 = vmul.f32 %v2605, %v521
        %v2635 = vmul.f32 %v2590, %v520
        %v2636 = vmul.f32 %v2606, %v521
        %v2637 = vmul.f32 %v2591, %v520
        %v2638 = vmul.f32 %v2607, %v521
        %v2639 = vmul.f32 %v2592, %v520
        %v2640 = vmul.f32 %v2608, %v521
        %v2641 = vperm.slane %v2446, 0
        %v2642 = vmul.f32 %v2641, 0.0
        %v2643 = vmul.f32 %v2513, %v2641
        %v2644 = vmul.f32 %v2514, %v2641
        %v2645 = vmul.f32 %v2515, %v2641
        %v2646 = vmul.f32 %v2516, %v2641
        %v2647 = vmul.f32 %v2517, %v2641
        %v2648 = vmul.f32 %v2518, %v2641
        %v2649 = vmul.f32 %v2519, %v2641
        %v2650 = vmul.f32 %v2520, %v2641
        %v2651 = vmul.f32 %v2521, %v2641
        %v2652 = vmul.f32 %v2522, %v2641
        %v2653 = vmul.f32 %v2523, %v2641
        %v2654 = vmul.f32 %v2524, %v2641
        %v2655 = vmul.f32 %v2525, %v2641
        %v2656 = vmul.f32 %v2526, %v2641
        %v2657 = vmul.f32 %v2527, %v2641
        %v2658 = vmul.f32 %v2528, %v2641
        %v2659 = vmul.f32 %v2529, %v2641
        %v2660 = vmul.f32 %v2530, %v2641
        %v2661 = vmul.f32 %v2531, %v2641
        %v2662 = vmul.f32 %v2532, %v2641
        %v2663 = vmul.f32 %v2533, %v2641
        %v2664 = vmul.f32 %v2534, %v2641
        %v2665 = vmul.f32 %v2535, %v2641
        %v2666 = vmul.f32 %v2536, %v2641
        %v2667 = vmul.f32 %v2537, %v2641
        %v2668 = vmul.f32 %v2538, %v2641
        %v2669 = vmul.f32 %v2539, %v2641
        %v2670 = vmul.f32 %v2540, %v2641
        %v2671 = vmul.f32 %v2541, %v2641
        %v2672 = vmul.f32 %v2542, %v2641
        %v2673 = vperm.slane %v2446, 1
        %v2674 = vmul.f32 %v2673, 0.0
        %v2675 = vmul.f32 %v2414, %v2673
        %v2676 = vmul.f32 %v2415, %v2673
        %v2677 = vmul.f32 %v2416, %v2673
        %v2678 = vmul.f32 %v2417, %v2673
        %v2679 = vmul.f32 %v2418, %v2673
        %v2680 = vmul.f32 %v2419, %v2673
        %v2681 = vmul.f32 %v2420, %v2673
        %v2682 = vmul.f32 %v2421, %v2673
        %v2683 = vmul.f32 %v2422, %v2673
        %v2684 = vmul.f32 %v2423, %v2673
        %v2685 = vmul.f32 %v2424, %v2673
        %v2686 = vmul.f32 %v2425, %v2673
        %v2687 = vmul.f32 %v2426, %v2673
        %v2688 = vmul.f32 %v2427, %v2673
        %v2689 = vmul.f32 %v2428, %v2673
        %v2690 = vmul.f32 %v2429, %v2673
        %v2691 = vmul.f32 %v2430, %v2673
        %v2692 = vmul.f32 %v2431, %v2673
        %v2693 = vmul.f32 %v2432, %v2673
        %v2694 = vmul.f32 %v2433, %v2673
        %v2695 = vmul.f32 %v2434, %v2673
        %v2696 = vmul.f32 %v2435, %v2673
        %v2697 = vmul.f32 %v2436, %v2673
        %v2698 = vmul.f32 %v2437, %v2673
        %v2699 = vmul.f32 %v2438, %v2673
        %v2700 = vmul.f32 %v2439, %v2673
        %v2701 = vmul.f32 %v2440, %v2673
        %v2702 = vmul.f32 %v2441, %v2673
        %v2703 = vmul.f32 %v2442, %v2673
        %v2704 = vmul.f32 %v2443, %v2673
        %v2705 = vadd.f32 %v2642, %v2674
        %v2706 = vadd.f32 %v2643, %v2675
        %v2707 = vadd.f32 %v2644, %v2676
        %v2708 = vadd.f32 %v2645, %v2677
        %v2709 = vadd.f32 %v2646, %v2678
        %v2710 = vadd.f32 %v2647, %v2679
        %v2711 = vadd.f32 %v2648, %v2680
        %v2712 = vadd.f32 %v2649, %v2681
        %v2713 = vadd.f32 %v2650, %v2682
        %v2714 = vadd.f32 %v2651, %v2683
        %v2715 = vadd.f32 %v2652, %v2684
        %v2716 = vadd.f32 %v2653, %v2685
        %v2717 = vadd.f32 %v2654, %v2686
        %v2718 = vadd.f32 %v2655, %v2687
        %v2719 = vadd.f32 %v2656, %v2688
        %v2720 = vadd.f32 %v2657, %v2689
        %v2721 = vadd.f32 %v2658, %v2690
        %v2722 = vadd.f32 %v2659, %v2691
        %v2723 = vadd.f32 %v2660, %v2692
        %v2724 = vadd.f32 %v2661, %v2693
        %v2725 = vadd.f32 %v2662, %v2694
        %v2726 = vadd.f32 %v2663, %v2695
        %v2727 = vadd.f32 %v2664, %v2696
        %v2728 = vadd.f32 %v2665, %v2697
        %v2729 = vadd.f32 %v2666, %v2698
        %v2730 = vadd.f32 %v2667, %v2699
        %v2731 = vadd.f32 %v2668, %v2700
        %v2732 = vadd.f32 %v2669, %v2701
        %v2733 = vadd.f32 %v2670, %v2702
        %v2734 = vadd.f32 %v2671, %v2703
        %v2735 = vadd.f32 %v2672, %v2704
        %v2736 = vperm.slane %v2446, 2
        %v2737 = vmul.f32 %v2736, 0.0
        %v2738 = vmul.f32 %v2609, %v2736
        %v2739 = vmul.f32 %v2610, %v2736
        %v2740 = vmul.f32 %v2611, %v2736
        %v2741 = vmul.f32 %v2612, %v2736
        %v2742 = vmul.f32 %v2613, %v2736
        %v2743 = vmul.f32 %v2614, %v2736
        %v2744 = vmul.f32 %v2615, %v2736
        %v2745 = vmul.f32 %v2616, %v2736
        %v2746 = vmul.f32 %v2617, %v2736
        %v2747 = vmul.f32 %v2618, %v2736
        %v2748 = vmul.f32 %v2619, %v2736
        %v2749 = vmul.f32 %v2620, %v2736
        %v2750 = vmul.f32 %v2621, %v2736
        %v2751 = vmul.f32 %v2622, %v2736
        %v2752 = vmul.f32 %v2623, %v2736
        %v2753 = vmul.f32 %v2624, %v2736
        %v2754 = vmul.f32 %v2625, %v2736
        %v2755 = vmul.f32 %v2626, %v2736
        %v2756 = vmul.f32 %v2627, %v2736
        %v2757 = vmul.f32 %v2628, %v2736
        %v2758 = vmul.f32 %v2629, %v2736
        %v2759 = vmul.f32 %v2630, %v2736
        %v2760 = vmul.f32 %v2631, %v2736
        %v2761 = vmul.f32 %v2632, %v2736
        %v2762 = vmul.f32 %v2633, %v2736
        %v2763 = vmul.f32 %v2634, %v2736
        %v2764 = vmul.f32 %v2635, %v2736
        %v2765 = vmul.f32 %v2636, %v2736
        %v2766 = vmul.f32 %v2637, %v2736
        %v2767 = vmul.f32 %v2638, %v2736
        %v2768 = vadd.f32 %v2705, %v2737
        %v2769 = vadd.f32 %v2706, %v2738
        %v2770 = vadd.f32 %v2707, %v2739
        %v2771 = vadd.f32 %v2708, %v2740
        %v2772 = vadd.f32 %v2709, %v2741
        %v2773 = vadd.f32 %v2710, %v2742
        %v2774 = vadd.f32 %v2711, %v2743
        %v2775 = vadd.f32 %v2712, %v2744
        %v2776 = vadd.f32 %v2713, %v2745
        %v2777 = vadd.f32 %v2714, %v2746
        %v2778 = vadd.f32 %v2715, %v2747
        %v2779 = vadd.f32 %v2716, %v2748
        %v2780 = vadd.f32 %v2717, %v2749
        %v2781 = vadd.f32 %v2718, %v2750
        %v2782 = vadd.f32 %v2719, %v2751
        %v2783 = vadd.f32 %v2720, %v2752
        %v2784 = vadd.f32 %v2721, %v2753
        %v2785 = vadd.f32 %v2722, %v2754
        %v2786 = vadd.f32 %v2723, %v2755
        %v2787 = vadd.f32 %v2724, %v2756
        %v2788 = vadd.f32 %v2725, %v2757
        %v2789 = vadd.f32 %v2726, %v2758
        %v2790 = vadd.f32 %v2727, %v2759
        %v2791 = vadd.f32 %v2728, %v2760
        %v2792 = vadd.f32 %v2729, %v2761
        %v2793 = vadd.f32 %v2730, %v2762
        %v2794 = vadd.f32 %v2731, %v2763
        %v2795 = vadd.f32 %v2732, %v2764
        %v2796 = vadd.f32 %v2733, %v2765
        %v2797 = vadd.f32 %v2734, %v2766
        %v2798 = vadd.f32 %v2735, %v2767
        %v2799 = vperm.slane %v2447, 0
        %v2800 = vmul.f32 %v2513, %v2799
        %v2801 = vmul.f32 %v2514, %v2799
        %v2802 = vmul.f32 %v2515, %v2799
        %v2803 = vmul.f32 %v2516, %v2799
        %v2804 = vmul.f32 %v2517, %v2799
        %v2805 = vmul.f32 %v2518, %v2799
        %v2806 = vmul.f32 %v2519, %v2799
        %v2807 = vmul.f32 %v2520, %v2799
        %v2808 = vmul.f32 %v2521, %v2799
        %v2809 = vmul.f32 %v2522, %v2799
        %v2810 = vmul.f32 %v2523, %v2799
        %v2811 = vmul.f32 %v2524, %v2799
        %v2812 = vmul.f32 %v2525, %v2799
        %v2813 = vmul.f32 %v2526, %v2799
        %v2814 = vmul.f32 %v2527, %v2799
        %v2815 = vmul.f32 %v2528, %v2799
        %v2816 = vmul.f32 %v2529, %v2799
        %v2817 = vmul.f32 %v2530, %v2799
        %v2818 = vmul.f32 %v2531, %v2799
        %v2819 = vmul.f32 %v2532, %v2799
        %v2820 = vmul.f32 %v2533, %v2799
        %v2821 = vmul.f32 %v2534, %v2799
        %v2822 = vmul.f32 %v2535, %v2799
        %v2823 = vmul.f32 %v2536, %v2799
        %v2824 = vmul.f32 %v2537, %v2799
        %v2825 = vmul.f32 %v2538, %v2799
        %v2826 = vmul.f32 %v2539, %v2799
        %v2827 = vmul.f32 %v2540, %v2799
        %v2828 = vmul.f32 %v2541, %v2799
        %v2829 = vmul.f32 %v2542, %v2799
        %v2830 = vmul.f32 %v2543, %v2799
        %v2831 = vmul.f32 %v2544, %v2799
        %v2832 = vadd.f32 %v2768, %v2800
        %v2833 = vadd.f32 %v2768, %v2801
        %v2834 = vadd.f32 %v2769, %v2802
        %v2835 = vadd.f32 %v2770, %v2803
        %v2836 = vadd.f32 %v2771, %v2804
        %v2837 = vadd.f32 %v2772, %v2805
        %v2838 = vadd.f32 %v2773, %v2806
        %v2839 = vadd.f32 %v2774, %v2807
        %v2840 = vadd.f32 %v2775, %v2808
        %v2841 = vadd.f32 %v2776, %v2809
        %v2842 = vadd.f32 %v2777, %v2810
        %v2843 = vadd.f32 %v2778, %v2811
        %v2844 = vadd.f32 %v2779, %v2812
        %v2845 = vadd.f32 %v2780, %v2813
        %v2846 = vadd.f32 %v2781, %v2814
        %v2847 = vadd.f32 %v2782, %v2815
        %v2848 = vadd.f32 %v2783, %v2816
        %v2849 = vadd.f32 %v2784, %v2817
        %v2850 = vadd.f32 %v2785, %v2818
        %v2851 = vadd.f32 %v2786, %v2819
        %v2852 = vadd.f32 %v2787, %v2820
        %v2853 = vadd.f32 %v2788, %v2821
        %v2854 = vadd.f32 %v2789, %v2822
        %v2855 = vadd.f32 %v2790, %v2823
        %v2856 = vadd.f32 %v2791, %v2824
        %v2857 = vadd.f32 %v2792, %v2825
        %v2858 = vadd.f32 %v2793, %v2826
        %v2859 = vadd.f32 %v2794, %v2827
        %v2860 = vadd.f32 %v2795, %v2828
        %v2861 = vadd.f32 %v2796, %v2829
        %v2862 = vadd.f32 %v2797, %v2830
        %v2863 = vadd.f32 %v2798, %v2831
        %v2864 = vperm.slane %v2447, 1
        %v2865 = vmul.f32 %v2414, %v2864
        %v2866 = vmul.f32 %v2415, %v2864
        %v2867 = vmul.f32 %v2416, %v2864
        %v2868 = vmul.f32 %v2417, %v2864
        %v2869 = vmul.f32 %v2418, %v2864
        %v2870 = vmul.f32 %v2419, %v2864
        %v2871 = vmul.f32 %v2420, %v2864
        %v2872 = vmul.f32 %v2421, %v2864
        %v2873 = vmul.f32 %v2422, %v2864
        %v2874 = vmul.f32 %v2423, %v2864
        %v2875 = vmul.f32 %v2424, %v2864
        %v2876 = vmul.f32 %v2425, %v2864
        %v2877 = vmul.f32 %v2426, %v2864
        %v2878 = vmul.f32 %v2427, %v2864
        %v2879 = vmul.f32 %v2428, %v2864
        %v2880 = vmul.f32 %v2429, %v2864
        %v2881 = vmul.f32 %v2430, %v2864
        %v2882 = vmul.f32 %v2431, %v2864
        %v2883 = vmul.f32 %v2432, %v2864
        %v2884 = vmul.f32 %v2433, %v2864
        %v2885 = vmul.f32 %v2434, %v2864
        %v2886 = vmul.f32 %v2435, %v2864
        %v2887 = vmul.f32 %v2436, %v2864
        %v2888 = vmul.f32 %v2437, %v2864
        %v2889 = vmul.f32 %v2438, %v2864
        %v2890 = vmul.f32 %v2439, %v2864
        %v2891 = vmul.f32 %v2440, %v2864
        %v2892 = vmul.f32 %v2441, %v2864
        %v2893 = vmul.f32 %v2442, %v2864
        %v2894 = vmul.f32 %v2443, %v2864
        %v2895 = vmul.f32 %v2444, %v2864
        %v2896 = vmul.f32 %v2445, %v2864
        %v2897 = vadd.f32 %v2832, %v2865
        %v2898 = vadd.f32 %v2833, %v2866
        %v2899 = vadd.f32 %v2834, %v2867
        %v2900 = vadd.f32 %v2835, %v2868
        %v2901 = vadd.f32 %v2836, %v2869
        %v2902 = vadd.f32 %v2837, %v2870
        %v2903 = vadd.f32 %v2838, %v2871
        %v2904 = vadd.f32 %v2839, %v2872
        %v2905 = vadd.f32 %v2840, %v2873
        %v2906 = vadd.f32 %v2841, %v2874
        %v2907 = vadd.f32 %v2842, %v2875
        %v2908 = vadd.f32 %v2843, %v2876
        %v2909 = vadd.f32 %v2844, %v2877
        %v2910 = vadd.f32 %v2845, %v2878
        %v2911 = vadd.f32 %v2846, %v2879
        %v2912 = vadd.f32 %v2847, %v2880
        %v2913 = vadd.f32 %v2848, %v2881
        %v2914 = vadd.f32 %v2849, %v2882
        %v2915 = vadd.f32 %v2850, %v2883
        %v2916 = vadd.f32 %v2851, %v2884
        %v2917 = vadd.f32 %v2852, %v2885
        %v2918 = vadd.f32 %v2853, %v2886
        %v2919 = vadd.f32 %v2854, %v2887
        %v2920 = vadd.f32 %v2855, %v2888
        %v2921 = vadd.f32 %v2856, %v2889
        %v2922 = vadd.f32 %v2857, %v2890
        %v2923 = vadd.f32 %v2858, %v2891
        %v2924 = vadd.f32 %v2859, %v2892
        %v2925 = vadd.f32 %v2860, %v2893
        %v2926 = vadd.f32 %v2861, %v2894
        %v2927 = vadd.f32 %v2862, %v2895
        %v2928 = vadd.f32 %v2863, %v2896
        %v2929 = vperm.slane %v2447, 2
        %v2930 = vmul.f32 %v2609, %v2929
        %v2931 = vmul.f32 %v2610, %v2929
        %v2932 = vmul.f32 %v2611, %v2929
        %v2933 = vmul.f32 %v2612, %v2929
        %v2934 = vmul.f32 %v2613, %v2929
        %v2935 = vmul.f32 %v2614, %v2929
        %v2936 = vmul.f32 %v2615, %v2929
        %v2937 = vmul.f32 %v2616, %v2929
        %v2938 = vmul.f32 %v2617, %v2929
        %v2939 = vmul.f32 %v2618, %v2929
        %v2940 = vmul.f32 %v2619, %v2929
        %v2941 = vmul.f32 %v2620, %v2929
        %v2942 = vmul.f32 %v2621, %v2929
        %v2943 = vmul.f32 %v2622, %v2929
        %v2944 = vmul.f32 %v2623, %v2929
        %v2945 = vmul.f32 %v2624, %v2929
        %v2946 = vmul.f32 %v2625, %v2929
        %v2947 = vmul.f32 %v2626, %v2929
        %v2948 = vmul.f32 %v2627, %v2929
        %v2949 = vmul.f32 %v2628, %v2929
        %v2950 = vmul.f32 %v2629, %v2929
        %v2951 = vmul.f32 %v2630, %v2929
        %v2952 = vmul.f32 %v2631, %v2929
        %v2953 = vmul.f32 %v2632, %v2929
        %v2954 = vmul.f32 %v2633, %v2929
        %v2955 = vmul.f32 %v2634, %v2929
        %v2956 = vmul.f32 %v2635, %v2929
        %v2957 = vmul.f32 %v2636, %v2929
        %v2958 = vmul.f32 %v2637, %v2929
        %v2959 = vmul.f32 %v2638, %v2929
        %v2960 = vmul.f32 %v2639, %v2929
        %v2961 = vmul.f32 %v2640, %v2929
        %v2962 = vadd.f32 %v2897, %v2930
        %v2963 = vadd.f32 %v2898, %v2931
        %v2964 = vadd.f32 %v2899, %v2932
        %v2965 = vadd.f32 %v2900, %v2933
        %v2966 = vadd.f32 %v2901, %v2934
        %v2967 = vadd.f32 %v2902, %v2935
        %v2968 = vadd.f32 %v2903, %v2936
        %v2969 = vadd.f32 %v2904, %v2937
        %v2970 = vadd.f32 %v2905, %v2938
        %v2971 = vadd.f32 %v2906, %v2939
        %v2972 = vadd.f32 %v2907, %v2940
        %v2973 = vadd.f32 %v2908, %v2941
        %v2974 = vadd.f32 %v2909, %v2942
        %v2975 = vadd.f32 %v2910, %v2943
        %v2976 = vadd.f32 %v2911, %v2944
        %v2977 = vadd.f32 %v2912, %v2945
        %v2978 = vadd.f32 %v2913, %v2946
        %v2979 = vadd.f32 %v2914, %v2947
        %v2980 = vadd.f32 %v2915, %v2948
        %v2981 = vadd.f32 %v2916, %v2949
        %v2982 = vadd.f32 %v2917, %v2950
        %v2983 = vadd.f32 %v2918, %v2951
        %v2984 = vadd.f32 %v2919, %v2952
        %v2985 = vadd.f32 %v2920, %v2953
        %v2986 = vadd.f32 %v2921, %v2954
        %v2987 = vadd.f32 %v2922, %v2955
        %v2988 = vadd.f32 %v2923, %v2956
        %v2989 = vadd.f32 %v2924, %v2957
        %v2990 = vadd.f32 %v2925, %v2958
        %v2991 = vadd.f32 %v2926, %v2959
        %v2992 = vadd.f32 %v2927, %v2960
        %v2993 = vadd.f32 %v2928, %v2961
        %v2994 = vperm.slane %v2448, 0
        %v2995 = vmul.f32 %v2515, %v2994
        %v2996 = vmul.f32 %v2516, %v2994
        %v2997 = vmul.f32 %v2517, %v2994
        %v2998 = vmul.f32 %v2518, %v2994
        %v2999 = vmul.f32 %v2519, %v2994
        %v3000 = vmul.f32 %v2520, %v2994
        %v3001 = vmul.f32 %v2521, %v2994
        %v3002 = vmul.f32 %v2522, %v2994
        %v3003 = vmul.f32 %v2523, %v2994
        %v3004 = vmul.f32 %v2524, %v2994
        %v3005 = vmul.f32 %v2525, %v2994
        %v3006 = vmul.f32 %v2526, %v2994
        %v3007 = vmul.f32 %v2527, %v2994
        %v3008 = vmul.f32 %v2528, %v2994
        %v3009 = vmul.f32 %v2529, %v2994
        %v3010 = vmul.f32 %v2530, %v2994
        %v3011 = vmul.f32 %v2531, %v2994
        %v3012 = vmul.f32 %v2532, %v2994
        %v3013 = vmul.f32 %v2533, %v2994
        %v3014 = vmul.f32 %v2534, %v2994
        %v3015 = vmul.f32 %v2535, %v2994
        %v3016 = vmul.f32 %v2536, %v2994
        %v3017 = vmul.f32 %v2537, %v2994
        %v3018 = vmul.f32 %v2538, %v2994
        %v3019 = vmul.f32 %v2539, %v2994
        %v3020 = vmul.f32 %v2540, %v2994
        %v3021 = vmul.f32 %v2541, %v2994
        %v3022 = vmul.f32 %v2542, %v2994
        %v3023 = vmul.f32 %v2543, %v2994
        %v3024 = vmul.f32 %v2544, %v2994
        %v3025 = vmul.f32 %v2994, 0.0
        %v3026 = vadd.f32 %v2962, %v2995
        %v3027 = vadd.f32 %v2963, %v2996
        %v3028 = vadd.f32 %v2964, %v2997
        %v3029 = vadd.f32 %v2965, %v2998
        %v3030 = vadd.f32 %v2966, %v2999
        %v3031 = vadd.f32 %v2967, %v3000
        %v3032 = vadd.f32 %v2968, %v3001
        %v3033 = vadd.f32 %v2969, %v3002
        %v3034 = vadd.f32 %v2970, %v3003
        %v3035 = vadd.f32 %v2971, %v3004
        %v3036 = vadd.f32 %v2972, %v3005
        %v3037 = vadd.f32 %v2973, %v3006
        %v3038 = vadd.f32 %v2974, %v3007
        %v3039 = vadd.f32 %v2975, %v3008
        %v3040 = vadd.f32 %v2976, %v3009
        %v3041 = vadd.f32 %v2977, %v3010
        %v3042 = vadd.f32 %v2978, %v3011
        %v3043 = vadd.f32 %v2979, %v3012
        %v3044 = vadd.f32 %v2980, %v3013
        %v3045 = vadd.f32 %v2981, %v3014
        %v3046 = vadd.f32 %v2982, %v3015
        %v3047 = vadd.f32 %v2983, %v3016
        %v3048 = vadd.f32 %v2984, %v3017
        %v3049 = vadd.f32 %v2985, %v3018
        %v3050 = vadd.f32 %v2986, %v3019
        %v3051 = vadd.f32 %v2987, %v3020
        %v3052 = vadd.f32 %v2988, %v3021
        %v3053 = vadd.f32 %v2989, %v3022
        %v3054 = vadd.f32 %v2990, %v3023
        %v3055 = vadd.f32 %v2991, %v3024
        %v3056 = vadd.f32 %v2992, %v3025
        %v3057 = vadd.f32 %v2993, %v3025
        %v3058 = vperm.slane %v2448, 1
        %v3059 = vmul.f32 %v2416, %v3058
        %v3060 = vmul.f32 %v2417, %v3058
        %v3061 = vmul.f32 %v2418, %v3058
        %v3062 = vmul.f32 %v2419, %v3058
        %v3063 = vmul.f32 %v2420, %v3058
        %v3064 = vmul.f32 %v2421, %v3058
        %v3065 = vmul.f32 %v2422, %v3058
        %v3066 = vmul.f32 %v2423, %v3058
        %v3067 = vmul.f32 %v2424, %v3058
        %v3068 = vmul.f32 %v2425, %v3058
        %v3069 = vmul.f32 %v2426, %v3058
        %v3070 = vmul.f32 %v2427, %v3058
        %v3071 = vmul.f32 %v2428, %v3058
        %v3072 = vmul.f32 %v2429, %v3058
        %v3073 = vmul.f32 %v2430, %v3058
        %v3074 = vmul.f32 %v2431, %v3058
        %v3075 = vmul.f32 %v2432, %v3058
        %v3076 = vmul.f32 %v2433, %v3058
        %v3077 = vmul.f32 %v2434, %v3058
        %v3078 = vmul.f32 %v2435, %v3058
        %v3079 = vmul.f32 %v2436, %v3058
        %v3080 = vmul.f32 %v2437, %v3058
        %v3081 = vmul.f32 %v2438, %v3058
        %v3082 = vmul.f32 %v2439, %v3058
        %v3083 = vmul.f32 %v2440, %v3058
        %v3084 = vmul.f32 %v2441, %v3058
        %v3085 = vmul.f32 %v2442, %v3058
        %v3086 = vmul.f32 %v2443, %v3058
        %v3087 = vmul.f32 %v2444, %v3058
        %v3088 = vmul.f32 %v2445, %v3058
        %v3089 = vmul.f32 %v3058, 0.0
        %v3090 = vadd.f32 %v3026, %v3059
        %v3091 = vadd.f32 %v3027, %v3060
        %v3092 = vadd.f32 %v3028, %v3061
        %v3093 = vadd.f32 %v3029, %v3062
        %v3094 = vadd.f32 %v3030, %v3063
        %v3095 = vadd.f32 %v3031, %v3064
        %v3096 = vadd.f32 %v3032, %v3065
        %v3097 = vadd.f32 %v3033, %v3066
        %v3098 = vadd.f32 %v3034, %v3067
        %v3099 = vadd.f32 %v3035, %v3068
        %v3100 = vadd.f32 %v3036, %v3069
        %v3101 = vadd.f32 %v3037, %v3070
        %v3102 = vadd.f32 %v3038, %v3071
        %v3103 = vadd.f32 %v3039, %v3072
        %v3104 = vadd.f32 %v3040, %v3073
        %v3105 = vadd.f32 %v3041, %v3074
        %v3106 = vadd.f32 %v3042, %v3075
        %v3107 = vadd.f32 %v3043, %v3076
        %v3108 = vadd.f32 %v3044, %v3077
        %v3109 = vadd.f32 %v3045, %v3078
        %v3110 = vadd.f32 %v3046, %v3079
        %v3111 = vadd.f32 %v3047, %v3080
        %v3112 = vadd.f32 %v3048, %v3081
        %v3113 = vadd.f32 %v3049, %v3082
        %v3114 = vadd.f32 %v3050, %v3083
        %v3115 = vadd.f32 %v3051, %v3084
        %v3116 = vadd.f32 %v3052, %v3085
        %v3117 = vadd.f32 %v3053, %v3086
        %v3118 = vadd.f32 %v3054, %v3087
        %v3119 = vadd.f32 %v3055, %v3088
        %v3120 = vadd.f32 %v3056, %v3089
        %v3121 = vadd.f32 %v3057, %v3089
        %v3122 = vperm.slane %v2448, 2
        %v3123 = vmul.f32 %v2611, %v3122
        %v3124 = vmul.f32 %v2612, %v3122
        %v3125 = vmul.f32 %v2613, %v3122
        %v3126 = vmul.f32 %v2614, %v3122
        %v3127 = vmul.f32 %v2615, %v3122
        %v3128 = vmul.f32 %v2616, %v3122
        %v3129 = vmul.f32 %v2617, %v3122
        %v3130 = vmul.f32 %v2618, %v3122
        %v3131 = vmul.f32 %v2619, %v3122
        %v3132 = vmul.f32 %v2620, %v3122
        %v3133 = vmul.f32 %v2621, %v3122
        %v3134 = vmul.f32 %v2622, %v3122
        %v3135 = vmul.f32 %v2623, %v3122
        %v3136 = vmul.f32 %v2624, %v3122
        %v3137 = vmul.f32 %v2625, %v3122
        %v3138 = vmul.f32 %v2626, %v3122
        %v3139 = vmul.f32 %v2627, %v3122
        %v3140 = vmul.f32 %v2628, %v3122
        %v3141 = vmul.f32 %v2629, %v3122
        %v3142 = vmul.f32 %v2630, %v3122
        %v3143 = vmul.f32 %v2631, %v3122
        %v3144 = vmul.f32 %v2632, %v3122
        %v3145 = vmul.f32 %v2633, %v3122
        %v3146 = vmul.f32 %v2634, %v3122
        %v3147 = vmul.f32 %v2635, %v3122
        %v3148 = vmul.f32 %v2636, %v3122
        %v3149 = vmul.f32 %v2637, %v3122
        %v3150 = vmul.f32 %v2638, %v3122
        %v3151 = vmul.f32 %v2639, %v3122
        %v3152 = vmul.f32 %v2640, %v3122
        %v3153 = vmul.f32 %v3122, 0.0
        %v3154 = vadd.f32 %v3090, %v3123
        %v3155 = vadd.f32 %v3091, %v3124
        %v3156 = vadd.f32 %v3092, %v3125
        %v3157 = vadd.f32 %v3093, %v3126
        %v3158 = vadd.f32 %v3094, %v3127
        %v3159 = vadd.f32 %v3095, %v3128
        %v3160 = vadd.f32 %v3096, %v3129
        %v3161 = vadd.f32 %v3097, %v3130
        %v3162 = vadd.f32 %v3098, %v3131
        %v3163 = vadd.f32 %v3099, %v3132
        %v3164 = vadd.f32 %v3100, %v3133
        %v3165 = vadd.f32 %v3101, %v3134
        %v3166 = vadd.f32 %v3102, %v3135
        %v3167 = vadd.f32 %v3103, %v3136
        %v3168 = vadd.f32 %v3104, %v3137
        %v3169 = vadd.f32 %v3105, %v3138
        %v3170 = vadd.f32 %v3106, %v3139
        %v3171 = vadd.f32 %v3107, %v3140
        %v3172 = vadd.f32 %v3108, %v3141
        %v3173 = vadd.f32 %v3109, %v3142
        %v3174 = vadd.f32 %v3110, %v3143
        %v3175 = vadd.f32 %v3111, %v3144
        %v3176 = vadd.f32 %v3112, %v3145
        %v3177 = vadd.f32 %v3113, %v3146
        %v3178 = vadd.f32 %v3114, %v3147
        %v3179 = vadd.f32 %v3115, %v3148
        %v3180 = vadd.f32 %v3116, %v3149
        %v3181 = vadd.f32 %v3117, %v3150
        %v3182 = vadd.f32 %v3118, %v3151
        %v3183 = vadd.f32 %v3119, %v3152
        %v3184 = vadd.f32 %v3120, %v3153
        %v3185 = vadd.f32 %v3121, %v3153
        %v3186 = vpack.c.bf16 %v3154, %v3154
        %v3187 = vpack.c.bf16 %v3155, %v3155
        %v3188 = vpack.c.bf16 %v3156, %v3156
        %v3189 = vpack.c.bf16 %v3157, %v3157
        %v3190 = vpack.c.bf16 %v3158, %v3158
        %v3191 = vpack.c.bf16 %v3159, %v3159
        %v3192 = vpack.c.bf16 %v3160, %v3160
        %v3193 = vpack.c.bf16 %v3161, %v3161
        %v3194 = vpack.c.bf16 %v3162, %v3162
        %v3195 = vpack.c.bf16 %v3163, %v3163
        %v3196 = vpack.c.bf16 %v3164, %v3164
        %v3197 = vpack.c.bf16 %v3165, %v3165
        %v3198 = vpack.c.bf16 %v3166, %v3166
        %v3199 = vpack.c.bf16 %v3167, %v3167
        %v3200 = vpack.c.bf16 %v3168, %v3168
        %v3201 = vpack.c.bf16 %v3169, %v3169
        %v3202 = vpack.c.bf16 %v3170, %v3170
        %v3203 = vpack.c.bf16 %v3171, %v3171
        %v3204 = vpack.c.bf16 %v3172, %v3172
        %v3205 = vpack.c.bf16 %v3173, %v3173
        %v3206 = vpack.c.bf16 %v3174, %v3174
        %v3207 = vpack.c.bf16 %v3175, %v3175
        %v3208 = vpack.c.bf16 %v3176, %v3176
        %v3209 = vpack.c.bf16 %v3177, %v3177
        %v3210 = vpack.c.bf16 %v3178, %v3178
        %v3211 = vpack.c.bf16 %v3179, %v3179
        %v3212 = vpack.c.bf16 %v3180, %v3180
        %v3213 = vpack.c.bf16 %v3181, %v3181
        %v3214 = vpack.c.bf16 %v3182, %v3182
        %v3215 = vpack.c.bf16 %v3183, %v3183
        %v3216 = vpack.c.bf16 %v3184, %v3184
        %v3217 = vpack.c.bf16 %v3185, %v3185
        %v3218 = vpack.c.bf16 %v479, %v479
        %v3219 = vpack.c.bf16 %v480, %v480
        %v3220 = vpack.c.bf16 %v481, %v481
        %v3221 = vpack.c.bf16 %v482, %v482
        %v3222 = vpack.c.bf16 %v483, %v483
        %v3223 = vpack.c.bf16 %v484, %v484
        %v3224 = vpack.c.bf16 %v485, %v485
        %v3225 = vpack.c.bf16 %v486, %v486
        %v3226 = vpack.c.bf16 %v487, %v487
        %v3227 = vpack.c.bf16 %v488, %v488
        %v3228 = vpack.c.bf16 %v489, %v489
        %v3229 = vpack.c.bf16 %v490, %v490
        %v3230 = vpack.c.bf16 %v491, %v491
        %v3231 = vpack.c.bf16 %v492, %v492
        %v3232 = vpack.c.bf16 %v493, %v493
        %v3233 = vpack.c.bf16 %v494, %v494
        %v3234 = vpack.c.bf16 %v495, %v495
        %v3235 = vpack.c.bf16 %v496, %v496
        %v3236 = vpack.c.bf16 %v497, %v497
        %v3237 = vpack.c.bf16 %v498, %v498
        %v3238 = vpack.c.bf16 %v499, %v499
        %v3239 = vpack.c.bf16 %v500, %v500
        %v3240 = vpack.c.bf16 %v501, %v501
        %v3241 = vpack.c.bf16 %v502, %v502
        %v3242 = vpack.c.bf16 %v503, %v503
        %v3243 = vpack.c.bf16 %v504, %v504
        %v3244 = vpack.c.bf16 %v505, %v505
        %v3245 = vpack.c.bf16 %v506, %v506
        %v3246 = vpack.c.bf16 %v507, %v507
        %v3247 = vpack.c.bf16 %v508, %v508
        %v3248 = vpack.c.bf16 %v509, %v509
        %v3249 = vpack.c.bf16 %v510, %v510
        %v3282 = vunpack.c.l.b16 %v3186
        %v3283 = vunpack.c.l.b16 %v3187
        %v3284 = vunpack.c.l.b16 %v3188
        %v3285 = vunpack.c.l.b16 %v3189
        %v3286 = vunpack.c.l.b16 %v3190
        %v3287 = vunpack.c.l.b16 %v3191
        %v3288 = vunpack.c.l.b16 %v3192
        %v3289 = vunpack.c.l.b16 %v3193
        %v3290 = vunpack.c.l.b16 %v3194
        %v3291 = vunpack.c.l.b16 %v3195
        %v3292 = vunpack.c.l.b16 %v3196
        %v3293 = vunpack.c.l.b16 %v3197
        %v3294 = vunpack.c.l.b16 %v3198
        %v3295 = vunpack.c.l.b16 %v3199
        %v3296 = vunpack.c.l.b16 %v3200
        %v3297 = vunpack.c.l.b16 %v3201
        %v3298 = vunpack.c.l.b16 %v3202
        %v3299 = vunpack.c.l.b16 %v3203
        %v3300 = vunpack.c.l.b16 %v3204
        %v3301 = vunpack.c.l.b16 %v3205
        %v3302 = vunpack.c.l.b16 %v3206
        %v3303 = vunpack.c.l.b16 %v3207
        %v3304 = vunpack.c.l.b16 %v3208
        %v3305 = vunpack.c.l.b16 %v3209
        %v3306 = vunpack.c.l.b16 %v3210
        %v3307 = vunpack.c.l.b16 %v3211
        %v3308 = vunpack.c.l.b16 %v3212
        %v3309 = vunpack.c.l.b16 %v3213
        %v3310 = vunpack.c.l.b16 %v3214
        %v3311 = vunpack.c.l.b16 %v3215
        %v3312 = vunpack.c.l.b16 %v3216
        %v3313 = vunpack.c.l.b16 %v3217
        %v3314 = vpack.c.b16 %v3283, %v3282
        %v3315 = vpack.c.b16 %v3285, %v3284
        %v3316 = vpack.c.b16 %v3287, %v3286
        %v3317 = vpack.c.b16 %v3289, %v3288
        %v3318 = vpack.c.b16 %v3291, %v3290
        %v3319 = vpack.c.b16 %v3293, %v3292
        %v3320 = vpack.c.b16 %v3295, %v3294
        %v3321 = vpack.c.b16 %v3297, %v3296
        %v3322 = vpack.c.b16 %v3299, %v3298
        %v3323 = vpack.c.b16 %v3301, %v3300
        %v3324 = vpack.c.b16 %v3303, %v3302
        %v3325 = vpack.c.b16 %v3305, %v3304
        %v3326 = vpack.c.b16 %v3307, %v3306
        %v3327 = vpack.c.b16 %v3309, %v3308
        %v3328 = vpack.c.b16 %v3311, %v3310
        %v3329 = vpack.c.b16 %v3313, %v3312
        %v3378 = vunpack.c.l.b16 %v3218
        %v3379 = vunpack.c.l.b16 %v3219
        %v3380 = vunpack.c.l.b16 %v3220
        %v3381 = vunpack.c.l.b16 %v3221
        %v3382 = vunpack.c.l.b16 %v3222
        %v3383 = vunpack.c.l.b16 %v3223
        %v3384 = vunpack.c.l.b16 %v3224
        %v3385 = vunpack.c.l.b16 %v3225
        %v3386 = vunpack.c.l.b16 %v3226
        %v3387 = vunpack.c.l.b16 %v3227
        %v3388 = vunpack.c.l.b16 %v3228
        %v3389 = vunpack.c.l.b16 %v3229
        %v3390 = vunpack.c.l.b16 %v3230
        %v3391 = vunpack.c.l.b16 %v3231
        %v3392 = vunpack.c.l.b16 %v3232
        %v3393 = vunpack.c.l.b16 %v3233
        %v3394 = vunpack.c.l.b16 %v3234
        %v3395 = vunpack.c.l.b16 %v3235
        %v3396 = vunpack.c.l.b16 %v3236
        %v3397 = vunpack.c.l.b16 %v3237
        %v3398 = vunpack.c.l.b16 %v3238
        %v3399 = vunpack.c.l.b16 %v3239
        %v3400 = vunpack.c.l.b16 %v3240
        %v3401 = vunpack.c.l.b16 %v3241
        %v3402 = vunpack.c.l.b16 %v3242
        %v3403 = vunpack.c.l.b16 %v3243
        %v3404 = vunpack.c.l.b16 %v3244
        %v3405 = vunpack.c.l.b16 %v3245
        %v3406 = vunpack.c.l.b16 %v3246
        %v3407 = vunpack.c.l.b16 %v3247
        %v3408 = vunpack.c.l.b16 %v3248
        %v3409 = vunpack.c.l.b16 %v3249
        %v3410 = vpack.c.b16 %v3379, %v3378
        %v3411 = vpack.c.b16 %v3381, %v3380
        %v3412 = vpack.c.b16 %v3383, %v3382
        %v3413 = vpack.c.b16 %v3385, %v3384
        %v3414 = vpack.c.b16 %v3387, %v3386
        %v3415 = vpack.c.b16 %v3389, %v3388
        %v3416 = vpack.c.b16 %v3391, %v3390
        %v3417 = vpack.c.b16 %v3393, %v3392
        %v3418 = vpack.c.b16 %v3395, %v3394
        %v3419 = vpack.c.b16 %v3397, %v3396
        %v3420 = vpack.c.b16 %v3399, %v3398
        %v3421 = vpack.c.b16 %v3401, %v3400
        %v3422 = vpack.c.b16 %v3403, %v3402
        %v3423 = vpack.c.b16 %v3405, %v3404
        %v3424 = vpack.c.b16 %v3407, %v3406
        %v3425 = vpack.c.b16 %v3409, %v3408
        %v3442 = vld [vmem:[#allocation13] sm:$0xf]
        %v3443 = vld [vmem:[#allocation13 + $0x4] sm:$0xf]
        %v3444 = vld [vmem:[#allocation13 + $0x8] sm:$0xf]
        %v3445 = vld [vmem:[#allocation13 + $0xc] sm:$0xf]
        %v3446 = vld [vmem:[#allocation13 + $0x10] sm:$0xf]
        %v3447 = vld [vmem:[#allocation13 + $0x14] sm:$0xf]
        %v3448 = vld [vmem:[#allocation13 + $0x18] sm:$0xf]
        %v3449 = vld [vmem:[#allocation13 + $0x1c] sm:$0xf]
        %v3450 = vld [vmem:[#allocation13 + $0x20] sm:$0xf]
        %v3451 = vld [vmem:[#allocation13 + $0x24] sm:$0xf]
        %v3452 = vld [vmem:[#allocation13 + $0x28] sm:$0xf]
        %v3453 = vld [vmem:[#allocation13 + $0x2c] sm:$0xf]
        %v3454 = vld [vmem:[#allocation13 + $0x30] sm:$0xf]
        %v3455 = vld [vmem:[#allocation13 + $0x34] sm:$0xf]
        %v3456 = vld [vmem:[#allocation13 + $0x38] sm:$0xf]
        %v3457 = vld [vmem:[#allocation13 + $0x3c] sm:$0xf]
        %v3458 = vld [vmem:[#allocation13 + $0x40] sm:$0xf]
        %v3459 = vld [vmem:[#allocation13 + $0x44] sm:$0xf]
        %v3460 = vld [vmem:[#allocation13 + $0x48] sm:$0xf]
        %v3461 = vld [vmem:[#allocation13 + $0x4c] sm:$0xf]
        %v3462 = vld [vmem:[#allocation13 + $0x50] sm:$0xf]
        %v3463 = vld [vmem:[#allocation13 + $0x54] sm:$0xf]
        %v3464 = vld [vmem:[#allocation13 + $0x58] sm:$0xf]
        %v3465 = vld [vmem:[#allocation13 + $0x5c] sm:$0xf]
        %v3466 = vld [vmem:[#allocation13 + $0x60] sm:$0xf]
        %v3467 = vld [vmem:[#allocation13 + $0x64] sm:$0xf]
        %v3468 = vld [vmem:[#allocation13 + $0x68] sm:$0xf]
        %v3469 = vld [vmem:[#allocation13 + $0x6c] sm:$0xf]
        %v3470 = vld [vmem:[#allocation13 + $0x70] sm:$0xf]
        %v3471 = vld [vmem:[#allocation13 + $0x74] sm:$0xf]
        %v3472 = vld [vmem:[#allocation13 + $0x78] sm:$0xf]
        %v3473 = vld [vmem:[#allocation13 + $0x7c] sm:$0xf]
        %v3474 = vld [vmem:[%s9] sm:$0x1]
        %v3476 = vperm.slane %v3474, 0
        %v3510 = vunpack.c.l.b16 %v3442
        %v3511 = vunpack.c.l.b16 %v3443
        %v3512 = vunpack.c.l.b16 %v3444
        %v3513 = vunpack.c.l.b16 %v3445
        %v3514 = vunpack.c.l.b16 %v3446
        %v3515 = vunpack.c.l.b16 %v3447
        %v3516 = vunpack.c.l.b16 %v3448
        %v3517 = vunpack.c.l.b16 %v3449
        %v3518 = vunpack.c.l.b16 %v3450
        %v3519 = vunpack.c.l.b16 %v3451
        %v3520 = vunpack.c.l.b16 %v3452
        %v3521 = vunpack.c.l.b16 %v3453
        %v3522 = vunpack.c.l.b16 %v3454
        %v3523 = vunpack.c.l.b16 %v3455
        %v3524 = vunpack.c.l.b16 %v3456
        %v3525 = vunpack.c.l.b16 %v3457
        %v3526 = vunpack.c.l.b16 %v3458
        %v3527 = vunpack.c.l.b16 %v3459
        %v3528 = vunpack.c.l.b16 %v3460
        %v3529 = vunpack.c.l.b16 %v3461
        %v3530 = vunpack.c.l.b16 %v3462
        %v3531 = vunpack.c.l.b16 %v3463
        %v3532 = vunpack.c.l.b16 %v3464
        %v3533 = vunpack.c.l.b16 %v3465
        %v3534 = vunpack.c.l.b16 %v3466
        %v3535 = vunpack.c.l.b16 %v3467
        %v3536 = vunpack.c.l.b16 %v3468
        %v3537 = vunpack.c.l.b16 %v3469
        %v3538 = vunpack.c.l.b16 %v3470
        %v3539 = vunpack.c.l.b16 %v3471
        %v3540 = vunpack.c.l.b16 %v3472
        %v3541 = vunpack.c.l.b16 %v3473
        %v3542 = vpack.c.b16 %v3511, %v3510
        %v3543 = vpack.c.b16 %v3513, %v3512
        %v3544 = vpack.c.b16 %v3515, %v3514
        %v3545 = vpack.c.b16 %v3517, %v3516
        %v3546 = vpack.c.b16 %v3519, %v3518
        %v3547 = vpack.c.b16 %v3521, %v3520
        %v3548 = vpack.c.b16 %v3523, %v3522
        %v3549 = vpack.c.b16 %v3525, %v3524
        %v3550 = vpack.c.b16 %v3527, %v3526
        %v3551 = vpack.c.b16 %v3529, %v3528
        %v3552 = vpack.c.b16 %v3531, %v3530
        %v3553 = vpack.c.b16 %v3533, %v3532
        %v3554 = vpack.c.b16 %v3535, %v3534
        %v3555 = vpack.c.b16 %v3537, %v3536
        %v3556 = vpack.c.b16 %v3539, %v3538
        %v3557 = vpack.c.b16 %v3541, %v3540
        %3574 = vmatpush.bf16.msra.mxu0 %v3549
        %3575 = vmatpush.bf16.msra.mxu0 %v3548
        %3576 = vmatpush.bf16.msra.mxu0 %v3547
        %3577 = vmatpush.bf16.msra.mxu0 %v3546
        %3578 = vmatpush.bf16.msra.mxu0 %v3545
        %3579 = vmatpush.bf16.msra.mxu0 %v3544
        %3580 = vmatpush.bf16.msra.mxu0 %v3543
        %3581 = vmatpush.bf16.msra.mxu0 %v3542
        %3582 = vmatmul.bf16.gmra.mxu0 %v3314
        %v3583 = vpop.f32.mrf.mxu0
        %v3584 = vadd.f32 %v3476, %v3583
        %v3585 = vpop.f32.mrf.mxu0
        %v3586 = vadd.f32 %v3476, %v3585
        %3587 = vmatmul.bf16.gmra.mxu0 %v3315
        %v3588 = vpop.f32.mrf.mxu0
        %v3589 = vadd.f32 %v3476, %v3588
        %v3590 = vpop.f32.mrf.mxu0
        %v3591 = vadd.f32 %v3476, %v3590
        %3592 = vmatmul.bf16.gmra.mxu0 %v3316
        %v3593 = vpop.f32.mrf.mxu0
        %v3594 = vadd.f32 %v3476, %v3593
        %v3595 = vpop.f32.mrf.mxu0
        %v3596 = vadd.f32 %v3476, %v3595
        %3597 = vmatmul.bf16.gmra.mxu0 %v3317
        %v3598 = vpop.f32.mrf.mxu0
        %v3599 = vadd.f32 %v3476, %v3598
        %v3600 = vpop.f32.mrf.mxu0
        %v3601 = vadd.f32 %v3476, %v3600
        %3602 = vmatmul.bf16.gmra.mxu0 %v3318
        %v3603 = vpop.f32.mrf.mxu0
        %v3604 = vadd.f32 %v3476, %v3603
        %v3605 = vpop.f32.mrf.mxu0
        %v3606 = vadd.f32 %v3476, %v3605
        %3607 = vmatmul.bf16.gmra.mxu0 %v3319
        %v3608 = vpop.f32.mrf.mxu0
        %v3609 = vadd.f32 %v3476, %v3608
        %v3610 = vpop.f32.mrf.mxu0
        %v3611 = vadd.f32 %v3476, %v3610
        %3612 = vmatmul.bf16.gmra.mxu0 %v3320
        %v3613 = vpop.f32.mrf.mxu0
        %v3614 = vadd.f32 %v3476, %v3613
        %v3615 = vpop.f32.mrf.mxu0
        %v3616 = vadd.f32 %v3476, %v3615
        %3617 = vmatmul.bf16.gmra.mxu0 %v3321
        %v3618 = vpop.f32.mrf.mxu0
        %v3619 = vadd.f32 %v3476, %v3618
        %v3620 = vpop.f32.mrf.mxu0
        %v3621 = vadd.f32 %v3476, %v3620
        %3622 = vmatmul.bf16.gmra.mxu0 %v3322
        %v3623 = vpop.f32.mrf.mxu0
        %v3624 = vadd.f32 %v3476, %v3623
        %v3625 = vpop.f32.mrf.mxu0
        %v3626 = vadd.f32 %v3476, %v3625
        %3627 = vmatmul.bf16.gmra.mxu0 %v3323
        %v3628 = vpop.f32.mrf.mxu0
        %v3629 = vadd.f32 %v3476, %v3628
        %v3630 = vpop.f32.mrf.mxu0
        %v3631 = vadd.f32 %v3476, %v3630
        %3632 = vmatmul.bf16.gmra.mxu0 %v3324
        %v3633 = vpop.f32.mrf.mxu0
        %v3634 = vadd.f32 %v3476, %v3633
        %v3635 = vpop.f32.mrf.mxu0
        %v3636 = vadd.f32 %v3476, %v3635
        %3637 = vmatmul.bf16.gmra.mxu0 %v3325
        %v3638 = vpop.f32.mrf.mxu0
        %v3639 = vadd.f32 %v3476, %v3638
        %v3640 = vpop.f32.mrf.mxu0
        %v3641 = vadd.f32 %v3476, %v3640
        %3642 = vmatmul.bf16.gmra.mxu0 %v3326
        %v3643 = vpop.f32.mrf.mxu0
        %v3644 = vadd.f32 %v3476, %v3643
        %v3645 = vpop.f32.mrf.mxu0
        %v3646 = vadd.f32 %v3476, %v3645
        %3647 = vmatmul.bf16.gmra.mxu0 %v3327
        %v3648 = vpop.f32.mrf.mxu0
        %v3649 = vadd.f32 %v3476, %v3648
        %v3650 = vpop.f32.mrf.mxu0
        %v3651 = vadd.f32 %v3476, %v3650
        %3652 = vmatmul.bf16.gmra.mxu0 %v3328
        %v3653 = vpop.f32.mrf.mxu0
        %v3654 = vadd.f32 %v3476, %v3653
        %v3655 = vpop.f32.mrf.mxu0
        %v3656 = vadd.f32 %v3476, %v3655
        %3657 = vmatmul.bf16.gmra.mxu0 %v3329
        %v3658 = vpop.f32.mrf.mxu0
        %v3659 = vadd.f32 %v3476, %v3658
        %v3660 = vpop.f32.mrf.mxu0
        %v3661 = vadd.f32 %v3476, %v3660
        %3662 = vdwg.mxu0
        %3663 = vmatpush.bf16.msra.mxu0 %v3557
        %3664 = vmatpush.bf16.msra.mxu0 %v3556
        %3665 = vmatpush.bf16.msra.mxu0 %v3555
        %3666 = vmatpush.bf16.msra.mxu0 %v3554
        %3667 = vmatpush.bf16.msra.mxu0 %v3553
        %3668 = vmatpush.bf16.msra.mxu0 %v3552
        %3669 = vmatpush.bf16.msra.mxu0 %v3551
        %3670 = vmatpush.bf16.msra.mxu0 %v3550
        %3671 = vmatmul.bf16.gmra.mxu0 %v3410
        %v3672 = vpop.f32.mrf.mxu0
        %v3673 = vadd.f32 %v3584, %v3672
        %v3674 = vpop.f32.mrf.mxu0
        %v3675 = vadd.f32 %v3586, %v3674
        %3676 = vmatmul.bf16.gmra.mxu0 %v3411
        %v3677 = vpop.f32.mrf.mxu0
        %v3678 = vadd.f32 %v3589, %v3677
        %v3679 = vpop.f32.mrf.mxu0
        %v3680 = vadd.f32 %v3591, %v3679
        %3681 = vmatmul.bf16.gmra.mxu0 %v3412
        %v3682 = vpop.f32.mrf.mxu0
        %v3683 = vadd.f32 %v3594, %v3682
        %v3684 = vpop.f32.mrf.mxu0
        %v3685 = vadd.f32 %v3596, %v3684
        %3686 = vmatmul.bf16.gmra.mxu0 %v3413
        %v3687 = vpop.f32.mrf.mxu0
        %v3688 = vadd.f32 %v3599, %v3687
        %v3689 = vpop.f32.mrf.mxu0
        %v3690 = vadd.f32 %v3601, %v3689
        %3691 = vmatmul.bf16.gmra.mxu0 %v3414
        %v3692 = vpop.f32.mrf.mxu0
        %v3693 = vadd.f32 %v3604, %v3692
        %v3694 = vpop.f32.mrf.mxu0
        %v3695 = vadd.f32 %v3606, %v3694
        %3696 = vmatmul.bf16.gmra.mxu0 %v3415
        %v3697 = vpop.f32.mrf.mxu0
        %v3698 = vadd.f32 %v3609, %v3697
        %v3699 = vpop.f32.mrf.mxu0
        %v3700 = vadd.f32 %v3611, %v3699
        %3701 = vmatmul.bf16.gmra.mxu0 %v3416
        %v3702 = vpop.f32.mrf.mxu0
        %v3703 = vadd.f32 %v3614, %v3702
        %v3704 = vpop.f32.mrf.mxu0
        %v3705 = vadd.f32 %v3616, %v3704
        %3706 = vmatmul.bf16.gmra.mxu0 %v3417
        %v3707 = vpop.f32.mrf.mxu0
        %v3708 = vadd.f32 %v3619, %v3707
        %v3709 = vpop.f32.mrf.mxu0
        %v3710 = vadd.f32 %v3621, %v3709
        %3711 = vmatmul.bf16.gmra.mxu0 %v3418
        %v3712 = vpop.f32.mrf.mxu0
        %v3713 = vadd.f32 %v3624, %v3712
        %v3714 = vpop.f32.mrf.mxu0
        %v3715 = vadd.f32 %v3626, %v3714
        %3716 = vmatmul.bf16.gmra.mxu0 %v3419
        %v3717 = vpop.f32.mrf.mxu0
        %v3718 = vadd.f32 %v3629, %v3717
        %v3719 = vpop.f32.mrf.mxu0
        %v3720 = vadd.f32 %v3631, %v3719
        %3721 = vmatmul.bf16.gmra.mxu0 %v3420
        %v3722 = vpop.f32.mrf.mxu0
        %v3723 = vadd.f32 %v3634, %v3722
        %v3724 = vpop.f32.mrf.mxu0
        %v3725 = vadd.f32 %v3636, %v3724
        %3726 = vmatmul.bf16.gmra.mxu0 %v3421
        %v3727 = vpop.f32.mrf.mxu0
        %v3728 = vadd.f32 %v3639, %v3727
        %v3729 = vpop.f32.mrf.mxu0
        %v3730 = vadd.f32 %v3641, %v3729
        %3731 = vmatmul.bf16.gmra.mxu0 %v3422
        %v3732 = vpop.f32.mrf.mxu0
        %v3733 = vadd.f32 %v3644, %v3732
        %v3734 = vpop.f32.mrf.mxu0
        %v3735 = vadd.f32 %v3646, %v3734
        %3736 = vmatmul.bf16.gmra.mxu0 %v3423
        %v3737 = vpop.f32.mrf.mxu0
        %v3738 = vadd.f32 %v3649, %v3737
        %v3739 = vpop.f32.mrf.mxu0
        %v3740 = vadd.f32 %v3651, %v3739
        %3741 = vmatmul.bf16.gmra.mxu0 %v3424
        %v3742 = vpop.f32.mrf.mxu0
        %v3743 = vadd.f32 %v3654, %v3742
        %v3744 = vpop.f32.mrf.mxu0
        %v3745 = vadd.f32 %v3656, %v3744
        %3746 = vmatmul.bf16.gmra.mxu0 %v3425
        %v3747 = vpop.f32.mrf.mxu0
        %v3748 = vadd.f32 %v3659, %v3747
        %v3749 = vpop.f32.mrf.mxu0
        %v3750 = vadd.f32 %v3661, %v3749
        %3751 = vdwg.mxu0
        %3752 = vst [vmem:[%s478] sm:$0xff] %v3673
        %3753 = vst [vmem:[%s478 + $0x8] sm:$0xff] %v3675
        %3754 = vst [vmem:[%s478 + $0x10] sm:$0xff] %v3678
        %3755 = vst [vmem:[%s478 + $0x18] sm:$0xff] %v3680
        %3756 = vst [vmem:[%s478 + $0x20] sm:$0xff] %v3683
        %3757 = vst [vmem:[%s478 + $0x28] sm:$0xff] %v3685
        %3758 = vst [vmem:[%s478 + $0x30] sm:$0xff] %v3688
        %3759 = vst [vmem:[%s478 + $0x38] sm:$0xff] %v3690
        %3760 = vst [vmem:[%s478 + $0x40] sm:$0xff] %v3693
        %3761 = vst [vmem:[%s478 + $0x48] sm:$0xff] %v3695
        %3762 = vst [vmem:[%s478 + $0x50] sm:$0xff] %v3698
        %3763 = vst [vmem:[%s478 + $0x58] sm:$0xff] %v3700
        %3764 = vst [vmem:[%s478 + $0x60] sm:$0xff] %v3703
        %3765 = vst [vmem:[%s478 + $0x68] sm:$0xff] %v3705
        %3766 = vst [vmem:[%s478 + $0x70] sm:$0xff] %v3708
        %3767 = vst [vmem:[%s478 + $0x78] sm:$0xff] %v3710
        %3768 = vst [vmem:[%s478 + $0x80] sm:$0xff] %v3713
        %3769 = vst [vmem:[%s478 + $0x88] sm:$0xff] %v3715
        %3770 = vst [vmem:[%s478 + $0x90] sm:$0xff] %v3718
        %3771 = vst [vmem:[%s478 + $0x98] sm:$0xff] %v3720
        %3772 = vst [vmem:[%s478 + $0xa0] sm:$0xff] %v3723
        %3773 = vst [vmem:[%s478 + $0xa8] sm:$0xff] %v3725
        %3774 = vst [vmem:[%s478 + $0xb0] sm:$0xff] %v3728
        %3775 = vst [vmem:[%s478 + $0xb8] sm:$0xff] %v3730
        %3776 = vst [vmem:[%s478 + $0xc0] sm:$0xff] %v3733
        %3777 = vst [vmem:[%s478 + $0xc8] sm:$0xff] %v3735
        %3778 = vst [vmem:[%s478 + $0xd0] sm:$0xff] %v3738
        %3779 = vst [vmem:[%s478 + $0xd8] sm:$0xff] %v3740
        %3780 = vst [vmem:[%s478 + $0xe0] sm:$0xff] %v3743
        %3781 = vst [vmem:[%s478 + $0xe8] sm:$0xff] %v3745
        %3782 = vst [vmem:[%s478 + $0xf0] sm:$0xff] %v3748
        %3783 = vst [vmem:[%s478 + $0xf8] sm:$0xff] %v3750
        %s3784 = sand.u32 %s253, 1
        %s3785 = scalar_lea.sflag [#allocation4], %s3784
        %s3786 = sand.u32 %s253, 1
        %s3787 = smul.addr %s3786, 256
        %s3788 = scalar_lea.vmem [#allocation14], %s3787
        // Predicated region
        $region89: #{tpu_custom_call.1} parent=59 // pred_check
          %p3789 = pneg %p263
        $region90: #{tpu_custom_call.1} parent=59 // pred_check_branch
          %3791 = sbr.rel (%p3789) target = $region92
        $region91: #{tpu_custom_call.1} parent=59 // pred_region
          %3793 = vsyncadd %s3785, 0
          %s3794 = smul.addr %s30, 32
          %s3795 = smul.addr %s3794, 8
          %s3796 = scalar_lea.hbm %s10, %s3795
          %s3797 = sshll.u32 %s3788, 4
          %s3798 = int_to_ptr.vmem [resolvable:$true] %s3797
          %s3799 = sshll.u32 %s3796, 4
          %s3800 = int_to_ptr.hbm [resolvable:$true] %s3799
          %3805 = dma.vmem_to_hbm [thread:$0]  %s3798, 4096, %s3800, %s3785, 128, 128, 8
        $region92: #{tpu_custom_call.1} parent=59 // pred_fallthru
          _
      $region60: #{tpu_custom_call.1} parent=5 // pred_fallthru
        _
      %p3806 = scmp.le.s32.totalorder 2, %s25
      // Predicated region
      $region93: #{tpu_custom_call.1} parent=5 // pred_check
        %p3807 = pneg %p3806
      $region94: #{tpu_custom_call.1} parent=5 // pred_check_branch
        %3809 = sbr.rel (%p3807) target = $region96
      $region95: #{tpu_custom_call.1} parent=5 // pred_region
        %s3810 = ssub.s32 %s25, 2
        // Predicated region
        $region97: #{tpu_custom_call.1} parent=95 // pred_check
          %p3811 = pneg %p269
        $region98: #{tpu_custom_call.1} parent=95 // pred_check_branch
          %3813 = sbr.rel (%p3811) target = $region100
        $region99: #{tpu_custom_call.1} parent=95 // pred_region
          %s3814 = sand.u32 %s254, 1
          %s3815 = scalar_lea.sflag [#allocation4], %s3814
          %s3816 = sand.u32 %s254, 1
          %s3817 = smul.addr %s3816, 256
          %s3818 = scalar_lea.vmem [#allocation14], %s3817
          %3820 = dma.done %s3815, 4096
        $region100: #{tpu_custom_call.1} parent=95 // pred_fallthru
          _
      $region96: #{tpu_custom_call.1} parent=5 // pred_fallthru
        _
    $region6: #{tpu_custom_call.1} parent=1 // loop_footer
      %s29 = sadd.s32 1, %s25
    $region7: #{tpu_custom_call.1} parent=1 // loop_footer_branch
      %24 = sbr.rel target = $region3
    $region8: #{tpu_custom_call.1} parent=1 // loop_exit
      _
    %3821 = vsyncpa [#allocation3], 1
    %s3822 = scalar_lea.sflag [#allocation3], 1
    %3823 = vsyncpa %s3822, 1
    %3824 = vsyncpa [#allocation6], 1
    %3825 = vsyncpa [#allocation9], 1
    %3826 = vsyncpa [#allocation12], 1
    %3827 = vsyncpa [#allocation4], 1
    %s3828 = scalar_lea.sflag [#allocation4], 1
    %3829 = vsyncpa %s3828, 1

</llo_original>
